<compile_context>
chip_gen: v5e
topology: v5e:2x2
jax: 0.10.0
libtpu: 0.0.40
codegen_flags: <defaults>
</compile_context>

<pallas_src>
import jax
import jax.numpy as jnp
from jax.experimental import pallas as pl
from jax.experimental.pallas import tpu as pltpu

NUM_TEETH = 28
NUM_POINTS = 5
COORD_DIM = 3
DENSE_DIM = NUM_TEETH * NUM_POINTS * COORD_DIM      # 420
HALF_DIM = DENSE_DIM // 2                           # 210
CODE_DIM = DENSE_DIM // 6                           # 70

LANE = 128
ROW_ALIGN = 16          # bf16 packs 16 rows per sublane group
TB_MAX = 512            # max batch rows per grid step


def _round_up(x, m):
    return (x + m - 1) // m * m


def _ceil_div(a, b):
    return -(-a // b)


# (in_dim, out_dim, apply_relu) for the 8 Linear layers, encoder then decoder.
LAYER_DEFS = (
    # encoder
    (DENSE_DIM, DENSE_DIM, True),
    (DENSE_DIM, DENSE_DIM, True),
    (DENSE_DIM, HALF_DIM, True),
    (HALF_DIM, CODE_DIM, False),    # last encoder layer: no ReLU
    # decoder
    (CODE_DIM, HALF_DIM, True),
    (HALF_DIM, DENSE_DIM, True),
    (DENSE_DIM, DENSE_DIM, True),
    (DENSE_DIM, DENSE_DIM, False),  # last decoder layer: no ReLU
)
NUM_LAYERS = len(LAYER_DEFS)

# Lane-padded layer dims: 420->512, 210->256, 70->128.
PADDED_LAYER_DEFS = tuple(
    (_round_up(i, LANE), _round_up(o, LANE), r) for (i, o, r) in LAYER_DEFS
)
IN_PAD = PADDED_LAYER_DEFS[0][0]      # 512
OUT_PAD = PADDED_LAYER_DEFS[-1][1]    # 512
SLAB_DIM = max(max(i, o) for (i, o, _) in PADDED_LAYER_DEFS)   # 512


def _autoencoder_kernel(x_ref, w_ref, b_ref, out_ref):
    """x_ref: (tb, 512) bf16 batch tile.
    w_ref:  (8, 512, 512) bf16 weight slab (VMEM-resident, constant block index).
    b_ref:  (8, 1, 512) fp32 bias slab (padding lanes are zero).
    out_ref:(tb, 512) fp32.
    """
    h = x_ref[...]                                    # bf16 (tb, 512)
    for li, (in_p, out_p, relu) in enumerate(PADDED_LAYER_DEFS):
        w = w_ref[li, :in_p, :out_p]                  # static, tile-aligned slice
        b = b_ref[li, :, :out_p]                      # (1, out_p) fp32
        # bf16 operands on the MXU, fp32 accumulation; bias/ReLU epilogue in fp32.
        h = jnp.dot(h, w, preferred_element_type=jnp.float32) + b
        if relu:
            h = jnp.maximum(h, 0.0)
        if li + 1 < NUM_LAYERS:
            h = h.astype(jnp.bfloat16)
    out_ref[...] = h


def _choose_tile(batch):
    """Pick (tile_rows, num_steps): >=2 steps when possible (both v7x TCs),
    <=TB_MAX rows per step, 16-row alignment, <16 padded rows per step."""
    if batch <= 2 * ROW_ALIGN:
        return _round_up(batch, ROW_ALIGN), 1
    steps = max(2, _ceil_div(batch, TB_MAX))
    tb = _round_up(_ceil_div(batch, steps), ROW_ALIGN)
    steps = _ceil_div(batch, tb)
    return tb, steps


@jax.jit
def autoencoder_forward(x, w_slab, b_slab):
    """x: (B, num_teeth, num_points, coord_dim) -> same shape (fp32)."""
    batch = x.shape[0]
    x_flat = x.reshape(batch, DENSE_DIM)

    tb, steps = _choose_tile(batch)
    b_pad = tb * steps

    # Zero-pad batch rows and feature lanes; stream activations as bf16.
    x_padded = jnp.zeros((b_pad, IN_PAD), jnp.bfloat16)
    x_padded = x_padded.at[:batch, :DENSE_DIM].set(x_flat.astype(jnp.bfloat16))

    flops = 2 * b_pad * sum(i * o for (i, o, _) in PADDED_LAYER_DEFS)
    bytes_accessed = (w_slab.size * w_slab.dtype.itemsize
                      + b_slab.size * b_slab.dtype.itemsize
                      + b_pad * (IN_PAD * 2 + OUT_PAD * 4))

    out_padded = pl.pallas_call(
        _autoencoder_kernel,
        out_shape=jax.ShapeDtypeStruct((b_pad, OUT_PAD), jnp.float32),
        grid=(steps,),
        in_specs=[
            pl.BlockSpec((tb, IN_PAD), lambda i: (i, 0)),
            # Constant block index -> weight/bias slabs DMA'd once, stay resident.
            pl.BlockSpec((NUM_LAYERS, SLAB_DIM, SLAB_DIM), lambda i: (0, 0, 0)),
            pl.BlockSpec((NUM_LAYERS, 1, SLAB_DIM), lambda i: (0, 0, 0)),
        ],
        out_specs=pl.BlockSpec((tb, OUT_PAD), lambda i: (i, 0)),
        compiler_params=pltpu.CompilerParams(
            dimension_semantics=("parallel",),   # shard batch tiles across TCs (v7x)
            vmem_limit_bytes=48 << 20,           # headroom on v7x's 64 MiB VMEM
        ),
        cost_estimate=pl.CostEstimate(
            flops=flops, transcendentals=0, bytes_accessed=bytes_accessed),
    )(x_padded, w_slab, b_slab)

    out = out_padded[:batch, :DENSE_DIM].astype(jnp.float32)
    return out.reshape(batch, NUM_TEETH, NUM_POINTS, COORD_DIM)


def init_params(key):
    """PyTorch nn.Linear-style init (uniform +/- 1/sqrt(in)).

    Returns list of (w, b) with w stored as (in_dim, out_dim) — the transpose
    of PyTorch's (out, in) — so the kernel computes x @ w + b.
    """
    params = []
    for (in_dim, out_dim, _) in LAYER_DEFS:
        key, kw, kb = jax.random.split(key, 3)
        bound = 1.0 / jnp.sqrt(jnp.float32(in_dim))
        w = jax.random.uniform(kw, (in_dim, out_dim), jnp.float32, -bound, bound)
        b = jax.random.uniform(kb, (out_dim,), jnp.float32, -bound, bound)
        params.append((w, b))
    return params


def pack_params(params):
    """Pack 8 layers into one bf16 weight slab (8,512,512) and one fp32 bias
    slab (8,1,512). Padding entries are exactly zero so padded lanes stay inert."""
    w_slab = jnp.zeros((NUM_LAYERS, SLAB_DIM, SLAB_DIM), jnp.float32)
    b_slab = jnp.zeros((NUM_LAYERS, 1, SLAB_DIM), jnp.float32)
    for li, (w, b) in enumerate(params):
        w_slab = w_slab.at[li, : w.shape[0], : w.shape[1]].set(w)
        b_slab = b_slab.at[li, 0, : b.shape[0]].set(b)
    return w_slab.astype(jnp.bfloat16), b_slab


def reference_forward(x, params):
    """Pure-JAX reference with the same mixed precision (bf16 matmul, fp32 acc)."""
    h = x.reshape(x.shape[0], DENSE_DIM).astype(jnp.float32)
    for (w, b), (_, _, relu) in zip(params, LAYER_DEFS):
        h = jnp.dot(h.astype(jnp.bfloat16), w.astype(jnp.bfloat16),
                    preferred_element_type=jnp.float32) + b
        if relu:
            h = jnp.maximum(h, 0.0)
    return h.reshape(-1, NUM_TEETH, NUM_POINTS, COORD_DIM)


if __name__ == "__main__":
    key = jax.random.PRNGKey(0)
    params = init_params(key)
    w_slab, b_slab = pack_params(params)

    # Small single-step case (batch=2) and a multi-step (2-grid-step) case.
    for batch in (2, 40):
        key, kx = jax.random.split(key)
        x = jax.random.normal(kx, (batch, NUM_TEETH, NUM_POINTS, COORD_DIM),
                              jnp.float32)
        out = autoencoder_forward(x, w_slab, b_slab)
        out = jax.block_until_ready(out)

        ref = reference_forward(x, params)
        assert out.shape == (batch, NUM_TEETH, NUM_POINTS, COORD_DIM), out.shape
        max_err = float(jnp.max(jnp.abs(out - ref)))
        assert jnp.allclose(out, ref, atol=5e-3, rtol=5e-3), max_err

    print("KERNEL_OK")
</pallas_src>

<mosaic_0001>
module attributes {stable_mosaic.version = 11 : i64} {
  func.func @_autoencoder_kernel(%arg0: i32, %arg1: memref<16x512xbf16, #tpu.memory_space<vmem>>, %arg2: memref<8x512x512xbf16, #tpu.memory_space<vmem>>, %arg3: memref<8x1x512xf32, #tpu.memory_space<vmem>>, %arg4: memref<16x512xf32, #tpu.memory_space<vmem>>) attributes {dimension_semantics = [#tpu.dimension_semantics<parallel>], iteration_bounds = array<i64: 1>, scalar_prefetch = 0 : i64, scratch_operands = 0 : i64, tpu.core_type = #tpu.core_type<tc>, window_params = [{transform_indices = @transform_0, window_bounds = array<i64: 16, 512>}, {pipeline_mode = #tpu.pipeline_mode<synchronous>, transform_indices = @transform_1, window_bounds = array<i64: 8, 512, 512>}, {pipeline_mode = #tpu.pipeline_mode<synchronous>, transform_indices = @transform_2, window_bounds = array<i64: 8, 1, 512>}, {transform_indices = @transform_3, window_bounds = array<i64: 16, 512>}]} {
    %c0 = arith.constant 0 : index
    %c0_0 = arith.constant 0 : index
    %0 = vector.load %arg1[%c0, %c0_0] : memref<16x512xbf16, #tpu.memory_space<vmem>>, vector<16x512xbf16>
    %c0_1 = arith.constant 0 : index
    %c0_2 = arith.constant 0 : index
    %c0_3 = arith.constant 0 : index
    %1 = vector.load %arg2[%c0_1, %c0_2, %c0_3] : memref<8x512x512xbf16, #tpu.memory_space<vmem>>, vector<1x512x512xbf16>
    %2 = vector.shape_cast %1 : vector<1x512x512xbf16> to vector<512x512xbf16>
    %c0_4 = arith.constant 0 : index
    %c0_5 = arith.constant 0 : index
    %c0_6 = arith.constant 0 : index
    %3 = vector.load %arg3[%c0_4, %c0_5, %c0_6] : memref<8x1x512xf32, #tpu.memory_space<vmem>>, vector<1x1x512xf32>
    %4 = vector.shape_cast %3 : vector<1x1x512xf32> to vector<1x512xf32>
    %cst = arith.constant dense<0.000000e+00> : vector<16x512xf32>
    %5 = tpu.matmul %0, %2, %cst {dimension_numbers = #tpu.dot_dimension_numbers<[1], [0], [0], [1], [0, 0, 1, 1], [], []>} : vector<16x512xbf16>, vector<512x512xbf16>, vector<16x512xf32> -> vector<16x512xf32>
    %6 = vector.broadcast %4 : vector<1x512xf32> to vector<16x512xf32>
    %7 = arith.addf %5, %6 : vector<16x512xf32>
    %cst_7 = arith.constant 0.000000e+00 : f32
    %8 = vector.broadcast %cst_7 : f32 to vector<16x512xf32>
    %9 = arith.maximumf %7, %8 : vector<16x512xf32>
    %10 = arith.truncf %9 : vector<16x512xf32> to vector<16x512xbf16>
    %c1 = arith.constant 1 : index
    %c0_8 = arith.constant 0 : index
    %c0_9 = arith.constant 0 : index
    %11 = vector.load %arg2[%c1, %c0_8, %c0_9] : memref<8x512x512xbf16, #tpu.memory_space<vmem>>, vector<1x512x512xbf16>
    %12 = vector.shape_cast %11 : vector<1x512x512xbf16> to vector<512x512xbf16>
    %c1_10 = arith.constant 1 : index
    %c0_11 = arith.constant 0 : index
    %c0_12 = arith.constant 0 : index
    %13 = vector.load %arg3[%c1_10, %c0_11, %c0_12] : memref<8x1x512xf32, #tpu.memory_space<vmem>>, vector<1x1x512xf32>
    %14 = vector.shape_cast %13 : vector<1x1x512xf32> to vector<1x512xf32>
    %cst_13 = arith.constant dense<0.000000e+00> : vector<16x512xf32>
    %15 = tpu.matmul %10, %12, %cst_13 {dimension_numbers = #tpu.dot_dimension_numbers<[1], [0], [0], [1], [0, 0, 1, 1], [], []>} : vector<16x512xbf16>, vector<512x512xbf16>, vector<16x512xf32> -> vector<16x512xf32>
    %16 = vector.broadcast %14 : vector<1x512xf32> to vector<16x512xf32>
    %17 = arith.addf %15, %16 : vector<16x512xf32>
    %cst_14 = arith.constant 0.000000e+00 : f32
    %18 = vector.broadcast %cst_14 : f32 to vector<16x512xf32>
    %19 = arith.maximumf %17, %18 : vector<16x512xf32>
    %20 = arith.truncf %19 : vector<16x512xf32> to vector<16x512xbf16>
    %c2 = arith.constant 2 : index
    %c0_15 = arith.constant 0 : index
    %c0_16 = arith.constant 0 : index
    %21 = vector.load %arg2[%c2, %c0_15, %c0_16] : memref<8x512x512xbf16, #tpu.memory_space<vmem>>, vector<1x512x256xbf16>
    %22 = vector.shape_cast %21 : vector<1x512x256xbf16> to vector<512x256xbf16>
    %c2_17 = arith.constant 2 : index
    %c0_18 = arith.constant 0 : index
    %c0_19 = arith.constant 0 : index
    %23 = vector.load %arg3[%c2_17, %c0_18, %c0_19] : memref<8x1x512xf32, #tpu.memory_space<vmem>>, vector<1x1x256xf32>
    %24 = vector.shape_cast %23 : vector<1x1x256xf32> to vector<1x256xf32>
    %cst_20 = arith.constant dense<0.000000e+00> : vector<16x256xf32>
    %25 = tpu.matmul %20, %22, %cst_20 {dimension_numbers = #tpu.dot_dimension_numbers<[1], [0], [0], [1], [0, 0, 1, 1], [], []>} : vector<16x512xbf16>, vector<512x256xbf16>, vector<16x256xf32> -> vector<16x256xf32>
    %26 = vector.broadcast %24 : vector<1x256xf32> to vector<16x256xf32>
    %27 = arith.addf %25, %26 : vector<16x256xf32>
    %cst_21 = arith.constant 0.000000e+00 : f32
    %28 = vector.broadcast %cst_21 : f32 to vector<16x256xf32>
    %29 = arith.maximumf %27, %28 : vector<16x256xf32>
    %30 = arith.truncf %29 : vector<16x256xf32> to vector<16x256xbf16>
    %c3 = arith.constant 3 : index
    %c0_22 = arith.constant 0 : index
    %c0_23 = arith.constant 0 : index
    %31 = vector.load %arg2[%c3, %c0_22, %c0_23] : memref<8x512x512xbf16, #tpu.memory_space<vmem>>, vector<1x256x128xbf16>
    %32 = vector.shape_cast %31 : vector<1x256x128xbf16> to vector<256x128xbf16>
    %c3_24 = arith.constant 3 : index
    %c0_25 = arith.constant 0 : index
    %c0_26 = arith.constant 0 : index
    %33 = vector.load %arg3[%c3_24, %c0_25, %c0_26] : memref<8x1x512xf32, #tpu.memory_space<vmem>>, vector<1x1x128xf32>
    %34 = vector.shape_cast %33 : vector<1x1x128xf32> to vector<1x128xf32>
    %cst_27 = arith.constant dense<0.000000e+00> : vector<16x128xf32>
    %35 = tpu.matmul %30, %32, %cst_27 {dimension_numbers = #tpu.dot_dimension_numbers<[1], [0], [0], [1], [0, 0, 1, 1], [], []>} : vector<16x256xbf16>, vector<256x128xbf16>, vector<16x128xf32> -> vector<16x128xf32>
    %36 = vector.broadcast %34 : vector<1x128xf32> to vector<16x128xf32>
    %37 = arith.addf %35, %36 : vector<16x128xf32>
    %38 = arith.truncf %37 : vector<16x128xf32> to vector<16x128xbf16>
    %c4 = arith.constant 4 : index
    %c0_28 = arith.constant 0 : index
    %c0_29 = arith.constant 0 : index
    %39 = vector.load %arg2[%c4, %c0_28, %c0_29] : memref<8x512x512xbf16, #tpu.memory_space<vmem>>, vector<1x128x256xbf16>
    %40 = vector.shape_cast %39 : vector<1x128x256xbf16> to vector<128x256xbf16>
    %c4_30 = arith.constant 4 : index
    %c0_31 = arith.constant 0 : index
    %c0_32 = arith.constant 0 : index
    %41 = vector.load %arg3[%c4_30, %c0_31, %c0_32] : memref<8x1x512xf32, #tpu.memory_space<vmem>>, vector<1x1x256xf32>
    %42 = vector.shape_cast %41 : vector<1x1x256xf32> to vector<1x256xf32>
    %cst_33 = arith.constant dense<0.000000e+00> : vector<16x256xf32>
    %43 = tpu.matmul %38, %40, %cst_33 {dimension_numbers = #tpu.dot_dimension_numbers<[1], [0], [0], [1], [0, 0, 1, 1], [], []>} : vector<16x128xbf16>, vector<128x256xbf16>, vector<16x256xf32> -> vector<16x256xf32>
    %44 = vector.broadcast %42 : vector<1x256xf32> to vector<16x256xf32>
    %45 = arith.addf %43, %44 : vector<16x256xf32>
    %cst_34 = arith.constant 0.000000e+00 : f32
    %46 = vector.broadcast %cst_34 : f32 to vector<16x256xf32>
    %47 = arith.maximumf %45, %46 : vector<16x256xf32>
    %48 = arith.truncf %47 : vector<16x256xf32> to vector<16x256xbf16>
    %c5 = arith.constant 5 : index
    %c0_35 = arith.constant 0 : index
    %c0_36 = arith.constant 0 : index
    %49 = vector.load %arg2[%c5, %c0_35, %c0_36] : memref<8x512x512xbf16, #tpu.memory_space<vmem>>, vector<1x256x512xbf16>
    %50 = vector.shape_cast %49 : vector<1x256x512xbf16> to vector<256x512xbf16>
    %c5_37 = arith.constant 5 : index
    %c0_38 = arith.constant 0 : index
    %c0_39 = arith.constant 0 : index
    %51 = vector.load %arg3[%c5_37, %c0_38, %c0_39] : memref<8x1x512xf32, #tpu.memory_space<vmem>>, vector<1x1x512xf32>
    %52 = vector.shape_cast %51 : vector<1x1x512xf32> to vector<1x512xf32>
    %cst_40 = arith.constant dense<0.000000e+00> : vector<16x512xf32>
    %53 = tpu.matmul %48, %50, %cst_40 {dimension_numbers = #tpu.dot_dimension_numbers<[1], [0], [0], [1], [0, 0, 1, 1], [], []>} : vector<16x256xbf16>, vector<256x512xbf16>, vector<16x512xf32> -> vector<16x512xf32>
    %54 = vector.broadcast %52 : vector<1x512xf32> to vector<16x512xf32>
    %55 = arith.addf %53, %54 : vector<16x512xf32>
    %cst_41 = arith.constant 0.000000e+00 : f32
    %56 = vector.broadcast %cst_41 : f32 to vector<16x512xf32>
    %57 = arith.maximumf %55, %56 : vector<16x512xf32>
    %58 = arith.truncf %57 : vector<16x512xf32> to vector<16x512xbf16>
    %c6 = arith.constant 6 : index
    %c0_42 = arith.constant 0 : index
    %c0_43 = arith.constant 0 : index
    %59 = vector.load %arg2[%c6, %c0_42, %c0_43] : memref<8x512x512xbf16, #tpu.memory_space<vmem>>, vector<1x512x512xbf16>
    %60 = vector.shape_cast %59 : vector<1x512x512xbf16> to vector<512x512xbf16>
    %c6_44 = arith.constant 6 : index
    %c0_45 = arith.constant 0 : index
    %c0_46 = arith.constant 0 : index
    %61 = vector.load %arg3[%c6_44, %c0_45, %c0_46] : memref<8x1x512xf32, #tpu.memory_space<vmem>>, vector<1x1x512xf32>
    %62 = vector.shape_cast %61 : vector<1x1x512xf32> to vector<1x512xf32>
    %cst_47 = arith.constant dense<0.000000e+00> : vector<16x512xf32>
    %63 = tpu.matmul %58, %60, %cst_47 {dimension_numbers = #tpu.dot_dimension_numbers<[1], [0], [0], [1], [0, 0, 1, 1], [], []>} : vector<16x512xbf16>, vector<512x512xbf16>, vector<16x512xf32> -> vector<16x512xf32>
    %64 = vector.broadcast %62 : vector<1x512xf32> to vector<16x512xf32>
    %65 = arith.addf %63, %64 : vector<16x512xf32>
    %cst_48 = arith.constant 0.000000e+00 : f32
    %66 = vector.broadcast %cst_48 : f32 to vector<16x512xf32>
    %67 = arith.maximumf %65, %66 : vector<16x512xf32>
    %68 = arith.truncf %67 : vector<16x512xf32> to vector<16x512xbf16>
    %c7 = arith.constant 7 : index
    %c0_49 = arith.constant 0 : index
    %c0_50 = arith.constant 0 : index
    %69 = vector.load %arg2[%c7, %c0_49, %c0_50] : memref<8x512x512xbf16, #tpu.memory_space<vmem>>, vector<1x512x512xbf16>
    %70 = vector.shape_cast %69 : vector<1x512x512xbf16> to vector<512x512xbf16>
    %c7_51 = arith.constant 7 : index
    %c0_52 = arith.constant 0 : index
    %c0_53 = arith.constant 0 : index
    %71 = vector.load %arg3[%c7_51, %c0_52, %c0_53] : memref<8x1x512xf32, #tpu.memory_space<vmem>>, vector<1x1x512xf32>
    %72 = vector.shape_cast %71 : vector<1x1x512xf32> to vector<1x512xf32>
    %cst_54 = arith.constant dense<0.000000e+00> : vector<16x512xf32>
    %73 = tpu.matmul %68, %70, %cst_54 {dimension_numbers = #tpu.dot_dimension_numbers<[1], [0], [0], [1], [0, 0, 1, 1], [], []>} : vector<16x512xbf16>, vector<512x512xbf16>, vector<16x512xf32> -> vector<16x512xf32>
    %74 = vector.broadcast %72 : vector<1x512xf32> to vector<16x512xf32>
    %75 = arith.addf %73, %74 : vector<16x512xf32>
    %c0_55 = arith.constant 0 : index
    %c0_56 = arith.constant 0 : index
    %76 = vector.load %arg4[%c0_55, %c0_56] : memref<16x512xf32, #tpu.memory_space<vmem>>, vector<16x512xf32>
    tpu.vector_store %arg4[%c0_55, %c0_56], %75 {strides = array<i32>} : memref<16x512xf32, #tpu.memory_space<vmem>>, vector<16x512xf32>,
    return
  }
  func.func @transform_0(%arg0: i32) -> (i32, i32) {
    %c0_i32 = arith.constant 0 : i32
    %c0_i32_0 = arith.constant 0 : i32
    return %arg0, %c0_i32 : i32, i32
  }
  func.func @transform_1(%arg0: i32) -> (i32, i32, i32) {
    %c0_i32 = arith.constant 0 : i32
    %c0_i32_0 = arith.constant 0 : i32
    %c0_i32_1 = arith.constant 0 : i32
    %c0_i32_2 = arith.constant 0 : i32
    return %c0_i32, %c0_i32_0, %c0_i32_1 : i32, i32, i32
  }
  func.func @transform_2(%arg0: i32) -> (i32, i32, i32) {
    %c0_i32 = arith.constant 0 : i32
    %c0_i32_0 = arith.constant 0 : i32
    %c0_i32_1 = arith.constant 0 : i32
    %c0_i32_2 = arith.constant 0 : i32
    return %c0_i32, %c0_i32_0, %c0_i32_1 : i32, i32, i32
  }
  func.func @transform_3(%arg0: i32) -> (i32, i32) {
    %c0_i32 = arith.constant 0 : i32
    %c0_i32_0 = arith.constant 0 : i32
    return %arg0, %c0_i32 : i32, i32
  }
}

</mosaic_0001>

<llo_original>
// kernel: autoencoder_forward.1
$region0: #{autoencoder_forward.1}
  #allocation0 [shape = 'u32[]', space=smem, size = 0x4, offset = 0x4, fixed_abs, tag = 'smem constant byte address 0x4 - core index']
  #allocation1 [shape = 'u32[72,128]{1,0:T(1,128)}', space=vmem, size = 0x9000, scoped, tag = 'internal scratch']
  %s0 = inlined_call_operand.vmem [shape: bf16[16,512], index: 0, kind: input, shape index: {}]
  %s1 = inlined_call_operand.hbm [shape: bf16[8,512,512], index: 1, kind: input, shape index: {}]
  %s2 = inlined_call_operand.hbm [shape: f32[8,1,512], index: 2, kind: input, shape index: {}]
  %s3 = inlined_call_operand.vmem [shape: f32[16,512], index: 3, kind: output, shape index: {}]
  %s4 = sld [smem:[#allocation0]]
  $region30: #{autoencoder_forward.1} parent=0
    _
  %s6 = ssub.s32 1, %s4
  %s7 = scalar_select 0, %s6, %s4
  $region1: #{autoencoder_forward.1} parent=0
    #allocation2 [shape = 'u8[4194304]{0}', space=vmem, size = 0x400000, scoped, tag = 'input window, operand 1, single buffered']
    #allocation3 [shape = 's32[1]{0}', space=sflag, size = 0x4, scoped, tag = 'scoped memory for autoencoder_forward.1']
    #allocation4 [shape = 'u8[16384]{0}', space=vmem, size = 0x4000, scoped, tag = 'input window, operand 2, single buffered']
    #allocation5 [shape = 's32[1]{0}', space=sflag, size = 0x4, scoped, tag = 'scoped memory for autoencoder_forward.1']
    %8 = vsyncpa [#allocation3], 0
    %9 = vsyncpa [#allocation5], 0
    // Predicated region
    $region2: #{autoencoder_forward.1} parent=1 // pred_check
      _
    $region3: #{autoencoder_forward.1} parent=1 // pred_check_branch
      %11 = sbr.rel (0) target = $region5
    $region4: #{autoencoder_forward.1} parent=1 // pred_region
      _
    $region5: #{autoencoder_forward.1} parent=1 // pred_fallthru
      _
    // Predicated region
    $region6: #{autoencoder_forward.1} parent=1 // pred_check
      _
    $region7: #{autoencoder_forward.1} parent=1 // pred_check_branch
      %13 = sbr.rel (0) target = $region9
    $region8: #{autoencoder_forward.1} parent=1 // pred_region
      %15 = vsyncadd [#allocation3], 0
      %s16 = sshll.u32 %s1, 4
      %s17 = int_to_ptr.hbm [resolvable:$true] %s16
      %s18 = sshll.u32 [#allocation2], 4
      %s19 = int_to_ptr.vmem [resolvable:$true] %s18
      %24 = dma.hbm_to_vmem [thread:$0]  %s17, 131072, %s19, [#allocation3], 256, 256, 16
    $region9: #{autoencoder_forward.1} parent=1 // pred_fallthru
      _
    // Predicated region
    $region10: #{autoencoder_forward.1} parent=1 // pred_check
      _
    $region11: #{autoencoder_forward.1} parent=1 // pred_check_branch
      %26 = sbr.rel (0) target = $region13
    $region12: #{autoencoder_forward.1} parent=1 // pred_region
      %28 = vsyncadd [#allocation5], 0
      %s29 = sshll.u32 %s2, 4
      %s30 = int_to_ptr.hbm [resolvable:$true] %s29
      %s31 = sshll.u32 [#allocation4], 4
      %s32 = int_to_ptr.vmem [resolvable:$true] %s31
      %37 = dma.hbm_to_vmem [thread:$0]  %s30, 512, %s32, [#allocation5], 64, 64, 4
    $region13: #{autoencoder_forward.1} parent=1 // pred_fallthru
      _
    // Predicated region
    $region14: #{autoencoder_forward.1} parent=1 // pred_check
      _
    $region15: #{autoencoder_forward.1} parent=1 // pred_check_branch
      %39 = sbr.rel (0) target = $region17
    $region16: #{autoencoder_forward.1} parent=1 // pred_region
      %41 = dma.done [#allocation3], 131072
    $region17: #{autoencoder_forward.1} parent=1 // pred_fallthru
      _
    // Predicated region
    $region18: #{autoencoder_forward.1} parent=1 // pred_check
      _
    $region19: #{autoencoder_forward.1} parent=1 // pred_check_branch
      %43 = sbr.rel (0) target = $region21
    $region20: #{autoencoder_forward.1} parent=1 // pred_region
      %45 = dma.done [#allocation5], 512
    $region21: #{autoencoder_forward.1} parent=1 // pred_fallthru
      _
    %v46 = vld [vmem:[%s0] sm:$0xff]
    %v47 = vld [vmem:[%s0 + $0x8] sm:$0xff]
    %v48 = vld [vmem:[%s0 + $0x10] sm:$0xff]
    %v49 = vld [vmem:[%s0 + $0x18] sm:$0xff]
    %v50 = vld [vmem:[#allocation2] sm:$0xff]
    %v51 = vld [vmem:[#allocation2 + $0x8] sm:$0xff]
    %v52 = vld [vmem:[#allocation2 + $0x10] sm:$0xff]
    %v53 = vld [vmem:[#allocation2 + $0x18] sm:$0xff]
    %v54 = vld [vmem:[#allocation2 + $0x20] sm:$0xff]
    %v55 = vld [vmem:[#allocation2 + $0x28] sm:$0xff]
    %v56 = vld [vmem:[#allocation2 + $0x30] sm:$0xff]
    %v57 = vld [vmem:[#allocation2 + $0x38] sm:$0xff]
    %v58 = vld [vmem:[#allocation2 + $0x40] sm:$0xff]
    %v59 = vld [vmem:[#allocation2 + $0x48] sm:$0xff]
    %v60 = vld [vmem:[#allocation2 + $0x50] sm:$0xff]
    %v61 = vld [vmem:[#allocation2 + $0x58] sm:$0xff]
    %v62 = vld [vmem:[#allocation2 + $0x60] sm:$0xff]
    %v63 = vld [vmem:[#allocation2 + $0x68] sm:$0xff]
    %v64 = vld [vmem:[#allocation2 + $0x70] sm:$0xff]
    %v65 = vld [vmem:[#allocation2 + $0x78] sm:$0xff]
    %v66 = vld [vmem:[#allocation2 + $0x80] sm:$0xff]
    %v67 = vld [vmem:[#allocation2 + $0x88] sm:$0xff]
    %v68 = vld [vmem:[#allocation2 + $0x90] sm:$0xff]
    %v69 = vld [vmem:[#allocation2 + $0x98] sm:$0xff]
    %v70 = vld [vmem:[#allocation2 + $0xa0] sm:$0xff]
    %v71 = vld [vmem:[#allocation2 + $0xa8] sm:$0xff]
    %v72 = vld [vmem:[#allocation2 + $0xb0] sm:$0xff]
    %v73 = vld [vmem:[#allocation2 + $0xb8] sm:$0xff]
    %v74 = vld [vmem:[#allocation2 + $0xc0] sm:$0xff]
    %v75 = vld [vmem:[#allocation2 + $0xc8] sm:$0xff]
    %v76 = vld [vmem:[#allocation2 + $0xd0] sm:$0xff]
    %v77 = vld [vmem:[#allocation2 + $0xd8] sm:$0xff]
    %v78 = vld [vmem:[#allocation2 + $0xe0] sm:$0xff]
    %v79 = vld [vmem:[#allocation2 + $0xe8] sm:$0xff]
    %v80 = vld [vmem:[#allocation2 + $0xf0] sm:$0xff]
    %v81 = vld [vmem:[#allocation2 + $0xf8] sm:$0xff]
    %v82 = vld [vmem:[#allocation2 + $0x100] sm:$0xff]
    %v83 = vld [vmem:[#allocation2 + $0x108] sm:$0xff]
    %v84 = vld [vmem:[#allocation2 + $0x110] sm:$0xff]
    %v85 = vld [vmem:[#allocation2 + $0x118] sm:$0xff]
    %v86 = vld [vmem:[#allocation2 + $0x120] sm:$0xff]
    %v87 = vld [vmem:[#allocation2 + $0x128] sm:$0xff]
    %v88 = vld [vmem:[#allocation2 + $0x130] sm:$0xff]
    %v89 = vld [vmem:[#allocation2 + $0x138] sm:$0xff]
    %v90 = vld [vmem:[#allocation2 + $0x140] sm:$0xff]
    %v91 = vld [vmem:[#allocation2 + $0x148] sm:$0xff]
    %v92 = vld [vmem:[#allocation2 + $0x150] sm:$0xff]
    %v93 = vld [vmem:[#allocation2 + $0x158] sm:$0xff]
    %v94 = vld [vmem:[#allocation2 + $0x160] sm:$0xff]
    %v95 = vld [vmem:[#allocation2 + $0x168] sm:$0xff]
    %v96 = vld [vmem:[#allocation2 + $0x170] sm:$0xff]
    %v97 = vld [vmem:[#allocation2 + $0x178] sm:$0xff]
    %v98 = vld [vmem:[#allocation2 + $0x180] sm:$0xff]
    %v99 = vld [vmem:[#allocation2 + $0x188] sm:$0xff]
    %v100 = vld [vmem:[#allocation2 + $0x190] sm:$0xff]
    %v101 = vld [vmem:[#allocation2 + $0x198] sm:$0xff]
    %v102 = vld [vmem:[#allocation2 + $0x1a0] sm:$0xff]
    %v103 = vld [vmem:[#allocation2 + $0x1a8] sm:$0xff]
    %v104 = vld [vmem:[#allocation2 + $0x1b0] sm:$0xff]
    %v105 = vld [vmem:[#allocation2 + $0x1b8] sm:$0xff]
    %v106 = vld [vmem:[#allocation2 + $0x1c0] sm:$0xff]
    %v107 = vld [vmem:[#allocation2 + $0x1c8] sm:$0xff]
    %v108 = vld [vmem:[#allocation2 + $0x1d0] sm:$0xff]
    %v109 = vld [vmem:[#allocation2 + $0x1d8] sm:$0xff]
    %v110 = vld [vmem:[#allocation2 + $0x1e0] sm:$0xff]
    %v111 = vld [vmem:[#allocation2 + $0x1e8] sm:$0xff]
    %v112 = vld [vmem:[#allocation2 + $0x1f0] sm:$0xff]
    %v113 = vld [vmem:[#allocation2 + $0x1f8] sm:$0xff]
    %v114 = vld [vmem:[#allocation2 + $0x200] sm:$0xff]
    %v115 = vld [vmem:[#allocation2 + $0x208] sm:$0xff]
    %v116 = vld [vmem:[#allocation2 + $0x210] sm:$0xff]
    %v117 = vld [vmem:[#allocation2 + $0x218] sm:$0xff]
    %v118 = vld [vmem:[#allocation2 + $0x220] sm:$0xff]
    %v119 = vld [vmem:[#allocation2 + $0x228] sm:$0xff]
    %v120 = vld [vmem:[#allocation2 + $0x230] sm:$0xff]
    %v121 = vld [vmem:[#allocation2 + $0x238] sm:$0xff]
    %v122 = vld [vmem:[#allocation2 + $0x240] sm:$0xff]
    %v123 = vld [vmem:[#allocation2 + $0x248] sm:$0xff]
    %v124 = vld [vmem:[#allocation2 + $0x250] sm:$0xff]
    %v125 = vld [vmem:[#allocation2 + $0x258] sm:$0xff]
    %v126 = vld [vmem:[#allocation2 + $0x260] sm:$0xff]
    %v127 = vld [vmem:[#allocation2 + $0x268] sm:$0xff]
    %v128 = vld [vmem:[#allocation2 + $0x270] sm:$0xff]
    %v129 = vld [vmem:[#allocation2 + $0x278] sm:$0xff]
    %v130 = vld [vmem:[#allocation2 + $0x280] sm:$0xff]
    %v131 = vld [vmem:[#allocation2 + $0x288] sm:$0xff]
    %v132 = vld [vmem:[#allocation2 + $0x290] sm:$0xff]
    %v133 = vld [vmem:[#allocation2 + $0x298] sm:$0xff]
    %v134 = vld [vmem:[#allocation2 + $0x2a0] sm:$0xff]
    %v135 = vld [vmem:[#allocation2 + $0x2a8] sm:$0xff]
    %v136 = vld [vmem:[#allocation2 + $0x2b0] sm:$0xff]
    %v137 = vld [vmem:[#allocation2 + $0x2b8] sm:$0xff]
    %v138 = vld [vmem:[#allocation2 + $0x2c0] sm:$0xff]
    %v139 = vld [vmem:[#allocation2 + $0x2c8] sm:$0xff]
    %v140 = vld [vmem:[#allocation2 + $0x2d0] sm:$0xff]
    %v141 = vld [vmem:[#allocation2 + $0x2d8] sm:$0xff]
    %v142 = vld [vmem:[#allocation2 + $0x2e0] sm:$0xff]
    %v143 = vld [vmem:[#allocation2 + $0x2e8] sm:$0xff]
    %v144 = vld [vmem:[#allocation2 + $0x2f0] sm:$0xff]
    %v145 = vld [vmem:[#allocation2 + $0x2f8] sm:$0xff]
    %v146 = vld [vmem:[#allocation2 + $0x300] sm:$0xff]
    %v147 = vld [vmem:[#allocation2 + $0x308] sm:$0xff]
    %v148 = vld [vmem:[#allocation2 + $0x310] sm:$0xff]
    %v149 = vld [vmem:[#allocation2 + $0x318] sm:$0xff]
    %v150 = vld [vmem:[#allocation2 + $0x320] sm:$0xff]
    %v151 = vld [vmem:[#allocation2 + $0x328] sm:$0xff]
    %v152 = vld [vmem:[#allocation2 + $0x330] sm:$0xff]
    %v153 = vld [vmem:[#allocation2 + $0x338] sm:$0xff]
    %v154 = vld [vmem:[#allocation2 + $0x340] sm:$0xff]
    %v155 = vld [vmem:[#allocation2 + $0x348] sm:$0xff]
    %v156 = vld [vmem:[#allocation2 + $0x350] sm:$0xff]
    %v157 = vld [vmem:[#allocation2 + $0x358] sm:$0xff]
    %v158 = vld [vmem:[#allocation2 + $0x360] sm:$0xff]
    %v159 = vld [vmem:[#allocation2 + $0x368] sm:$0xff]
    %v160 = vld [vmem:[#allocation2 + $0x370] sm:$0xff]
    %v161 = vld [vmem:[#allocation2 + $0x378] sm:$0xff]
    %v162 = vld [vmem:[#allocation2 + $0x380] sm:$0xff]
    %v163 = vld [vmem:[#allocation2 + $0x388] sm:$0xff]
    %v164 = vld [vmem:[#allocation2 + $0x390] sm:$0xff]
    %v165 = vld [vmem:[#allocation2 + $0x398] sm:$0xff]
    %v166 = vld [vmem:[#allocation2 + $0x3a0] sm:$0xff]
    %v167 = vld [vmem:[#allocation2 + $0x3a8] sm:$0xff]
    %v168 = vld [vmem:[#allocation2 + $0x3b0] sm:$0xff]
    %v169 = vld [vmem:[#allocation2 + $0x3b8] sm:$0xff]
    %v170 = vld [vmem:[#allocation2 + $0x3c0] sm:$0xff]
    %v171 = vld [vmem:[#allocation2 + $0x3c8] sm:$0xff]
    %v172 = vld [vmem:[#allocation2 + $0x3d0] sm:$0xff]
    %v173 = vld [vmem:[#allocation2 + $0x3d8] sm:$0xff]
    %v174 = vld [vmem:[#allocation2 + $0x3e0] sm:$0xff]
    %v175 = vld [vmem:[#allocation2 + $0x3e8] sm:$0xff]
    %v176 = vld [vmem:[#allocation2 + $0x3f0] sm:$0xff]
    %v177 = vld [vmem:[#allocation2 + $0x3f8] sm:$0xff]
    %v178 = vld [vmem:[#allocation4] sm:$0xf]
    %v180 = vperm.slane %v178, 0
    %v181 = vperm.slane %v178, 1
    %v182 = vperm.slane %v178, 2
    %v183 = vperm.slane %v178, 3
    %v192 = vunpack.c.l.b16 %v46
    %v193 = vunpack.c.h.b16 %v46
    %v194 = vunpack.c.l.b16 %v47
    %v195 = vunpack.c.h.b16 %v47
    %v196 = vunpack.c.l.b16 %v48
    %v197 = vunpack.c.h.b16 %v48
    %v198 = vunpack.c.l.b16 %v49
    %v199 = vunpack.c.h.b16 %v49
    %v200 = vpack.c.b16 %v196, %v192
    %v201 = vpack.c.b16 %v197, %v193
    %v202 = vpack.c.b16 %v198, %v194
    %v203 = vpack.c.b16 %v199, %v195
    %v336 = vunpack.c.l.b16 %v50
    %v337 = vunpack.c.h.b16 %v50
    %v338 = vunpack.c.l.b16 %v51
    %v339 = vunpack.c.h.b16 %v51
    %v340 = vunpack.c.l.b16 %v52
    %v341 = vunpack.c.h.b16 %v52
    %v342 = vunpack.c.l.b16 %v53
    %v343 = vunpack.c.h.b16 %v53
    %v344 = vunpack.c.l.b16 %v54
    %v345 = vunpack.c.h.b16 %v54
    %v346 = vunpack.c.l.b16 %v55
    %v347 = vunpack.c.h.b16 %v55
    %v348 = vunpack.c.l.b16 %v56
    %v349 = vunpack.c.h.b16 %v56
    %v350 = vunpack.c.l.b16 %v57
    %v351 = vunpack.c.h.b16 %v57
    %v352 = vunpack.c.l.b16 %v58
    %v353 = vunpack.c.h.b16 %v58
    %v354 = vunpack.c.l.b16 %v59
    %v355 = vunpack.c.h.b16 %v59
    %v356 = vunpack.c.l.b16 %v60
    %v357 = vunpack.c.h.b16 %v60
    %v358 = vunpack.c.l.b16 %v61
    %v359 = vunpack.c.h.b16 %v61
    %v360 = vunpack.c.l.b16 %v62
    %v361 = vunpack.c.h.b16 %v62
    %v362 = vunpack.c.l.b16 %v63
    %v363 = vunpack.c.h.b16 %v63
    %v364 = vunpack.c.l.b16 %v64
    %v365 = vunpack.c.h.b16 %v64
    %v366 = vunpack.c.l.b16 %v65
    %v367 = vunpack.c.h.b16 %v65
    %v368 = vunpack.c.l.b16 %v66
    %v369 = vunpack.c.h.b16 %v66
    %v370 = vunpack.c.l.b16 %v67
    %v371 = vunpack.c.h.b16 %v67
    %v372 = vunpack.c.l.b16 %v68
    %v373 = vunpack.c.h.b16 %v68
    %v374 = vunpack.c.l.b16 %v69
    %v375 = vunpack.c.h.b16 %v69
    %v376 = vunpack.c.l.b16 %v70
    %v377 = vunpack.c.h.b16 %v70
    %v378 = vunpack.c.l.b16 %v71
    %v379 = vunpack.c.h.b16 %v71
    %v380 = vunpack.c.l.b16 %v72
    %v381 = vunpack.c.h.b16 %v72
    %v382 = vunpack.c.l.b16 %v73
    %v383 = vunpack.c.h.b16 %v73
    %v384 = vunpack.c.l.b16 %v74
    %v385 = vunpack.c.h.b16 %v74
    %v386 = vunpack.c.l.b16 %v75
    %v387 = vunpack.c.h.b16 %v75
    %v388 = vunpack.c.l.b16 %v76
    %v389 = vunpack.c.h.b16 %v76
    %v390 = vunpack.c.l.b16 %v77
    %v391 = vunpack.c.h.b16 %v77
    %v392 = vunpack.c.l.b16 %v78
    %v393 = vunpack.c.h.b16 %v78
    %v394 = vunpack.c.l.b16 %v79
    %v395 = vunpack.c.h.b16 %v79
    %v396 = vunpack.c.l.b16 %v80
    %v397 = vunpack.c.h.b16 %v80
    %v398 = vunpack.c.l.b16 %v81
    %v399 = vunpack.c.h.b16 %v81
    %v400 = vunpack.c.l.b16 %v82
    %v401 = vunpack.c.h.b16 %v82
    %v402 = vunpack.c.l.b16 %v83
    %v403 = vunpack.c.h.b16 %v83
    %v404 = vunpack.c.l.b16 %v84
    %v405 = vunpack.c.h.b16 %v84
    %v406 = vunpack.c.l.b16 %v85
    %v407 = vunpack.c.h.b16 %v85
    %v408 = vunpack.c.l.b16 %v86
    %v409 = vunpack.c.h.b16 %v86
    %v410 = vunpack.c.l.b16 %v87
    %v411 = vunpack.c.h.b16 %v87
    %v412 = vunpack.c.l.b16 %v88
    %v413 = vunpack.c.h.b16 %v88
    %v414 = vunpack.c.l.b16 %v89
    %v415 = vunpack.c.h.b16 %v89
    %v416 = vunpack.c.l.b16 %v90
    %v417 = vunpack.c.h.b16 %v90
    %v418 = vunpack.c.l.b16 %v91
    %v419 = vunpack.c.h.b16 %v91
    %v420 = vunpack.c.l.b16 %v92
    %v421 = vunpack.c.h.b16 %v92
    %v422 = vunpack.c.l.b16 %v93
    %v423 = vunpack.c.h.b16 %v93
    %v424 = vunpack.c.l.b16 %v94
    %v425 = vunpack.c.h.b16 %v94
    %v426 = vunpack.c.l.b16 %v95
    %v427 = vunpack.c.h.b16 %v95
    %v428 = vunpack.c.l.b16 %v96
    %v429 = vunpack.c.h.b16 %v96
    %v430 = vunpack.c.l.b16 %v97
    %v431 = vunpack.c.h.b16 %v97
    %v432 = vunpack.c.l.b16 %v98
    %v433 = vunpack.c.h.b16 %v98
    %v434 = vunpack.c.l.b16 %v99
    %v435 = vunpack.c.h.b16 %v99
    %v436 = vunpack.c.l.b16 %v100
    %v437 = vunpack.c.h.b16 %v100
    %v438 = vunpack.c.l.b16 %v101
    %v439 = vunpack.c.h.b16 %v101
    %v440 = vunpack.c.l.b16 %v102
    %v441 = vunpack.c.h.b16 %v102
    %v442 = vunpack.c.l.b16 %v103
    %v443 = vunpack.c.h.b16 %v103
    %v444 = vunpack.c.l.b16 %v104
    %v445 = vunpack.c.h.b16 %v104
    %v446 = vunpack.c.l.b16 %v105
    %v447 = vunpack.c.h.b16 %v105
    %v448 = vunpack.c.l.b16 %v106
    %v449 = vunpack.c.h.b16 %v106
    %v450 = vunpack.c.l.b16 %v107
    %v451 = vunpack.c.h.b16 %v107
    %v452 = vunpack.c.l.b16 %v108
    %v453 = vunpack.c.h.b16 %v108
    %v454 = vunpack.c.l.b16 %v109
    %v455 = vunpack.c.h.b16 %v109
    %v456 = vunpack.c.l.b16 %v110
    %v457 = vunpack.c.h.b16 %v110
    %v458 = vunpack.c.l.b16 %v111
    %v459 = vunpack.c.h.b16 %v111
    %v460 = vunpack.c.l.b16 %v112
    %v461 = vunpack.c.h.b16 %v112
    %v462 = vunpack.c.l.b16 %v113
    %v463 = vunpack.c.h.b16 %v113
    %v464 = vunpack.c.l.b16 %v114
    %v465 = vunpack.c.h.b16 %v114
    %v466 = vunpack.c.l.b16 %v115
    %v467 = vunpack.c.h.b16 %v115
    %v468 = vunpack.c.l.b16 %v116
    %v469 = vunpack.c.h.b16 %v116
    %v470 = vunpack.c.l.b16 %v117
    %v471 = vunpack.c.h.b16 %v117
    %v472 = vunpack.c.l.b16 %v118
    %v473 = vunpack.c.h.b16 %v118
    %v474 = vunpack.c.l.b16 %v119
    %v475 = vunpack.c.h.b16 %v119
    %v476 = vunpack.c.l.b16 %v120
    %v477 = vunpack.c.h.b16 %v120
    %v478 = vunpack.c.l.b16 %v121
    %v479 = vunpack.c.h.b16 %v121
    %v480 = vunpack.c.l.b16 %v122
    %v481 = vunpack.c.h.b16 %v122
    %v482 = vunpack.c.l.b16 %v123
    %v483 = vunpack.c.h.b16 %v123
    %v484 = vunpack.c.l.b16 %v124
    %v485 = vunpack.c.h.b16 %v124
    %v486 = vunpack.c.l.b16 %v125
    %v487 = vunpack.c.h.b16 %v125
    %v488 = vunpack.c.l.b16 %v126
    %v489 = vunpack.c.h.b16 %v126
    %v490 = vunpack.c.l.b16 %v127
    %v491 = vunpack.c.h.b16 %v127
    %v492 = vunpack.c.l.b16 %v128
    %v493 = vunpack.c.h.b16 %v128
    %v494 = vunpack.c.l.b16 %v129
    %v495 = vunpack.c.h.b16 %v129
    %v496 = vunpack.c.l.b16 %v130
    %v497 = vunpack.c.h.b16 %v130
    %v498 = vunpack.c.l.b16 %v131
    %v499 = vunpack.c.h.b16 %v131
    %v500 = vunpack.c.l.b16 %v132
    %v501 = vunpack.c.h.b16 %v132
    %v502 = vunpack.c.l.b16 %v133
    %v503 = vunpack.c.h.b16 %v133
    %v504 = vunpack.c.l.b16 %v134
    %v505 = vunpack.c.h.b16 %v134
    %v506 = vunpack.c.l.b16 %v135
    %v507 = vunpack.c.h.b16 %v135
    %v508 = vunpack.c.l.b16 %v136
    %v509 = vunpack.c.h.b16 %v136
    %v510 = vunpack.c.l.b16 %v137
    %v511 = vunpack.c.h.b16 %v137
    %v512 = vunpack.c.l.b16 %v138
    %v513 = vunpack.c.h.b16 %v138
    %v514 = vunpack.c.l.b16 %v139
    %v515 = vunpack.c.h.b16 %v139
    %v516 = vunpack.c.l.b16 %v140
    %v517 = vunpack.c.h.b16 %v140
    %v518 = vunpack.c.l.b16 %v141
    %v519 = vunpack.c.h.b16 %v141
    %v520 = vunpack.c.l.b16 %v142
    %v521 = vunpack.c.h.b16 %v142
    %v522 = vunpack.c.l.b16 %v143
    %v523 = vunpack.c.h.b16 %v143
    %v524 = vunpack.c.l.b16 %v144
    %v525 = vunpack.c.h.b16 %v144
    %v526 = vunpack.c.l.b16 %v145
    %v527 = vunpack.c.h.b16 %v145
    %v528 = vunpack.c.l.b16 %v146
    %v529 = vunpack.c.h.b16 %v146
    %v530 = vunpack.c.l.b16 %v147
    %v531 = vunpack.c.h.b16 %v147
    %v532 = vunpack.c.l.b16 %v148
    %v533 = vunpack.c.h.b16 %v148
    %v534 = vunpack.c.l.b16 %v149
    %v535 = vunpack.c.h.b16 %v149
    %v536 = vunpack.c.l.b16 %v150
    %v537 = vunpack.c.h.b16 %v150
    %v538 = vunpack.c.l.b16 %v151
    %v539 = vunpack.c.h.b16 %v151
    %v540 = vunpack.c.l.b16 %v152
    %v541 = vunpack.c.h.b16 %v152
    %v542 = vunpack.c.l.b16 %v153
    %v543 = vunpack.c.h.b16 %v153
    %v544 = vunpack.c.l.b16 %v154
    %v545 = vunpack.c.h.b16 %v154
    %v546 = vunpack.c.l.b16 %v155
    %v547 = vunpack.c.h.b16 %v155
    %v548 = vunpack.c.l.b16 %v156
    %v549 = vunpack.c.h.b16 %v156
    %v550 = vunpack.c.l.b16 %v157
    %v551 = vunpack.c.h.b16 %v157
    %v552 = vunpack.c.l.b16 %v158
    %v553 = vunpack.c.h.b16 %v158
    %v554 = vunpack.c.l.b16 %v159
    %v555 = vunpack.c.h.b16 %v159
    %v556 = vunpack.c.l.b16 %v160
    %v557 = vunpack.c.h.b16 %v160
    %v558 = vunpack.c.l.b16 %v161
    %v559 = vunpack.c.h.b16 %v161
    %v560 = vunpack.c.l.b16 %v162
    %v561 = vunpack.c.h.b16 %v162
    %v562 = vunpack.c.l.b16 %v163
    %v563 = vunpack.c.h.b16 %v163
    %v564 = vunpack.c.l.b16 %v164
    %v565 = vunpack.c.h.b16 %v164
    %v566 = vunpack.c.l.b16 %v165
    %v567 = vunpack.c.h.b16 %v165
    %v568 = vunpack.c.l.b16 %v166
    %v569 = vunpack.c.h.b16 %v166
    %v570 = vunpack.c.l.b16 %v167
    %v571 = vunpack.c.h.b16 %v167
    %v572 = vunpack.c.l.b16 %v168
    %v573 = vunpack.c.h.b16 %v168
    %v574 = vunpack.c.l.b16 %v169
    %v575 = vunpack.c.h.b16 %v169
    %v576 = vunpack.c.l.b16 %v170
    %v577 = vunpack.c.h.b16 %v170
    %v578 = vunpack.c.l.b16 %v171
    %v579 = vunpack.c.h.b16 %v171
    %v580 = vunpack.c.l.b16 %v172
    %v581 = vunpack.c.h.b16 %v172
    %v582 = vunpack.c.l.b16 %v173
    %v583 = vunpack.c.h.b16 %v173
    %v584 = vunpack.c.l.b16 %v174
    %v585 = vunpack.c.h.b16 %v174
    %v586 = vunpack.c.l.b16 %v175
    %v587 = vunpack.c.h.b16 %v175
    %v588 = vunpack.c.l.b16 %v176
    %v589 = vunpack.c.h.b16 %v176
    %v590 = vunpack.c.l.b16 %v177
    %v591 = vunpack.c.h.b16 %v177
    %v592 = vpack.c.b16 %v340, %v336
    %v593 = vpack.c.b16 %v341, %v337
    %v594 = vpack.c.b16 %v342, %v338
    %v595 = vpack.c.b16 %v343, %v339
    %v596 = vpack.c.b16 %v348, %v344
    %v597 = vpack.c.b16 %v349, %v345
    %v598 = vpack.c.b16 %v350, %v346
    %v599 = vpack.c.b16 %v351, %v347
    %v600 = vpack.c.b16 %v356, %v352
    %v601 = vpack.c.b16 %v357, %v353
    %v602 = vpack.c.b16 %v358, %v354
    %v603 = vpack.c.b16 %v359, %v355
    %v604 = vpack.c.b16 %v364, %v360
    %v605 = vpack.c.b16 %v365, %v361
    %v606 = vpack.c.b16 %v366, %v362
    %v607 = vpack.c.b16 %v367, %v363
    %v608 = vpack.c.b16 %v372, %v368
    %v609 = vpack.c.b16 %v373, %v369
    %v610 = vpack.c.b16 %v374, %v370
    %v611 = vpack.c.b16 %v375, %v371
    %v612 = vpack.c.b16 %v380, %v376
    %v613 = vpack.c.b16 %v381, %v377
    %v614 = vpack.c.b16 %v382, %v378
    %v615 = vpack.c.b16 %v383, %v379
    %v616 = vpack.c.b16 %v388, %v384
    %v617 = vpack.c.b16 %v389, %v385
    %v618 = vpack.c.b16 %v390, %v386
    %v619 = vpack.c.b16 %v391, %v387
    %v620 = vpack.c.b16 %v396, %v392
    %v621 = vpack.c.b16 %v397, %v393
    %v622 = vpack.c.b16 %v398, %v394
    %v623 = vpack.c.b16 %v399, %v395
    %v624 = vpack.c.b16 %v404, %v400
    %v625 = vpack.c.b16 %v405, %v401
    %v626 = vpack.c.b16 %v406, %v402
    %v627 = vpack.c.b16 %v407, %v403
    %v628 = vpack.c.b16 %v412, %v408
    %v629 = vpack.c.b16 %v413, %v409
    %v630 = vpack.c.b16 %v414, %v410
    %v631 = vpack.c.b16 %v415, %v411
    %v632 = vpack.c.b16 %v420, %v416
    %v633 = vpack.c.b16 %v421, %v417
    %v634 = vpack.c.b16 %v422, %v418
    %v635 = vpack.c.b16 %v423, %v419
    %v636 = vpack.c.b16 %v428, %v424
    %v637 = vpack.c.b16 %v429, %v425
    %v638 = vpack.c.b16 %v430, %v426
    %v639 = vpack.c.b16 %v431, %v427
    %v640 = vpack.c.b16 %v436, %v432
    %v641 = vpack.c.b16 %v437, %v433
    %v642 = vpack.c.b16 %v438, %v434
    %v643 = vpack.c.b16 %v439, %v435
    %v644 = vpack.c.b16 %v444, %v440
    %v645 = vpack.c.b16 %v445, %v441
    %v646 = vpack.c.b16 %v446, %v442
    %v647 = vpack.c.b16 %v447, %v443
    %v648 = vpack.c.b16 %v452, %v448
    %v649 = vpack.c.b16 %v453, %v449
    %v650 = vpack.c.b16 %v454, %v450
    %v651 = vpack.c.b16 %v455, %v451
    %v652 = vpack.c.b16 %v460, %v456
    %v653 = vpack.c.b16 %v461, %v457
    %v654 = vpack.c.b16 %v462, %v458
    %v655 = vpack.c.b16 %v463, %v459
    %v656 = vpack.c.b16 %v468, %v464
    %v657 = vpack.c.b16 %v469, %v465
    %v658 = vpack.c.b16 %v470, %v466
    %v659 = vpack.c.b16 %v471, %v467
    %v660 = vpack.c.b16 %v476, %v472
    %v661 = vpack.c.b16 %v477, %v473
    %v662 = vpack.c.b16 %v478, %v474
    %v663 = vpack.c.b16 %v479, %v475
    %v664 = vpack.c.b16 %v484, %v480
    %v665 = vpack.c.b16 %v485, %v481
    %v666 = vpack.c.b16 %v486, %v482
    %v667 = vpack.c.b16 %v487, %v483
    %v668 = vpack.c.b16 %v492, %v488
    %v669 = vpack.c.b16 %v493, %v489
    %v670 = vpack.c.b16 %v494, %v490
    %v671 = vpack.c.b16 %v495, %v491
    %v672 = vpack.c.b16 %v500, %v496
    %v673 = vpack.c.b16 %v501, %v497
    %v674 = vpack.c.b16 %v502, %v498
    %v675 = vpack.c.b16 %v503, %v499
    %v676 = vpack.c.b16 %v508, %v504
    %v677 = vpack.c.b16 %v509, %v505
    %v678 = vpack.c.b16 %v510, %v506
    %v679 = vpack.c.b16 %v511, %v507
    %v680 = vpack.c.b16 %v516, %v512
    %v681 = vpack.c.b16 %v517, %v513
    %v682 = vpack.c.b16 %v518, %v514
    %v683 = vpack.c.b16 %v519, %v515
    %v684 = vpack.c.b16 %v524, %v520
    %v685 = vpack.c.b16 %v525, %v521
    %v686 = vpack.c.b16 %v526, %v522
    %v687 = vpack.c.b16 %v527, %v523
    %v688 = vpack.c.b16 %v532, %v528
    %v689 = vpack.c.b16 %v533, %v529
    %v690 = vpack.c.b16 %v534, %v530
    %v691 = vpack.c.b16 %v535, %v531
    %v692 = vpack.c.b16 %v540, %v536
    %v693 = vpack.c.b16 %v541, %v537
    %v694 = vpack.c.b16 %v542, %v538
    %v695 = vpack.c.b16 %v543, %v539
    %v696 = vpack.c.b16 %v548, %v544
    %v697 = vpack.c.b16 %v549, %v545
    %v698 = vpack.c.b16 %v550, %v546
    %v699 = vpack.c.b16 %v551, %v547
    %v700 = vpack.c.b16 %v556, %v552
    %v701 = vpack.c.b16 %v557, %v553
    %v702 = vpack.c.b16 %v558, %v554
    %v703 = vpack.c.b16 %v559, %v555
    %v704 = vpack.c.b16 %v564, %v560
    %v705 = vpack.c.b16 %v565, %v561
    %v706 = vpack.c.b16 %v566, %v562
    %v707 = vpack.c.b16 %v567, %v563
    %v708 = vpack.c.b16 %v572, %v568
    %v709 = vpack.c.b16 %v573, %v569
    %v710 = vpack.c.b16 %v574, %v570
    %v711 = vpack.c.b16 %v575, %v571
    %v712 = vpack.c.b16 %v580, %v576
    %v713 = vpack.c.b16 %v581, %v577
    %v714 = vpack.c.b16 %v582, %v578
    %v715 = vpack.c.b16 %v583, %v579
    %v716 = vpack.c.b16 %v588, %v584
    %v717 = vpack.c.b16 %v589, %v585
    %v718 = vpack.c.b16 %v590, %v586
    %v719 = vpack.c.b16 %v591, %v587
    %848 = vmatpush.bf16.msra.mxu0 %v620
    %849 = vmatpush.bf16.msra.mxu0 %v616
    %850 = vmatpush.bf16.msra.mxu0 %v612
    %851 = vmatpush.bf16.msra.mxu0 %v608
    %852 = vmatpush.bf16.msra.mxu0 %v604
    %853 = vmatpush.bf16.msra.mxu0 %v600
    %854 = vmatpush.bf16.msra.mxu0 %v596
    %855 = vmatpush.bf16.msra.mxu0 %v592
    %856 = vmatmul.bf16.gmra.mxu0 %v200
    %v857 = vpop.f32.mrf.mxu0
    %v858 = vadd.f32 %v180, %v857
    %v859 = vpop.f32.mrf.mxu0
    %v860 = vadd.f32 %v180, %v859
    %861 = vdwg.mxu0
    %862 = vmatpush.bf16.msra.mxu0 %v652
    %863 = vmatpush.bf16.msra.mxu0 %v648
    %864 = vmatpush.bf16.msra.mxu0 %v644
    %865 = vmatpush.bf16.msra.mxu0 %v640
    %866 = vmatpush.bf16.msra.mxu0 %v636
    %867 = vmatpush.bf16.msra.mxu0 %v632
    %868 = vmatpush.bf16.msra.mxu0 %v628
    %869 = vmatpush.bf16.msra.mxu0 %v624
    %870 = vmatmul.bf16.gmra.mxu0 %v201
    %v871 = vpop.f32.mrf.mxu0
    %v872 = vadd.f32 %v858, %v871
    %v873 = vpop.f32.mrf.mxu0
    %v874 = vadd.f32 %v860, %v873
    %875 = vdwg.mxu0
    %876 = vmatpush.bf16.msra.mxu0 %v684
    %877 = vmatpush.bf16.msra.mxu0 %v680
    %878 = vmatpush.bf16.msra.mxu0 %v676
    %879 = vmatpush.bf16.msra.mxu0 %v672
    %880 = vmatpush.bf16.msra.mxu0 %v668
    %881 = vmatpush.bf16.msra.mxu0 %v664
    %882 = vmatpush.bf16.msra.mxu0 %v660
    %883 = vmatpush.bf16.msra.mxu0 %v656
    %884 = vmatmul.bf16.gmra.mxu0 %v202
    %v885 = vpop.f32.mrf.mxu0
    %v886 = vadd.f32 %v872, %v885
    %v887 = vpop.f32.mrf.mxu0
    %v888 = vadd.f32 %v874, %v887
    %889 = vdwg.mxu0
    %890 = vmatpush.bf16.msra.mxu0 %v716
    %891 = vmatpush.bf16.msra.mxu0 %v712
    %892 = vmatpush.bf16.msra.mxu0 %v708
    %893 = vmatpush.bf16.msra.mxu0 %v704
    %894 = vmatpush.bf16.msra.mxu0 %v700
    %895 = vmatpush.bf16.msra.mxu0 %v696
    %896 = vmatpush.bf16.msra.mxu0 %v692
    %897 = vmatpush.bf16.msra.mxu0 %v688
    %898 = vmatmul.bf16.gmra.mxu0 %v203
    %v899 = vpop.f32.mrf.mxu0
    %v900 = vadd.f32 %v886, %v899
    %v901 = vpop.f32.mrf.mxu0
    %v902 = vadd.f32 %v888, %v901
    %903 = vdwg.mxu0
    %904 = vmatpush.bf16.msra.mxu0 %v621
    %905 = vmatpush.bf16.msra.mxu0 %v617
    %906 = vmatpush.bf16.msra.mxu0 %v613
    %907 = vmatpush.bf16.msra.mxu0 %v609
    %908 = vmatpush.bf16.msra.mxu0 %v605
    %909 = vmatpush.bf16.msra.mxu0 %v601
    %910 = vmatpush.bf16.msra.mxu0 %v597
    %911 = vmatpush.bf16.msra.mxu0 %v593
    %912 = vmatmul.bf16.gmra.mxu0 %v200
    %v913 = vpop.f32.mrf.mxu0
    %v914 = vadd.f32 %v181, %v913
    %v915 = vpop.f32.mrf.mxu0
    %v916 = vadd.f32 %v181, %v915
    %917 = vdwg.mxu0
    %918 = vmatpush.bf16.msra.mxu0 %v653
    %919 = vmatpush.bf16.msra.mxu0 %v649
    %920 = vmatpush.bf16.msra.mxu0 %v645
    %921 = vmatpush.bf16.msra.mxu0 %v641
    %922 = vmatpush.bf16.msra.mxu0 %v637
    %923 = vmatpush.bf16.msra.mxu0 %v633
    %924 = vmatpush.bf16.msra.mxu0 %v629
    %925 = vmatpush.bf16.msra.mxu0 %v625
    %926 = vmatmul.bf16.gmra.mxu0 %v201
    %v927 = vpop.f32.mrf.mxu0
    %v928 = vadd.f32 %v914, %v927
    %v929 = vpop.f32.mrf.mxu0
    %v930 = vadd.f32 %v916, %v929
    %931 = vdwg.mxu0
    %932 = vmatpush.bf16.msra.mxu0 %v685
    %933 = vmatpush.bf16.msra.mxu0 %v681
    %934 = vmatpush.bf16.msra.mxu0 %v677
    %935 = vmatpush.bf16.msra.mxu0 %v673
    %936 = vmatpush.bf16.msra.mxu0 %v669
    %937 = vmatpush.bf16.msra.mxu0 %v665
    %938 = vmatpush.bf16.msra.mxu0 %v661
    %939 = vmatpush.bf16.msra.mxu0 %v657
    %940 = vmatmul.bf16.gmra.mxu0 %v202
    %v941 = vpop.f32.mrf.mxu0
    %v942 = vadd.f32 %v928, %v941
    %v943 = vpop.f32.mrf.mxu0
    %v944 = vadd.f32 %v930, %v943
    %945 = vdwg.mxu0
    %946 = vmatpush.bf16.msra.mxu0 %v717
    %947 = vmatpush.bf16.msra.mxu0 %v713
    %948 = vmatpush.bf16.msra.mxu0 %v709
    %949 = vmatpush.bf16.msra.mxu0 %v705
    %950 = vmatpush.bf16.msra.mxu0 %v701
    %951 = vmatpush.bf16.msra.mxu0 %v697
    %952 = vmatpush.bf16.msra.mxu0 %v693
    %953 = vmatpush.bf16.msra.mxu0 %v689
    %954 = vmatmul.bf16.gmra.mxu0 %v203
    %v955 = vpop.f32.mrf.mxu0
    %v956 = vadd.f32 %v942, %v955
    %v957 = vpop.f32.mrf.mxu0
    %v958 = vadd.f32 %v944, %v957
    %959 = vdwg.mxu0
    %960 = vmatpush.bf16.msra.mxu0 %v622
    %961 = vmatpush.bf16.msra.mxu0 %v618
    %962 = vmatpush.bf16.msra.mxu0 %v614
    %963 = vmatpush.bf16.msra.mxu0 %v610
    %964 = vmatpush.bf16.msra.mxu0 %v606
    %965 = vmatpush.bf16.msra.mxu0 %v602
    %966 = vmatpush.bf16.msra.mxu0 %v598
    %967 = vmatpush.bf16.msra.mxu0 %v594
    %968 = vmatmul.bf16.gmra.mxu0 %v200
    %v969 = vpop.f32.mrf.mxu0
    %v970 = vadd.f32 %v182, %v969
    %v971 = vpop.f32.mrf.mxu0
    %v972 = vadd.f32 %v182, %v971
    %973 = vdwg.mxu0
    %974 = vmatpush.bf16.msra.mxu0 %v654
    %975 = vmatpush.bf16.msra.mxu0 %v650
    %976 = vmatpush.bf16.msra.mxu0 %v646
    %977 = vmatpush.bf16.msra.mxu0 %v642
    %978 = vmatpush.bf16.msra.mxu0 %v638
    %979 = vmatpush.bf16.msra.mxu0 %v634
    %980 = vmatpush.bf16.msra.mxu0 %v630
    %981 = vmatpush.bf16.msra.mxu0 %v626
    %982 = vmatmul.bf16.gmra.mxu0 %v201
    %v983 = vpop.f32.mrf.mxu0
    %v984 = vadd.f32 %v970, %v983
    %v985 = vpop.f32.mrf.mxu0
    %v986 = vadd.f32 %v972, %v985
    %987 = vdwg.mxu0
    %988 = vmatpush.bf16.msra.mxu0 %v686
    %989 = vmatpush.bf16.msra.mxu0 %v682
    %990 = vmatpush.bf16.msra.mxu0 %v678
    %991 = vmatpush.bf16.msra.mxu0 %v674
    %992 = vmatpush.bf16.msra.mxu0 %v670
    %993 = vmatpush.bf16.msra.mxu0 %v666
    %994 = vmatpush.bf16.msra.mxu0 %v662
    %995 = vmatpush.bf16.msra.mxu0 %v658
    %996 = vmatmul.bf16.gmra.mxu0 %v202
    %v997 = vpop.f32.mrf.mxu0
    %v998 = vadd.f32 %v984, %v997
    %v999 = vpop.f32.mrf.mxu0
    %v1000 = vadd.f32 %v986, %v999
    %1001 = vdwg.mxu0
    %1002 = vmatpush.bf16.msra.mxu0 %v718
    %1003 = vmatpush.bf16.msra.mxu0 %v714
    %1004 = vmatpush.bf16.msra.mxu0 %v710
    %1005 = vmatpush.bf16.msra.mxu0 %v706
    %1006 = vmatpush.bf16.msra.mxu0 %v702
    %1007 = vmatpush.bf16.msra.mxu0 %v698
    %1008 = vmatpush.bf16.msra.mxu0 %v694
    %1009 = vmatpush.bf16.msra.mxu0 %v690
    %1010 = vmatmul.bf16.gmra.mxu0 %v203
    %v1011 = vpop.f32.mrf.mxu0
    %v1012 = vadd.f32 %v998, %v1011
    %v1013 = vpop.f32.mrf.mxu0
    %v1014 = vadd.f32 %v1000, %v1013
    %1015 = vdwg.mxu0
    %1016 = vmatpush.bf16.msra.mxu0 %v623
    %1017 = vmatpush.bf16.msra.mxu0 %v619
    %1018 = vmatpush.bf16.msra.mxu0 %v615
    %1019 = vmatpush.bf16.msra.mxu0 %v611
    %1020 = vmatpush.bf16.msra.mxu0 %v607
    %1021 = vmatpush.bf16.msra.mxu0 %v603
    %1022 = vmatpush.bf16.msra.mxu0 %v599
    %1023 = vmatpush.bf16.msra.mxu0 %v595
    %1024 = vmatmul.bf16.gmra.mxu0 %v200
    %v1025 = vpop.f32.mrf.mxu0
    %v1026 = vadd.f32 %v183, %v1025
    %v1027 = vpop.f32.mrf.mxu0
    %v1028 = vadd.f32 %v183, %v1027
    %1029 = vdwg.mxu0
    %1030 = vmatpush.bf16.msra.mxu0 %v655
    %1031 = vmatpush.bf16.msra.mxu0 %v651
    %1032 = vmatpush.bf16.msra.mxu0 %v647
    %1033 = vmatpush.bf16.msra.mxu0 %v643
    %1034 = vmatpush.bf16.msra.mxu0 %v639
    %1035 = vmatpush.bf16.msra.mxu0 %v635
    %1036 = vmatpush.bf16.msra.mxu0 %v631
    %1037 = vmatpush.bf16.msra.mxu0 %v627
    %1038 = vmatmul.bf16.gmra.mxu0 %v201
    %v1039 = vpop.f32.mrf.mxu0
    %v1040 = vadd.f32 %v1026, %v1039
    %v1041 = vpop.f32.mrf.mxu0
    %v1042 = vadd.f32 %v1028, %v1041
    %1043 = vdwg.mxu0
    %1044 = vmatpush.bf16.msra.mxu0 %v687
    %1045 = vmatpush.bf16.msra.mxu0 %v683
    %1046 = vmatpush.bf16.msra.mxu0 %v679
    %1047 = vmatpush.bf16.msra.mxu0 %v675
    %1048 = vmatpush.bf16.msra.mxu0 %v671
    %1049 = vmatpush.bf16.msra.mxu0 %v667
    %1050 = vmatpush.bf16.msra.mxu0 %v663
    %1051 = vmatpush.bf16.msra.mxu0 %v659
    %1052 = vmatmul.bf16.gmra.mxu0 %v202
    %v1053 = vpop.f32.mrf.mxu0
    %v1054 = vadd.f32 %v1040, %v1053
    %v1055 = vpop.f32.mrf.mxu0
    %v1056 = vadd.f32 %v1042, %v1055
    %1057 = vdwg.mxu0
    %1058 = vmatpush.bf16.msra.mxu0 %v719
    %1059 = vmatpush.bf16.msra.mxu0 %v715
    %1060 = vmatpush.bf16.msra.mxu0 %v711
    %1061 = vmatpush.bf16.msra.mxu0 %v707
    %1062 = vmatpush.bf16.msra.mxu0 %v703
    %1063 = vmatpush.bf16.msra.mxu0 %v699
    %1064 = vmatpush.bf16.msra.mxu0 %v695
    %1065 = vmatpush.bf16.msra.mxu0 %v691
    %1066 = vmatmul.bf16.gmra.mxu0 %v203
    %v1067 = vpop.f32.mrf.mxu0
    %v1068 = vadd.f32 %v1054, %v1067
    %v1069 = vpop.f32.mrf.mxu0
    %v1070 = vadd.f32 %v1056, %v1069
    %1071 = vdwg.mxu0
    %v1072 = vmax.f32 %v900, 0.0
    %v1073 = vmax.f32 %v956, 0.0
    %v1074 = vmax.f32 %v1012, 0.0
    %v1075 = vmax.f32 %v1068, 0.0
    %v1076 = vmax.f32 %v902, 0.0
    %v1077 = vmax.f32 %v958, 0.0
    %v1078 = vmax.f32 %v1014, 0.0
    %v1079 = vmax.f32 %v1070, 0.0
    %v1080 = vpack.c.bf16 %v1076, %v1072
    %v1081 = vpack.c.bf16 %v1077, %v1073
    %v1082 = vpack.c.bf16 %v1078, %v1074
    %v1083 = vpack.c.bf16 %v1079, %v1075
    %s1084 = scalar_lea.vmem [#allocation2], 1024
    %v1085 = vld [vmem:[%s1084] sm:$0xff]
    %v1086 = vld [vmem:[%s1084 + $0x8] sm:$0xff]
    %v1087 = vld [vmem:[%s1084 + $0x10] sm:$0xff]
    %v1088 = vld [vmem:[%s1084 + $0x18] sm:$0xff]
    %v1089 = vld [vmem:[%s1084 + $0x20] sm:$0xff]
    %v1090 = vld [vmem:[%s1084 + $0x28] sm:$0xff]
    %v1091 = vld [vmem:[%s1084 + $0x30] sm:$0xff]
    %v1092 = vld [vmem:[%s1084 + $0x38] sm:$0xff]
    %v1093 = vld [vmem:[%s1084 + $0x40] sm:$0xff]
    %v1094 = vld [vmem:[%s1084 + $0x48] sm:$0xff]
    %v1095 = vld [vmem:[%s1084 + $0x50] sm:$0xff]
    %v1096 = vld [vmem:[%s1084 + $0x58] sm:$0xff]
    %v1097 = vld [vmem:[%s1084 + $0x60] sm:$0xff]
    %v1098 = vld [vmem:[%s1084 + $0x68] sm:$0xff]
    %v1099 = vld [vmem:[%s1084 + $0x70] sm:$0xff]
    %v1100 = vld [vmem:[%s1084 + $0x78] sm:$0xff]
    %v1101 = vld [vmem:[%s1084 + $0x80] sm:$0xff]
    %v1102 = vld [vmem:[%s1084 + $0x88] sm:$0xff]
    %v1103 = vld [vmem:[%s1084 + $0x90] sm:$0xff]
    %v1104 = vld [vmem:[%s1084 + $0x98] sm:$0xff]
    %v1105 = vld [vmem:[%s1084 + $0xa0] sm:$0xff]
    %v1106 = vld [vmem:[%s1084 + $0xa8] sm:$0xff]
    %v1107 = vld [vmem:[%s1084 + $0xb0] sm:$0xff]
    %v1108 = vld [vmem:[%s1084 + $0xb8] sm:$0xff]
    %v1109 = vld [vmem:[%s1084 + $0xc0] sm:$0xff]
    %v1110 = vld [vmem:[%s1084 + $0xc8] sm:$0xff]
    %v1111 = vld [vmem:[%s1084 + $0xd0] sm:$0xff]
    %v1112 = vld [vmem:[%s1084 + $0xd8] sm:$0xff]
    %v1113 = vld [vmem:[%s1084 + $0xe0] sm:$0xff]
    %v1114 = vld [vmem:[%s1084 + $0xe8] sm:$0xff]
    %v1115 = vld [vmem:[%s1084 + $0xf0] sm:$0xff]
    %v1116 = vld [vmem:[%s1084 + $0xf8] sm:$0xff]
    %v1117 = vld [vmem:[%s1084 + $0x100] sm:$0xff]
    %v1118 = vld [vmem:[%s1084 + $0x108] sm:$0xff]
    %v1119 = vld [vmem:[%s1084 + $0x110] sm:$0xff]
    %v1120 = vld [vmem:[%s1084 + $0x118] sm:$0xff]
    %v1121 = vld [vmem:[%s1084 + $0x120] sm:$0xff]
    %v1122 = vld [vmem:[%s1084 + $0x128] sm:$0xff]
    %v1123 = vld [vmem:[%s1084 + $0x130] sm:$0xff]
    %v1124 = vld [vmem:[%s1084 + $0x138] sm:$0xff]
    %v1125 = vld [vmem:[%s1084 + $0x140] sm:$0xff]
    %v1126 = vld [vmem:[%s1084 + $0x148] sm:$0xff]
    %v1127 = vld [vmem:[%s1084 + $0x150] sm:$0xff]
    %v1128 = vld [vmem:[%s1084 + $0x158] sm:$0xff]
    %v1129 = vld [vmem:[%s1084 + $0x160] sm:$0xff]
    %v1130 = vld [vmem:[%s1084 + $0x168] sm:$0xff]
    %v1131 = vld [vmem:[%s1084 + $0x170] sm:$0xff]
    %v1132 = vld [vmem:[%s1084 + $0x178] sm:$0xff]
    %v1133 = vld [vmem:[%s1084 + $0x180] sm:$0xff]
    %v1134 = vld [vmem:[%s1084 + $0x188] sm:$0xff]
    %v1135 = vld [vmem:[%s1084 + $0x190] sm:$0xff]
    %v1136 = vld [vmem:[%s1084 + $0x198] sm:$0xff]
    %v1137 = vld [vmem:[%s1084 + $0x1a0] sm:$0xff]
    %v1138 = vld [vmem:[%s1084 + $0x1a8] sm:$0xff]
    %v1139 = vld [vmem:[%s1084 + $0x1b0] sm:$0xff]
    %v1140 = vld [vmem:[%s1084 + $0x1b8] sm:$0xff]
    %v1141 = vld [vmem:[%s1084 + $0x1c0] sm:$0xff]
    %v1142 = vld [vmem:[%s1084 + $0x1c8] sm:$0xff]
    %v1143 = vld [vmem:[%s1084 + $0x1d0] sm:$0xff]
    %v1144 = vld [vmem:[%s1084 + $0x1d8] sm:$0xff]
    %v1145 = vld [vmem:[%s1084 + $0x1e0] sm:$0xff]
    %v1146 = vld [vmem:[%s1084 + $0x1e8] sm:$0xff]
    %v1147 = vld [vmem:[%s1084 + $0x1f0] sm:$0xff]
    %v1148 = vld [vmem:[%s1084 + $0x1f8] sm:$0xff]
    %v1149 = vld [vmem:[%s1084 + $0x200] sm:$0xff]
    %v1150 = vld [vmem:[%s1084 + $0x208] sm:$0xff]
    %v1151 = vld [vmem:[%s1084 + $0x210] sm:$0xff]
    %v1152 = vld [vmem:[%s1084 + $0x218] sm:$0xff]
    %v1153 = vld [vmem:[%s1084 + $0x220] sm:$0xff]
    %v1154 = vld [vmem:[%s1084 + $0x228] sm:$0xff]
    %v1155 = vld [vmem:[%s1084 + $0x230] sm:$0xff]
    %v1156 = vld [vmem:[%s1084 + $0x238] sm:$0xff]
    %v1157 = vld [vmem:[%s1084 + $0x240] sm:$0xff]
    %v1158 = vld [vmem:[%s1084 + $0x248] sm:$0xff]
    %v1159 = vld [vmem:[%s1084 + $0x250] sm:$0xff]
    %v1160 = vld [vmem:[%s1084 + $0x258] sm:$0xff]
    %v1161 = vld [vmem:[%s1084 + $0x260] sm:$0xff]
    %v1162 = vld [vmem:[%s1084 + $0x268] sm:$0xff]
    %v1163 = vld [vmem:[%s1084 + $0x270] sm:$0xff]
    %v1164 = vld [vmem:[%s1084 + $0x278] sm:$0xff]
    %v1165 = vld [vmem:[%s1084 + $0x280] sm:$0xff]
    %v1166 = vld [vmem:[%s1084 + $0x288] sm:$0xff]
    %v1167 = vld [vmem:[%s1084 + $0x290] sm:$0xff]
    %v1168 = vld [vmem:[%s1084 + $0x298] sm:$0xff]
    %v1169 = vld [vmem:[%s1084 + $0x2a0] sm:$0xff]
    %v1170 = vld [vmem:[%s1084 + $0x2a8] sm:$0xff]
    %v1171 = vld [vmem:[%s1084 + $0x2b0] sm:$0xff]
    %v1172 = vld [vmem:[%s1084 + $0x2b8] sm:$0xff]
    %v1173 = vld [vmem:[%s1084 + $0x2c0] sm:$0xff]
    %v1174 = vld [vmem:[%s1084 + $0x2c8] sm:$0xff]
    %v1175 = vld [vmem:[%s1084 + $0x2d0] sm:$0xff]
    %v1176 = vld [vmem:[%s1084 + $0x2d8] sm:$0xff]
    %v1177 = vld [vmem:[%s1084 + $0x2e0] sm:$0xff]
    %v1178 = vld [vmem:[%s1084 + $0x2e8] sm:$0xff]
    %v1179 = vld [vmem:[%s1084 + $0x2f0] sm:$0xff]
    %v1180 = vld [vmem:[%s1084 + $0x2f8] sm:$0xff]
    %v1181 = vld [vmem:[%s1084 + $0x300] sm:$0xff]
    %v1182 = vld [vmem:[%s1084 + $0x308] sm:$0xff]
    %v1183 = vld [vmem:[%s1084 + $0x310] sm:$0xff]
    %v1184 = vld [vmem:[%s1084 + $0x318] sm:$0xff]
    %v1185 = vld [vmem:[%s1084 + $0x320] sm:$0xff]
    %v1186 = vld [vmem:[%s1084 + $0x328] sm:$0xff]
    %v1187 = vld [vmem:[%s1084 + $0x330] sm:$0xff]
    %v1188 = vld [vmem:[%s1084 + $0x338] sm:$0xff]
    %v1189 = vld [vmem:[%s1084 + $0x340] sm:$0xff]
    %v1190 = vld [vmem:[%s1084 + $0x348] sm:$0xff]
    %v1191 = vld [vmem:[%s1084 + $0x350] sm:$0xff]
    %v1192 = vld [vmem:[%s1084 + $0x358] sm:$0xff]
    %v1193 = vld [vmem:[%s1084 + $0x360] sm:$0xff]
    %v1194 = vld [vmem:[%s1084 + $0x368] sm:$0xff]
    %v1195 = vld [vmem:[%s1084 + $0x370] sm:$0xff]
    %v1196 = vld [vmem:[%s1084 + $0x378] sm:$0xff]
    %v1197 = vld [vmem:[%s1084 + $0x380] sm:$0xff]
    %v1198 = vld [vmem:[%s1084 + $0x388] sm:$0xff]
    %v1199 = vld [vmem:[%s1084 + $0x390] sm:$0xff]
    %v1200 = vld [vmem:[%s1084 + $0x398] sm:$0xff]
    %v1201 = vld [vmem:[%s1084 + $0x3a0] sm:$0xff]
    %v1202 = vld [vmem:[%s1084 + $0x3a8] sm:$0xff]
    %v1203 = vld [vmem:[%s1084 + $0x3b0] sm:$0xff]
    %v1204 = vld [vmem:[%s1084 + $0x3b8] sm:$0xff]
    %v1205 = vld [vmem:[%s1084 + $0x3c0] sm:$0xff]
    %v1206 = vld [vmem:[%s1084 + $0x3c8] sm:$0xff]
    %v1207 = vld [vmem:[%s1084 + $0x3d0] sm:$0xff]
    %v1208 = vld [vmem:[%s1084 + $0x3d8] sm:$0xff]
    %v1209 = vld [vmem:[%s1084 + $0x3e0] sm:$0xff]
    %v1210 = vld [vmem:[%s1084 + $0x3e8] sm:$0xff]
    %v1211 = vld [vmem:[%s1084 + $0x3f0] sm:$0xff]
    %v1212 = vld [vmem:[%s1084 + $0x3f8] sm:$0xff]
    %s1213 = scalar_lea.vmem [#allocation4], 4
    %v1214 = vld [vmem:[%s1213] sm:$0xf]
    %v1216 = vperm.slane %v1214, 0
    %v1217 = vperm.slane %v1214, 1
    %v1218 = vperm.slane %v1214, 2
    %v1219 = vperm.slane %v1214, 3
    %v1352 = vunpack.c.l.b16 %v1085
    %v1353 = vunpack.c.h.b16 %v1085
    %v1354 = vunpack.c.l.b16 %v1086
    %v1355 = vunpack.c.h.b16 %v1086
    %v1356 = vunpack.c.l.b16 %v1087
    %v1357 = vunpack.c.h.b16 %v1087
    %v1358 = vunpack.c.l.b16 %v1088
    %v1359 = vunpack.c.h.b16 %v1088
    %v1360 = vunpack.c.l.b16 %v1089
    %v1361 = vunpack.c.h.b16 %v1089
    %v1362 = vunpack.c.l.b16 %v1090
    %v1363 = vunpack.c.h.b16 %v1090
    %v1364 = vunpack.c.l.b16 %v1091
    %v1365 = vunpack.c.h.b16 %v1091
    %v1366 = vunpack.c.l.b16 %v1092
    %v1367 = vunpack.c.h.b16 %v1092
    %v1368 = vunpack.c.l.b16 %v1093
    %v1369 = vunpack.c.h.b16 %v1093
    %v1370 = vunpack.c.l.b16 %v1094
    %v1371 = vunpack.c.h.b16 %v1094
    %v1372 = vunpack.c.l.b16 %v1095
    %v1373 = vunpack.c.h.b16 %v1095
    %v1374 = vunpack.c.l.b16 %v1096
    %v1375 = vunpack.c.h.b16 %v1096
    %v1376 = vunpack.c.l.b16 %v1097
    %v1377 = vunpack.c.h.b16 %v1097
    %v1378 = vunpack.c.l.b16 %v1098
    %v1379 = vunpack.c.h.b16 %v1098
    %v1380 = vunpack.c.l.b16 %v1099
    %v1381 = vunpack.c.h.b16 %v1099
    %v1382 = vunpack.c.l.b16 %v1100
    %v1383 = vunpack.c.h.b16 %v1100
    %v1384 = vunpack.c.l.b16 %v1101
    %v1385 = vunpack.c.h.b16 %v1101
    %v1386 = vunpack.c.l.b16 %v1102
    %v1387 = vunpack.c.h.b16 %v1102
    %v1388 = vunpack.c.l.b16 %v1103
    %v1389 = vunpack.c.h.b16 %v1103
    %v1390 = vunpack.c.l.b16 %v1104
    %v1391 = vunpack.c.h.b16 %v1104
    %v1392 = vunpack.c.l.b16 %v1105
    %v1393 = vunpack.c.h.b16 %v1105
    %v1394 = vunpack.c.l.b16 %v1106
    %v1395 = vunpack.c.h.b16 %v1106
    %v1396 = vunpack.c.l.b16 %v1107
    %v1397 = vunpack.c.h.b16 %v1107
    %v1398 = vunpack.c.l.b16 %v1108
    %v1399 = vunpack.c.h.b16 %v1108
    %v1400 = vunpack.c.l.b16 %v1109
    %v1401 = vunpack.c.h.b16 %v1109
    %v1402 = vunpack.c.l.b16 %v1110
    %v1403 = vunpack.c.h.b16 %v1110
    %v1404 = vunpack.c.l.b16 %v1111
    %v1405 = vunpack.c.h.b16 %v1111
    %v1406 = vunpack.c.l.b16 %v1112
    %v1407 = vunpack.c.h.b16 %v1112
    %v1408 = vunpack.c.l.b16 %v1113
    %v1409 = vunpack.c.h.b16 %v1113
    %v1410 = vunpack.c.l.b16 %v1114
    %v1411 = vunpack.c.h.b16 %v1114
    %v1412 = vunpack.c.l.b16 %v1115
    %v1413 = vunpack.c.h.b16 %v1115
    %v1414 = vunpack.c.l.b16 %v1116
    %v1415 = vunpack.c.h.b16 %v1116
    %v1416 = vunpack.c.l.b16 %v1117
    %v1417 = vunpack.c.h.b16 %v1117
    %v1418 = vunpack.c.l.b16 %v1118
    %v1419 = vunpack.c.h.b16 %v1118
    %v1420 = vunpack.c.l.b16 %v1119
    %v1421 = vunpack.c.h.b16 %v1119
    %v1422 = vunpack.c.l.b16 %v1120
    %v1423 = vunpack.c.h.b16 %v1120
    %v1424 = vunpack.c.l.b16 %v1121
    %v1425 = vunpack.c.h.b16 %v1121
    %v1426 = vunpack.c.l.b16 %v1122
    %v1427 = vunpack.c.h.b16 %v1122
    %v1428 = vunpack.c.l.b16 %v1123
    %v1429 = vunpack.c.h.b16 %v1123
    %v1430 = vunpack.c.l.b16 %v1124
    %v1431 = vunpack.c.h.b16 %v1124
    %v1432 = vunpack.c.l.b16 %v1125
    %v1433 = vunpack.c.h.b16 %v1125
    %v1434 = vunpack.c.l.b16 %v1126
    %v1435 = vunpack.c.h.b16 %v1126
    %v1436 = vunpack.c.l.b16 %v1127
    %v1437 = vunpack.c.h.b16 %v1127
    %v1438 = vunpack.c.l.b16 %v1128
    %v1439 = vunpack.c.h.b16 %v1128
    %v1440 = vunpack.c.l.b16 %v1129
    %v1441 = vunpack.c.h.b16 %v1129
    %v1442 = vunpack.c.l.b16 %v1130
    %v1443 = vunpack.c.h.b16 %v1130
    %v1444 = vunpack.c.l.b16 %v1131
    %v1445 = vunpack.c.h.b16 %v1131
    %v1446 = vunpack.c.l.b16 %v1132
    %v1447 = vunpack.c.h.b16 %v1132
    %v1448 = vunpack.c.l.b16 %v1133
    %v1449 = vunpack.c.h.b16 %v1133
    %v1450 = vunpack.c.l.b16 %v1134
    %v1451 = vunpack.c.h.b16 %v1134
    %v1452 = vunpack.c.l.b16 %v1135
    %v1453 = vunpack.c.h.b16 %v1135
    %v1454 = vunpack.c.l.b16 %v1136
    %v1455 = vunpack.c.h.b16 %v1136
    %v1456 = vunpack.c.l.b16 %v1137
    %v1457 = vunpack.c.h.b16 %v1137
    %v1458 = vunpack.c.l.b16 %v1138
    %v1459 = vunpack.c.h.b16 %v1138
    %v1460 = vunpack.c.l.b16 %v1139
    %v1461 = vunpack.c.h.b16 %v1139
    %v1462 = vunpack.c.l.b16 %v1140
    %v1463 = vunpack.c.h.b16 %v1140
    %v1464 = vunpack.c.l.b16 %v1141
    %v1465 = vunpack.c.h.b16 %v1141
    %v1466 = vunpack.c.l.b16 %v1142
    %v1467 = vunpack.c.h.b16 %v1142
    %v1468 = vunpack.c.l.b16 %v1143
    %v1469 = vunpack.c.h.b16 %v1143
    %v1470 = vunpack.c.l.b16 %v1144
    %v1471 = vunpack.c.h.b16 %v1144
    %v1472 = vunpack.c.l.b16 %v1145
    %v1473 = vunpack.c.h.b16 %v1145
    %v1474 = vunpack.c.l.b16 %v1146
    %v1475 = vunpack.c.h.b16 %v1146
    %v1476 = vunpack.c.l.b16 %v1147
    %v1477 = vunpack.c.h.b16 %v1147
    %v1478 = vunpack.c.l.b16 %v1148
    %v1479 = vunpack.c.h.b16 %v1148
    %v1480 = vunpack.c.l.b16 %v1149
    %v1481 = vunpack.c.h.b16 %v1149
    %v1482 = vunpack.c.l.b16 %v1150
    %v1483 = vunpack.c.h.b16 %v1150
    %v1484 = vunpack.c.l.b16 %v1151
    %v1485 = vunpack.c.h.b16 %v1151
    %v1486 = vunpack.c.l.b16 %v1152
    %v1487 = vunpack.c.h.b16 %v1152
    %v1488 = vunpack.c.l.b16 %v1153
    %v1489 = vunpack.c.h.b16 %v1153
    %v1490 = vunpack.c.l.b16 %v1154
    %v1491 = vunpack.c.h.b16 %v1154
    %v1492 = vunpack.c.l.b16 %v1155
    %v1493 = vunpack.c.h.b16 %v1155
    %v1494 = vunpack.c.l.b16 %v1156
    %v1495 = vunpack.c.h.b16 %v1156
    %v1496 = vunpack.c.l.b16 %v1157
    %v1497 = vunpack.c.h.b16 %v1157
    %v1498 = vunpack.c.l.b16 %v1158
    %v1499 = vunpack.c.h.b16 %v1158
    %v1500 = vunpack.c.l.b16 %v1159
    %v1501 = vunpack.c.h.b16 %v1159
    %v1502 = vunpack.c.l.b16 %v1160
    %v1503 = vunpack.c.h.b16 %v1160
    %v1504 = vunpack.c.l.b16 %v1161
    %v1505 = vunpack.c.h.b16 %v1161
    %v1506 = vunpack.c.l.b16 %v1162
    %v1507 = vunpack.c.h.b16 %v1162
    %v1508 = vunpack.c.l.b16 %v1163
    %v1509 = vunpack.c.h.b16 %v1163
    %v1510 = vunpack.c.l.b16 %v1164
    %v1511 = vunpack.c.h.b16 %v1164
    %v1512 = vunpack.c.l.b16 %v1165
    %v1513 = vunpack.c.h.b16 %v1165
    %v1514 = vunpack.c.l.b16 %v1166
    %v1515 = vunpack.c.h.b16 %v1166
    %v1516 = vunpack.c.l.b16 %v1167
    %v1517 = vunpack.c.h.b16 %v1167
    %v1518 = vunpack.c.l.b16 %v1168
    %v1519 = vunpack.c.h.b16 %v1168
    %v1520 = vunpack.c.l.b16 %v1169
    %v1521 = vunpack.c.h.b16 %v1169
    %v1522 = vunpack.c.l.b16 %v1170
    %v1523 = vunpack.c.h.b16 %v1170
    %v1524 = vunpack.c.l.b16 %v1171
    %v1525 = vunpack.c.h.b16 %v1171
    %v1526 = vunpack.c.l.b16 %v1172
    %v1527 = vunpack.c.h.b16 %v1172
    %v1528 = vunpack.c.l.b16 %v1173
    %v1529 = vunpack.c.h.b16 %v1173
    %v1530 = vunpack.c.l.b16 %v1174
    %v1531 = vunpack.c.h.b16 %v1174
    %v1532 = vunpack.c.l.b16 %v1175
    %v1533 = vunpack.c.h.b16 %v1175
    %v1534 = vunpack.c.l.b16 %v1176
    %v1535 = vunpack.c.h.b16 %v1176
    %v1536 = vunpack.c.l.b16 %v1177
    %v1537 = vunpack.c.h.b16 %v1177
    %v1538 = vunpack.c.l.b16 %v1178
    %v1539 = vunpack.c.h.b16 %v1178
    %v1540 = vunpack.c.l.b16 %v1179
    %v1541 = vunpack.c.h.b16 %v1179
    %v1542 = vunpack.c.l.b16 %v1180
    %v1543 = vunpack.c.h.b16 %v1180
    %v1544 = vunpack.c.l.b16 %v1181
    %v1545 = vunpack.c.h.b16 %v1181
    %v1546 = vunpack.c.l.b16 %v1182
    %v1547 = vunpack.c.h.b16 %v1182
    %v1548 = vunpack.c.l.b16 %v1183
    %v1549 = vunpack.c.h.b16 %v1183
    %v1550 = vunpack.c.l.b16 %v1184
    %v1551 = vunpack.c.h.b16 %v1184
    %v1552 = vunpack.c.l.b16 %v1185
    %v1553 = vunpack.c.h.b16 %v1185
    %v1554 = vunpack.c.l.b16 %v1186
    %v1555 = vunpack.c.h.b16 %v1186
    %v1556 = vunpack.c.l.b16 %v1187
    %v1557 = vunpack.c.h.b16 %v1187
    %v1558 = vunpack.c.l.b16 %v1188
    %v1559 = vunpack.c.h.b16 %v1188
    %v1560 = vunpack.c.l.b16 %v1189
    %v1561 = vunpack.c.h.b16 %v1189
    %v1562 = vunpack.c.l.b16 %v1190
    %v1563 = vunpack.c.h.b16 %v1190
    %v1564 = vunpack.c.l.b16 %v1191
    %v1565 = vunpack.c.h.b16 %v1191
    %v1566 = vunpack.c.l.b16 %v1192
    %v1567 = vunpack.c.h.b16 %v1192
    %v1568 = vunpack.c.l.b16 %v1193
    %v1569 = vunpack.c.h.b16 %v1193
    %v1570 = vunpack.c.l.b16 %v1194
    %v1571 = vunpack.c.h.b16 %v1194
    %v1572 = vunpack.c.l.b16 %v1195
    %v1573 = vunpack.c.h.b16 %v1195
    %v1574 = vunpack.c.l.b16 %v1196
    %v1575 = vunpack.c.h.b16 %v1196
    %v1576 = vunpack.c.l.b16 %v1197
    %v1577 = vunpack.c.h.b16 %v1197
    %v1578 = vunpack.c.l.b16 %v1198
    %v1579 = vunpack.c.h.b16 %v1198
    %v1580 = vunpack.c.l.b16 %v1199
    %v1581 = vunpack.c.h.b16 %v1199
    %v1582 = vunpack.c.l.b16 %v1200
    %v1583 = vunpack.c.h.b16 %v1200
    %v1584 = vunpack.c.l.b16 %v1201
    %v1585 = vunpack.c.h.b16 %v1201
    %v1586 = vunpack.c.l.b16 %v1202
    %v1587 = vunpack.c.h.b16 %v1202
    %v1588 = vunpack.c.l.b16 %v1203
    %v1589 = vunpack.c.h.b16 %v1203
    %v1590 = vunpack.c.l.b16 %v1204
    %v1591 = vunpack.c.h.b16 %v1204
    %v1592 = vunpack.c.l.b16 %v1205
    %v1593 = vunpack.c.h.b16 %v1205
    %v1594 = vunpack.c.l.b16 %v1206
    %v1595 = vunpack.c.h.b16 %v1206
    %v1596 = vunpack.c.l.b16 %v1207
    %v1597 = vunpack.c.h.b16 %v1207
    %v1598 = vunpack.c.l.b16 %v1208
    %v1599 = vunpack.c.h.b16 %v1208
    %v1600 = vunpack.c.l.b16 %v1209
    %v1601 = vunpack.c.h.b16 %v1209
    %v1602 = vunpack.c.l.b16 %v1210
    %v1603 = vunpack.c.h.b16 %v1210
    %v1604 = vunpack.c.l.b16 %v1211
    %v1605 = vunpack.c.h.b16 %v1211
    %v1606 = vunpack.c.l.b16 %v1212
    %v1607 = vunpack.c.h.b16 %v1212
    %v1608 = vpack.c.b16 %v1356, %v1352
    %v1609 = vpack.c.b16 %v1357, %v1353
    %v1610 = vpack.c.b16 %v1358, %v1354
    %v1611 = vpack.c.b16 %v1359, %v1355
    %v1612 = vpack.c.b16 %v1364, %v1360
    %v1613 = vpack.c.b16 %v1365, %v1361
    %v1614 = vpack.c.b16 %v1366, %v1362
    %v1615 = vpack.c.b16 %v1367, %v1363
    %v1616 = vpack.c.b16 %v1372, %v1368
    %v1617 = vpack.c.b16 %v1373, %v1369
    %v1618 = vpack.c.b16 %v1374, %v1370
    %v1619 = vpack.c.b16 %v1375, %v1371
    %v1620 = vpack.c.b16 %v1380, %v1376
    %v1621 = vpack.c.b16 %v1381, %v1377
    %v1622 = vpack.c.b16 %v1382, %v1378
    %v1623 = vpack.c.b16 %v1383, %v1379
    %v1624 = vpack.c.b16 %v1388, %v1384
    %v1625 = vpack.c.b16 %v1389, %v1385
    %v1626 = vpack.c.b16 %v1390, %v1386
    %v1627 = vpack.c.b16 %v1391, %v1387
    %v1628 = vpack.c.b16 %v1396, %v1392
    %v1629 = vpack.c.b16 %v1397, %v1393
    %v1630 = vpack.c.b16 %v1398, %v1394
    %v1631 = vpack.c.b16 %v1399, %v1395
    %v1632 = vpack.c.b16 %v1404, %v1400
    %v1633 = vpack.c.b16 %v1405, %v1401
    %v1634 = vpack.c.b16 %v1406, %v1402
    %v1635 = vpack.c.b16 %v1407, %v1403
    %v1636 = vpack.c.b16 %v1412, %v1408
    %v1637 = vpack.c.b16 %v1413, %v1409
    %v1638 = vpack.c.b16 %v1414, %v1410
    %v1639 = vpack.c.b16 %v1415, %v1411
    %v1640 = vpack.c.b16 %v1420, %v1416
    %v1641 = vpack.c.b16 %v1421, %v1417
    %v1642 = vpack.c.b16 %v1422, %v1418
    %v1643 = vpack.c.b16 %v1423, %v1419
    %v1644 = vpack.c.b16 %v1428, %v1424
    %v1645 = vpack.c.b16 %v1429, %v1425
    %v1646 = vpack.c.b16 %v1430, %v1426
    %v1647 = vpack.c.b16 %v1431, %v1427
    %v1648 = vpack.c.b16 %v1436, %v1432
    %v1649 = vpack.c.b16 %v1437, %v1433
    %v1650 = vpack.c.b16 %v1438, %v1434
    %v1651 = vpack.c.b16 %v1439, %v1435
    %v1652 = vpack.c.b16 %v1444, %v1440
    %v1653 = vpack.c.b16 %v1445, %v1441
    %v1654 = vpack.c.b16 %v1446, %v1442
    %v1655 = vpack.c.b16 %v1447, %v1443
    %v1656 = vpack.c.b16 %v1452, %v1448
    %v1657 = vpack.c.b16 %v1453, %v1449
    %v1658 = vpack.c.b16 %v1454, %v1450
    %v1659 = vpack.c.b16 %v1455, %v1451
    %v1660 = vpack.c.b16 %v1460, %v1456
    %v1661 = vpack.c.b16 %v1461, %v1457
    %v1662 = vpack.c.b16 %v1462, %v1458
    %v1663 = vpack.c.b16 %v1463, %v1459
    %v1664 = vpack.c.b16 %v1468, %v1464
    %v1665 = vpack.c.b16 %v1469, %v1465
    %v1666 = vpack.c.b16 %v1470, %v1466
    %v1667 = vpack.c.b16 %v1471, %v1467
    %v1668 = vpack.c.b16 %v1476, %v1472
    %v1669 = vpack.c.b16 %v1477, %v1473
    %v1670 = vpack.c.b16 %v1478, %v1474
    %v1671 = vpack.c.b16 %v1479, %v1475
    %v1672 = vpack.c.b16 %v1484, %v1480
    %v1673 = vpack.c.b16 %v1485, %v1481
    %v1674 = vpack.c.b16 %v1486, %v1482
    %v1675 = vpack.c.b16 %v1487, %v1483
    %v1676 = vpack.c.b16 %v1492, %v1488
    %v1677 = vpack.c.b16 %v1493, %v1489
    %v1678 = vpack.c.b16 %v1494, %v1490
    %v1679 = vpack.c.b16 %v1495, %v1491
    %v1680 = vpack.c.b16 %v1500, %v1496
    %v1681 = vpack.c.b16 %v1501, %v1497
    %v1682 = vpack.c.b16 %v1502, %v1498
    %v1683 = vpack.c.b16 %v1503, %v1499
    %v1684 = vpack.c.b16 %v1508, %v1504
    %v1685 = vpack.c.b16 %v1509, %v1505
    %v1686 = vpack.c.b16 %v1510, %v1506
    %v1687 = vpack.c.b16 %v1511, %v1507
    %v1688 = vpack.c.b16 %v1516, %v1512
    %v1689 = vpack.c.b16 %v1517, %v1513
    %v1690 = vpack.c.b16 %v1518, %v1514
    %v1691 = vpack.c.b16 %v1519, %v1515
    %v1692 = vpack.c.b16 %v1524, %v1520
    %v1693 = vpack.c.b16 %v1525, %v1521
    %v1694 = vpack.c.b16 %v1526, %v1522
    %v1695 = vpack.c.b16 %v1527, %v1523
    %v1696 = vpack.c.b16 %v1532, %v1528
    %v1697 = vpack.c.b16 %v1533, %v1529
    %v1698 = vpack.c.b16 %v1534, %v1530
    %v1699 = vpack.c.b16 %v1535, %v1531
    %v1700 = vpack.c.b16 %v1540, %v1536
    %v1701 = vpack.c.b16 %v1541, %v1537
    %v1702 = vpack.c.b16 %v1542, %v1538
    %v1703 = vpack.c.b16 %v1543, %v1539
    %v1704 = vpack.c.b16 %v1548, %v1544
    %v1705 = vpack.c.b16 %v1549, %v1545
    %v1706 = vpack.c.b16 %v1550, %v1546
    %v1707 = vpack.c.b16 %v1551, %v1547
    %v1708 = vpack.c.b16 %v1556, %v1552
    %v1709 = vpack.c.b16 %v1557, %v1553
    %v1710 = vpack.c.b16 %v1558, %v1554
    %v1711 = vpack.c.b16 %v1559, %v1555
    %v1712 = vpack.c.b16 %v1564, %v1560
    %v1713 = vpack.c.b16 %v1565, %v1561
    %v1714 = vpack.c.b16 %v1566, %v1562
    %v1715 = vpack.c.b16 %v1567, %v1563
    %v1716 = vpack.c.b16 %v1572, %v1568
    %v1717 = vpack.c.b16 %v1573, %v1569
    %v1718 = vpack.c.b16 %v1574, %v1570
    %v1719 = vpack.c.b16 %v1575, %v1571
    %v1720 = vpack.c.b16 %v1580, %v1576
    %v1721 = vpack.c.b16 %v1581, %v1577
    %v1722 = vpack.c.b16 %v1582, %v1578
    %v1723 = vpack.c.b16 %v1583, %v1579
    %v1724 = vpack.c.b16 %v1588, %v1584
    %v1725 = vpack.c.b16 %v1589, %v1585
    %v1726 = vpack.c.b16 %v1590, %v1586
    %v1727 = vpack.c.b16 %v1591, %v1587
    %v1728 = vpack.c.b16 %v1596, %v1592
    %v1729 = vpack.c.b16 %v1597, %v1593
    %v1730 = vpack.c.b16 %v1598, %v1594
    %v1731 = vpack.c.b16 %v1599, %v1595
    %v1732 = vpack.c.b16 %v1604, %v1600
    %v1733 = vpack.c.b16 %v1605, %v1601
    %v1734 = vpack.c.b16 %v1606, %v1602
    %v1735 = vpack.c.b16 %v1607, %v1603
    %1864 = vmatpush.bf16.msra.mxu0 %v1636
    %1865 = vmatpush.bf16.msra.mxu0 %v1632
    %1866 = vmatpush.bf16.msra.mxu0 %v1628
    %1867 = vmatpush.bf16.msra.mxu0 %v1624
    %1868 = vmatpush.bf16.msra.mxu0 %v1620
    %1869 = vmatpush.bf16.msra.mxu0 %v1616
    %1870 = vmatpush.bf16.msra.mxu0 %v1612
    %1871 = vmatpush.bf16.msra.mxu0 %v1608
    %1872 = vmatmul.bf16.gmra.mxu0 %v1080
    %v1873 = vpop.f32.mrf.mxu0
    %v1874 = vadd.f32 %v1216, %v1873
    %v1875 = vpop.f32.mrf.mxu0
    %v1876 = vadd.f32 %v1216, %v1875
    %1877 = vdwg.mxu0
    %1878 = vmatpush.bf16.msra.mxu0 %v1668
    %1879 = vmatpush.bf16.msra.mxu0 %v1664
    %1880 = vmatpush.bf16.msra.mxu0 %v1660
    %1881 = vmatpush.bf16.msra.mxu0 %v1656
    %1882 = vmatpush.bf16.msra.mxu0 %v1652
    %1883 = vmatpush.bf16.msra.mxu0 %v1648
    %1884 = vmatpush.bf16.msra.mxu0 %v1644
    %1885 = vmatpush.bf16.msra.mxu0 %v1640
    %1886 = vmatmul.bf16.gmra.mxu0 %v1081
    %v1887 = vpop.f32.mrf.mxu0
    %v1888 = vadd.f32 %v1874, %v1887
    %v1889 = vpop.f32.mrf.mxu0
    %v1890 = vadd.f32 %v1876, %v1889
    %1891 = vdwg.mxu0
    %1892 = vmatpush.bf16.msra.mxu0 %v1700
    %1893 = vmatpush.bf16.msra.mxu0 %v1696
    %1894 = vmatpush.bf16.msra.mxu0 %v1692
    %1895 = vmatpush.bf16.msra.mxu0 %v1688
    %1896 = vmatpush.bf16.msra.mxu0 %v1684
    %1897 = vmatpush.bf16.msra.mxu0 %v1680
    %1898 = vmatpush.bf16.msra.mxu0 %v1676
    %1899 = vmatpush.bf16.msra.mxu0 %v1672
    %1900 = vmatmul.bf16.gmra.mxu0 %v1082
    %v1901 = vpop.f32.mrf.mxu0
    %v1902 = vadd.f32 %v1888, %v1901
    %v1903 = vpop.f32.mrf.mxu0
    %v1904 = vadd.f32 %v1890, %v1903
    %1905 = vdwg.mxu0
    %1906 = vmatpush.bf16.msra.mxu0 %v1732
    %1907 = vmatpush.bf16.msra.mxu0 %v1728
    %1908 = vmatpush.bf16.msra.mxu0 %v1724
    %1909 = vmatpush.bf16.msra.mxu0 %v1720
    %1910 = vmatpush.bf16.msra.mxu0 %v1716
    %1911 = vmatpush.bf16.msra.mxu0 %v1712
    %1912 = vmatpush.bf16.msra.mxu0 %v1708
    %1913 = vmatpush.bf16.msra.mxu0 %v1704
    %1914 = vmatmul.bf16.gmra.mxu0 %v1083
    %v1915 = vpop.f32.mrf.mxu0
    %v1916 = vadd.f32 %v1902, %v1915
    %v1917 = vpop.f32.mrf.mxu0
    %v1918 = vadd.f32 %v1904, %v1917
    %1919 = vdwg.mxu0
    %1920 = vmatpush.bf16.msra.mxu0 %v1637
    %1921 = vmatpush.bf16.msra.mxu0 %v1633
    %1922 = vmatpush.bf16.msra.mxu0 %v1629
    %1923 = vmatpush.bf16.msra.mxu0 %v1625
    %1924 = vmatpush.bf16.msra.mxu0 %v1621
    %1925 = vmatpush.bf16.msra.mxu0 %v1617
    %1926 = vmatpush.bf16.msra.mxu0 %v1613
    %1927 = vmatpush.bf16.msra.mxu0 %v1609
    %1928 = vmatmul.bf16.gmra.mxu0 %v1080
    %v1929 = vpop.f32.mrf.mxu0
    %v1930 = vadd.f32 %v1217, %v1929
    %v1931 = vpop.f32.mrf.mxu0
    %v1932 = vadd.f32 %v1217, %v1931
    %1933 = vdwg.mxu0
    %1934 = vmatpush.bf16.msra.mxu0 %v1669
    %1935 = vmatpush.bf16.msra.mxu0 %v1665
    %1936 = vmatpush.bf16.msra.mxu0 %v1661
    %1937 = vmatpush.bf16.msra.mxu0 %v1657
    %1938 = vmatpush.bf16.msra.mxu0 %v1653
    %1939 = vmatpush.bf16.msra.mxu0 %v1649
    %1940 = vmatpush.bf16.msra.mxu0 %v1645
    %1941 = vmatpush.bf16.msra.mxu0 %v1641
    %1942 = vmatmul.bf16.gmra.mxu0 %v1081
    %v1943 = vpop.f32.mrf.mxu0
    %v1944 = vadd.f32 %v1930, %v1943
    %v1945 = vpop.f32.mrf.mxu0
    %v1946 = vadd.f32 %v1932, %v1945
    %1947 = vdwg.mxu0
    %1948 = vmatpush.bf16.msra.mxu0 %v1701
    %1949 = vmatpush.bf16.msra.mxu0 %v1697
    %1950 = vmatpush.bf16.msra.mxu0 %v1693
    %1951 = vmatpush.bf16.msra.mxu0 %v1689
    %1952 = vmatpush.bf16.msra.mxu0 %v1685
    %1953 = vmatpush.bf16.msra.mxu0 %v1681
    %1954 = vmatpush.bf16.msra.mxu0 %v1677
    %1955 = vmatpush.bf16.msra.mxu0 %v1673
    %1956 = vmatmul.bf16.gmra.mxu0 %v1082
    %v1957 = vpop.f32.mrf.mxu0
    %v1958 = vadd.f32 %v1944, %v1957
    %v1959 = vpop.f32.mrf.mxu0
    %v1960 = vadd.f32 %v1946, %v1959
    %1961 = vdwg.mxu0
    %1962 = vmatpush.bf16.msra.mxu0 %v1733
    %1963 = vmatpush.bf16.msra.mxu0 %v1729
    %1964 = vmatpush.bf16.msra.mxu0 %v1725
    %1965 = vmatpush.bf16.msra.mxu0 %v1721
    %1966 = vmatpush.bf16.msra.mxu0 %v1717
    %1967 = vmatpush.bf16.msra.mxu0 %v1713
    %1968 = vmatpush.bf16.msra.mxu0 %v1709
    %1969 = vmatpush.bf16.msra.mxu0 %v1705
    %1970 = vmatmul.bf16.gmra.mxu0 %v1083
    %v1971 = vpop.f32.mrf.mxu0
    %v1972 = vadd.f32 %v1958, %v1971
    %v1973 = vpop.f32.mrf.mxu0
    %v1974 = vadd.f32 %v1960, %v1973
    %1975 = vdwg.mxu0
    %1976 = vmatpush.bf16.msra.mxu0 %v1638
    %1977 = vmatpush.bf16.msra.mxu0 %v1634
    %1978 = vmatpush.bf16.msra.mxu0 %v1630
    %1979 = vmatpush.bf16.msra.mxu0 %v1626
    %1980 = vmatpush.bf16.msra.mxu0 %v1622
    %1981 = vmatpush.bf16.msra.mxu0 %v1618
    %1982 = vmatpush.bf16.msra.mxu0 %v1614
    %1983 = vmatpush.bf16.msra.mxu0 %v1610
    %1984 = vmatmul.bf16.gmra.mxu0 %v1080
    %v1985 = vpop.f32.mrf.mxu0
    %v1986 = vadd.f32 %v1218, %v1985
    %v1987 = vpop.f32.mrf.mxu0
    %v1988 = vadd.f32 %v1218, %v1987
    %1989 = vdwg.mxu0
    %1990 = vmatpush.bf16.msra.mxu0 %v1670
    %1991 = vmatpush.bf16.msra.mxu0 %v1666
    %1992 = vmatpush.bf16.msra.mxu0 %v1662
    %1993 = vmatpush.bf16.msra.mxu0 %v1658
    %1994 = vmatpush.bf16.msra.mxu0 %v1654
    %1995 = vmatpush.bf16.msra.mxu0 %v1650
    %1996 = vmatpush.bf16.msra.mxu0 %v1646
    %1997 = vmatpush.bf16.msra.mxu0 %v1642
    %1998 = vmatmul.bf16.gmra.mxu0 %v1081
    %v1999 = vpop.f32.mrf.mxu0
    %v2000 = vadd.f32 %v1986, %v1999
    %v2001 = vpop.f32.mrf.mxu0
    %v2002 = vadd.f32 %v1988, %v2001
    %2003 = vdwg.mxu0
    %2004 = vmatpush.bf16.msra.mxu0 %v1702
    %2005 = vmatpush.bf16.msra.mxu0 %v1698
    %2006 = vmatpush.bf16.msra.mxu0 %v1694
    %2007 = vmatpush.bf16.msra.mxu0 %v1690
    %2008 = vmatpush.bf16.msra.mxu0 %v1686
    %2009 = vmatpush.bf16.msra.mxu0 %v1682
    %2010 = vmatpush.bf16.msra.mxu0 %v1678
    %2011 = vmatpush.bf16.msra.mxu0 %v1674
    %2012 = vmatmul.bf16.gmra.mxu0 %v1082
    %v2013 = vpop.f32.mrf.mxu0
    %v2014 = vadd.f32 %v2000, %v2013
    %v2015 = vpop.f32.mrf.mxu0
    %v2016 = vadd.f32 %v2002, %v2015
    %2017 = vdwg.mxu0
    %2018 = vmatpush.bf16.msra.mxu0 %v1734
    %2019 = vmatpush.bf16.msra.mxu0 %v1730
    %2020 = vmatpush.bf16.msra.mxu0 %v1726
    %2021 = vmatpush.bf16.msra.mxu0 %v1722
    %2022 = vmatpush.bf16.msra.mxu0 %v1718
    %2023 = vmatpush.bf16.msra.mxu0 %v1714
    %2024 = vmatpush.bf16.msra.mxu0 %v1710
    %2025 = vmatpush.bf16.msra.mxu0 %v1706
    %2026 = vmatmul.bf16.gmra.mxu0 %v1083
    %v2027 = vpop.f32.mrf.mxu0
    %v2028 = vadd.f32 %v2014, %v2027
    %v2029 = vpop.f32.mrf.mxu0
    %v2030 = vadd.f32 %v2016, %v2029
    %2031 = vdwg.mxu0
    %2032 = vmatpush.bf16.msra.mxu0 %v1639
    %2033 = vmatpush.bf16.msra.mxu0 %v1635
    %2034 = vmatpush.bf16.msra.mxu0 %v1631
    %2035 = vmatpush.bf16.msra.mxu0 %v1627
    %2036 = vmatpush.bf16.msra.mxu0 %v1623
    %2037 = vmatpush.bf16.msra.mxu0 %v1619
    %2038 = vmatpush.bf16.msra.mxu0 %v1615
    %2039 = vmatpush.bf16.msra.mxu0 %v1611
    %2040 = vmatmul.bf16.gmra.mxu0 %v1080
    %v2041 = vpop.f32.mrf.mxu0
    %v2042 = vadd.f32 %v1219, %v2041
    %v2043 = vpop.f32.mrf.mxu0
    %v2044 = vadd.f32 %v1219, %v2043
    %2045 = vdwg.mxu0
    %2046 = vmatpush.bf16.msra.mxu0 %v1671
    %2047 = vmatpush.bf16.msra.mxu0 %v1667
    %2048 = vmatpush.bf16.msra.mxu0 %v1663
    %2049 = vmatpush.bf16.msra.mxu0 %v1659
    %2050 = vmatpush.bf16.msra.mxu0 %v1655
    %2051 = vmatpush.bf16.msra.mxu0 %v1651
    %2052 = vmatpush.bf16.msra.mxu0 %v1647
    %2053 = vmatpush.bf16.msra.mxu0 %v1643
    %2054 = vmatmul.bf16.gmra.mxu0 %v1081
    %v2055 = vpop.f32.mrf.mxu0
    %v2056 = vadd.f32 %v2042, %v2055
    %v2057 = vpop.f32.mrf.mxu0
    %v2058 = vadd.f32 %v2044, %v2057
    %2059 = vdwg.mxu0
    %2060 = vmatpush.bf16.msra.mxu0 %v1703
    %2061 = vmatpush.bf16.msra.mxu0 %v1699
    %2062 = vmatpush.bf16.msra.mxu0 %v1695
    %2063 = vmatpush.bf16.msra.mxu0 %v1691
    %2064 = vmatpush.bf16.msra.mxu0 %v1687
    %2065 = vmatpush.bf16.msra.mxu0 %v1683
    %2066 = vmatpush.bf16.msra.mxu0 %v1679
    %2067 = vmatpush.bf16.msra.mxu0 %v1675
    %2068 = vmatmul.bf16.gmra.mxu0 %v1082
    %v2069 = vpop.f32.mrf.mxu0
    %v2070 = vadd.f32 %v2056, %v2069
    %v2071 = vpop.f32.mrf.mxu0
    %v2072 = vadd.f32 %v2058, %v2071
    %2073 = vdwg.mxu0
    %2074 = vmatpush.bf16.msra.mxu0 %v1735
    %2075 = vmatpush.bf16.msra.mxu0 %v1731
    %2076 = vmatpush.bf16.msra.mxu0 %v1727
    %2077 = vmatpush.bf16.msra.mxu0 %v1723
    %2078 = vmatpush.bf16.msra.mxu0 %v1719
    %2079 = vmatpush.bf16.msra.mxu0 %v1715
    %2080 = vmatpush.bf16.msra.mxu0 %v1711
    %2081 = vmatpush.bf16.msra.mxu0 %v1707
    %2082 = vmatmul.bf16.gmra.mxu0 %v1083
    %v2083 = vpop.f32.mrf.mxu0
    %v2084 = vadd.f32 %v2070, %v2083
    %v2085 = vpop.f32.mrf.mxu0
    %v2086 = vadd.f32 %v2072, %v2085
    %2087 = vdwg.mxu0
    %v2088 = vmax.f32 %v1916, 0.0
    %v2089 = vmax.f32 %v1972, 0.0
    %v2090 = vmax.f32 %v2028, 0.0
    %v2091 = vmax.f32 %v2084, 0.0
    %v2092 = vmax.f32 %v1918, 0.0
    %v2093 = vmax.f32 %v1974, 0.0
    %v2094 = vmax.f32 %v2030, 0.0
    %v2095 = vmax.f32 %v2086, 0.0
    %v2096 = vpack.c.bf16 %v2092, %v2088
    %v2097 = vpack.c.bf16 %v2093, %v2089
    %v2098 = vpack.c.bf16 %v2094, %v2090
    %v2099 = vpack.c.bf16 %v2095, %v2091
    %s2100 = scalar_lea.vmem [#allocation2], 2048
    %v2101 = vld [vmem:[%s2100] sm:$0xff]
    %v2102 = vld [vmem:[%s2100 + $0x10] sm:$0xff]
    %v2103 = vld [vmem:[%s2100 + $0x20] sm:$0xff]
    %v2104 = vld [vmem:[%s2100 + $0x30] sm:$0xff]
    %v2105 = vld [vmem:[%s2100 + $0x40] sm:$0xff]
    %v2106 = vld [vmem:[%s2100 + $0x50] sm:$0xff]
    %v2107 = vld [vmem:[%s2100 + $0x60] sm:$0xff]
    %v2108 = vld [vmem:[%s2100 + $0x70] sm:$0xff]
    %v2109 = vld [vmem:[%s2100 + $0x80] sm:$0xff]
    %v2110 = vld [vmem:[%s2100 + $0x90] sm:$0xff]
    %v2111 = vld [vmem:[%s2100 + $0xa0] sm:$0xff]
    %v2112 = vld [vmem:[%s2100 + $0xb0] sm:$0xff]
    %v2113 = vld [vmem:[%s2100 + $0xc0] sm:$0xff]
    %v2114 = vld [vmem:[%s2100 + $0xd0] sm:$0xff]
    %v2115 = vld [vmem:[%s2100 + $0xe0] sm:$0xff]
    %v2116 = vld [vmem:[%s2100 + $0xf0] sm:$0xff]
    %v2117 = vld [vmem:[%s2100 + $0x100] sm:$0xff]
    %v2118 = vld [vmem:[%s2100 + $0x110] sm:$0xff]
    %v2119 = vld [vmem:[%s2100 + $0x120] sm:$0xff]
    %v2120 = vld [vmem:[%s2100 + $0x130] sm:$0xff]
    %v2121 = vld [vmem:[%s2100 + $0x140] sm:$0xff]
    %v2122 = vld [vmem:[%s2100 + $0x150] sm:$0xff]
    %v2123 = vld [vmem:[%s2100 + $0x160] sm:$0xff]
    %v2124 = vld [vmem:[%s2100 + $0x170] sm:$0xff]
    %v2125 = vld [vmem:[%s2100 + $0x180] sm:$0xff]
    %v2126 = vld [vmem:[%s2100 + $0x190] sm:$0xff]
    %v2127 = vld [vmem:[%s2100 + $0x1a0] sm:$0xff]
    %v2128 = vld [vmem:[%s2100 + $0x1b0] sm:$0xff]
    %v2129 = vld [vmem:[%s2100 + $0x1c0] sm:$0xff]
    %v2130 = vld [vmem:[%s2100 + $0x1d0] sm:$0xff]
    %v2131 = vld [vmem:[%s2100 + $0x1e0] sm:$0xff]
    %v2132 = vld [vmem:[%s2100 + $0x1f0] sm:$0xff]
    %v2133 = vld [vmem:[%s2100 + $0x200] sm:$0xff]
    %v2134 = vld [vmem:[%s2100 + $0x210] sm:$0xff]
    %v2135 = vld [vmem:[%s2100 + $0x220] sm:$0xff]
    %v2136 = vld [vmem:[%s2100 + $0x230] sm:$0xff]
    %v2137 = vld [vmem:[%s2100 + $0x240] sm:$0xff]
    %v2138 = vld [vmem:[%s2100 + $0x250] sm:$0xff]
    %v2139 = vld [vmem:[%s2100 + $0x260] sm:$0xff]
    %v2140 = vld [vmem:[%s2100 + $0x270] sm:$0xff]
    %v2141 = vld [vmem:[%s2100 + $0x280] sm:$0xff]
    %v2142 = vld [vmem:[%s2100 + $0x290] sm:$0xff]
    %v2143 = vld [vmem:[%s2100 + $0x2a0] sm:$0xff]
    %v2144 = vld [vmem:[%s2100 + $0x2b0] sm:$0xff]
    %v2145 = vld [vmem:[%s2100 + $0x2c0] sm:$0xff]
    %v2146 = vld [vmem:[%s2100 + $0x2d0] sm:$0xff]
    %v2147 = vld [vmem:[%s2100 + $0x2e0] sm:$0xff]
    %v2148 = vld [vmem:[%s2100 + $0x2f0] sm:$0xff]
    %v2149 = vld [vmem:[%s2100 + $0x300] sm:$0xff]
    %v2150 = vld [vmem:[%s2100 + $0x310] sm:$0xff]
    %v2151 = vld [vmem:[%s2100 + $0x320] sm:$0xff]
    %v2152 = vld [vmem:[%s2100 + $0x330] sm:$0xff]
    %v2153 = vld [vmem:[%s2100 + $0x340] sm:$0xff]
    %v2154 = vld [vmem:[%s2100 + $0x350] sm:$0xff]
    %v2155 = vld [vmem:[%s2100 + $0x360] sm:$0xff]
    %v2156 = vld [vmem:[%s2100 + $0x370] sm:$0xff]
    %v2157 = vld [vmem:[%s2100 + $0x380] sm:$0xff]
    %v2158 = vld [vmem:[%s2100 + $0x390] sm:$0xff]
    %v2159 = vld [vmem:[%s2100 + $0x3a0] sm:$0xff]
    %v2160 = vld [vmem:[%s2100 + $0x3b0] sm:$0xff]
    %v2161 = vld [vmem:[%s2100 + $0x3c0] sm:$0xff]
    %v2162 = vld [vmem:[%s2100 + $0x3d0] sm:$0xff]
    %v2163 = vld [vmem:[%s2100 + $0x3e0] sm:$0xff]
    %v2164 = vld [vmem:[%s2100 + $0x3f0] sm:$0xff]
    %s2165 = scalar_lea.vmem [#allocation4], 8
    %v2166 = vld [vmem:[%s2165] sm:$0x3]
    %v2168 = vperm.slane %v2166, 0
    %v2169 = vperm.slane %v2166, 1
    %v2236 = vunpack.c.l.b16 %v2101
    %v2237 = vunpack.c.h.b16 %v2101
    %v2238 = vunpack.c.l.b16 %v2102
    %v2239 = vunpack.c.h.b16 %v2102
    %v2240 = vunpack.c.l.b16 %v2103
    %v2241 = vunpack.c.h.b16 %v2103
    %v2242 = vunpack.c.l.b16 %v2104
    %v2243 = vunpack.c.h.b16 %v2104
    %v2244 = vunpack.c.l.b16 %v2105
    %v2245 = vunpack.c.h.b16 %v2105
    %v2246 = vunpack.c.l.b16 %v2106
    %v2247 = vunpack.c.h.b16 %v2106
    %v2248 = vunpack.c.l.b16 %v2107
    %v2249 = vunpack.c.h.b16 %v2107
    %v2250 = vunpack.c.l.b16 %v2108
    %v2251 = vunpack.c.h.b16 %v2108
    %v2252 = vunpack.c.l.b16 %v2109
    %v2253 = vunpack.c.h.b16 %v2109
    %v2254 = vunpack.c.l.b16 %v2110
    %v2255 = vunpack.c.h.b16 %v2110
    %v2256 = vunpack.c.l.b16 %v2111
    %v2257 = vunpack.c.h.b16 %v2111
    %v2258 = vunpack.c.l.b16 %v2112
    %v2259 = vunpack.c.h.b16 %v2112
    %v2260 = vunpack.c.l.b16 %v2113
    %v2261 = vunpack.c.h.b16 %v2113
    %v2262 = vunpack.c.l.b16 %v2114
    %v2263 = vunpack.c.h.b16 %v2114
    %v2264 = vunpack.c.l.b16 %v2115
    %v2265 = vunpack.c.h.b16 %v2115
    %v2266 = vunpack.c.l.b16 %v2116
    %v2267 = vunpack.c.h.b16 %v2116
    %v2268 = vunpack.c.l.b16 %v2117
    %v2269 = vunpack.c.h.b16 %v2117
    %v2270 = vunpack.c.l.b16 %v2118
    %v2271 = vunpack.c.h.b16 %v2118
    %v2272 = vunpack.c.l.b16 %v2119
    %v2273 = vunpack.c.h.b16 %v2119
    %v2274 = vunpack.c.l.b16 %v2120
    %v2275 = vunpack.c.h.b16 %v2120
    %v2276 = vunpack.c.l.b16 %v2121
    %v2277 = vunpack.c.h.b16 %v2121
    %v2278 = vunpack.c.l.b16 %v2122
    %v2279 = vunpack.c.h.b16 %v2122
    %v2280 = vunpack.c.l.b16 %v2123
    %v2281 = vunpack.c.h.b16 %v2123
    %v2282 = vunpack.c.l.b16 %v2124
    %v2283 = vunpack.c.h.b16 %v2124
    %v2284 = vunpack.c.l.b16 %v2125
    %v2285 = vunpack.c.h.b16 %v2125
    %v2286 = vunpack.c.l.b16 %v2126
    %v2287 = vunpack.c.h.b16 %v2126
    %v2288 = vunpack.c.l.b16 %v2127
    %v2289 = vunpack.c.h.b16 %v2127
    %v2290 = vunpack.c.l.b16 %v2128
    %v2291 = vunpack.c.h.b16 %v2128
    %v2292 = vunpack.c.l.b16 %v2129
    %v2293 = vunpack.c.h.b16 %v2129
    %v2294 = vunpack.c.l.b16 %v2130
    %v2295 = vunpack.c.h.b16 %v2130
    %v2296 = vunpack.c.l.b16 %v2131
    %v2297 = vunpack.c.h.b16 %v2131
    %v2298 = vunpack.c.l.b16 %v2132
    %v2299 = vunpack.c.h.b16 %v2132
    %v2300 = vunpack.c.l.b16 %v2133
    %v2301 = vunpack.c.h.b16 %v2133
    %v2302 = vunpack.c.l.b16 %v2134
    %v2303 = vunpack.c.h.b16 %v2134
    %v2304 = vunpack.c.l.b16 %v2135
    %v2305 = vunpack.c.h.b16 %v2135
    %v2306 = vunpack.c.l.b16 %v2136
    %v2307 = vunpack.c.h.b16 %v2136
    %v2308 = vunpack.c.l.b16 %v2137
    %v2309 = vunpack.c.h.b16 %v2137
    %v2310 = vunpack.c.l.b16 %v2138
    %v2311 = vunpack.c.h.b16 %v2138
    %v2312 = vunpack.c.l.b16 %v2139
    %v2313 = vunpack.c.h.b16 %v2139
    %v2314 = vunpack.c.l.b16 %v2140
    %v2315 = vunpack.c.h.b16 %v2140
    %v2316 = vunpack.c.l.b16 %v2141
    %v2317 = vunpack.c.h.b16 %v2141
    %v2318 = vunpack.c.l.b16 %v2142
    %v2319 = vunpack.c.h.b16 %v2142
    %v2320 = vunpack.c.l.b16 %v2143
    %v2321 = vunpack.c.h.b16 %v2143
    %v2322 = vunpack.c.l.b16 %v2144
    %v2323 = vunpack.c.h.b16 %v2144
    %v2324 = vunpack.c.l.b16 %v2145
    %v2325 = vunpack.c.h.b16 %v2145
    %v2326 = vunpack.c.l.b16 %v2146
    %v2327 = vunpack.c.h.b16 %v2146
    %v2328 = vunpack.c.l.b16 %v2147
    %v2329 = vunpack.c.h.b16 %v2147
    %v2330 = vunpack.c.l.b16 %v2148
    %v2331 = vunpack.c.h.b16 %v2148
    %v2332 = vunpack.c.l.b16 %v2149
    %v2333 = vunpack.c.h.b16 %v2149
    %v2334 = vunpack.c.l.b16 %v2150
    %v2335 = vunpack.c.h.b16 %v2150
    %v2336 = vunpack.c.l.b16 %v2151
    %v2337 = vunpack.c.h.b16 %v2151
    %v2338 = vunpack.c.l.b16 %v2152
    %v2339 = vunpack.c.h.b16 %v2152
    %v2340 = vunpack.c.l.b16 %v2153
    %v2341 = vunpack.c.h.b16 %v2153
    %v2342 = vunpack.c.l.b16 %v2154
    %v2343 = vunpack.c.h.b16 %v2154
    %v2344 = vunpack.c.l.b16 %v2155
    %v2345 = vunpack.c.h.b16 %v2155
    %v2346 = vunpack.c.l.b16 %v2156
    %v2347 = vunpack.c.h.b16 %v2156
    %v2348 = vunpack.c.l.b16 %v2157
    %v2349 = vunpack.c.h.b16 %v2157
    %v2350 = vunpack.c.l.b16 %v2158
    %v2351 = vunpack.c.h.b16 %v2158
    %v2352 = vunpack.c.l.b16 %v2159
    %v2353 = vunpack.c.h.b16 %v2159
    %v2354 = vunpack.c.l.b16 %v2160
    %v2355 = vunpack.c.h.b16 %v2160
    %v2356 = vunpack.c.l.b16 %v2161
    %v2357 = vunpack.c.h.b16 %v2161
    %v2358 = vunpack.c.l.b16 %v2162
    %v2359 = vunpack.c.h.b16 %v2162
    %v2360 = vunpack.c.l.b16 %v2163
    %v2361 = vunpack.c.h.b16 %v2163
    %v2362 = vunpack.c.l.b16 %v2164
    %v2363 = vunpack.c.h.b16 %v2164
    %v2364 = vpack.c.b16 %v2238, %v2236
    %v2365 = vpack.c.b16 %v2239, %v2237
    %v2366 = vpack.c.b16 %v2242, %v2240
    %v2367 = vpack.c.b16 %v2243, %v2241
    %v2368 = vpack.c.b16 %v2246, %v2244
    %v2369 = vpack.c.b16 %v2247, %v2245
    %v2370 = vpack.c.b16 %v2250, %v2248
    %v2371 = vpack.c.b16 %v2251, %v2249
    %v2372 = vpack.c.b16 %v2254, %v2252
    %v2373 = vpack.c.b16 %v2255, %v2253
    %v2374 = vpack.c.b16 %v2258, %v2256
    %v2375 = vpack.c.b16 %v2259, %v2257
    %v2376 = vpack.c.b16 %v2262, %v2260
    %v2377 = vpack.c.b16 %v2263, %v2261
    %v2378 = vpack.c.b16 %v2266, %v2264
    %v2379 = vpack.c.b16 %v2267, %v2265
    %v2380 = vpack.c.b16 %v2270, %v2268
    %v2381 = vpack.c.b16 %v2271, %v2269
    %v2382 = vpack.c.b16 %v2274, %v2272
    %v2383 = vpack.c.b16 %v2275, %v2273
    %v2384 = vpack.c.b16 %v2278, %v2276
    %v2385 = vpack.c.b16 %v2279, %v2277
    %v2386 = vpack.c.b16 %v2282, %v2280
    %v2387 = vpack.c.b16 %v2283, %v2281
    %v2388 = vpack.c.b16 %v2286, %v2284
    %v2389 = vpack.c.b16 %v2287, %v2285
    %v2390 = vpack.c.b16 %v2290, %v2288
    %v2391 = vpack.c.b16 %v2291, %v2289
    %v2392 = vpack.c.b16 %v2294, %v2292
    %v2393 = vpack.c.b16 %v2295, %v2293
    %v2394 = vpack.c.b16 %v2298, %v2296
    %v2395 = vpack.c.b16 %v2299, %v2297
    %v2396 = vpack.c.b16 %v2302, %v2300
    %v2397 = vpack.c.b16 %v2303, %v2301
    %v2398 = vpack.c.b16 %v2306, %v2304
    %v2399 = vpack.c.b16 %v2307, %v2305
    %v2400 = vpack.c.b16 %v2310, %v2308
    %v2401 = vpack.c.b16 %v2311, %v2309
    %v2402 = vpack.c.b16 %v2314, %v2312
    %v2403 = vpack.c.b16 %v2315, %v2313
    %v2404 = vpack.c.b16 %v2318, %v2316
    %v2405 = vpack.c.b16 %v2319, %v2317
    %v2406 = vpack.c.b16 %v2322, %v2320
    %v2407 = vpack.c.b16 %v2323, %v2321
    %v2408 = vpack.c.b16 %v2326, %v2324
    %v2409 = vpack.c.b16 %v2327, %v2325
    %v2410 = vpack.c.b16 %v2330, %v2328
    %v2411 = vpack.c.b16 %v2331, %v2329
    %v2412 = vpack.c.b16 %v2334, %v2332
    %v2413 = vpack.c.b16 %v2335, %v2333
    %v2414 = vpack.c.b16 %v2338, %v2336
    %v2415 = vpack.c.b16 %v2339, %v2337
    %v2416 = vpack.c.b16 %v2342, %v2340
    %v2417 = vpack.c.b16 %v2343, %v2341
    %v2418 = vpack.c.b16 %v2346, %v2344
    %v2419 = vpack.c.b16 %v2347, %v2345
    %v2420 = vpack.c.b16 %v2350, %v2348
    %v2421 = vpack.c.b16 %v2351, %v2349
    %v2422 = vpack.c.b16 %v2354, %v2352
    %v2423 = vpack.c.b16 %v2355, %v2353
    %v2424 = vpack.c.b16 %v2358, %v2356
    %v2425 = vpack.c.b16 %v2359, %v2357
    %v2426 = vpack.c.b16 %v2362, %v2360
    %v2427 = vpack.c.b16 %v2363, %v2361
    %2492 = vmatpush.bf16.msra.mxu0 %v2378
    %2493 = vmatpush.bf16.msra.mxu0 %v2376
    %2494 = vmatpush.bf16.msra.mxu0 %v2374
    %2495 = vmatpush.bf16.msra.mxu0 %v2372
    %2496 = vmatpush.bf16.msra.mxu0 %v2370
    %2497 = vmatpush.bf16.msra.mxu0 %v2368
    %2498 = vmatpush.bf16.msra.mxu0 %v2366
    %2499 = vmatpush.bf16.msra.mxu0 %v2364
    %2500 = vmatmul.bf16.gmra.mxu0 %v2096
    %v2501 = vpop.f32.mrf.mxu0
    %v2502 = vadd.f32 %v2168, %v2501
    %v2503 = vpop.f32.mrf.mxu0
    %v2504 = vadd.f32 %v2168, %v2503
    %2505 = vdwg.mxu0
    %2506 = vmatpush.bf16.msra.mxu0 %v2394
    %2507 = vmatpush.bf16.msra.mxu0 %v2392
    %2508 = vmatpush.bf16.msra.mxu0 %v2390
    %2509 = vmatpush.bf16.msra.mxu0 %v2388
    %2510 = vmatpush.bf16.msra.mxu0 %v2386
    %2511 = vmatpush.bf16.msra.mxu0 %v2384
    %2512 = vmatpush.bf16.msra.mxu0 %v2382
    %2513 = vmatpush.bf16.msra.mxu0 %v2380
    %2514 = vmatmul.bf16.gmra.mxu0 %v2097
    %v2515 = vpop.f32.mrf.mxu0
    %v2516 = vadd.f32 %v2502, %v2515
    %v2517 = vpop.f32.mrf.mxu0
    %v2518 = vadd.f32 %v2504, %v2517
    %2519 = vdwg.mxu0
    %2520 = vmatpush.bf16.msra.mxu0 %v2410
    %2521 = vmatpush.bf16.msra.mxu0 %v2408
    %2522 = vmatpush.bf16.msra.mxu0 %v2406
    %2523 = vmatpush.bf16.msra.mxu0 %v2404
    %2524 = vmatpush.bf16.msra.mxu0 %v2402
    %2525 = vmatpush.bf16.msra.mxu0 %v2400
    %2526 = vmatpush.bf16.msra.mxu0 %v2398
    %2527 = vmatpush.bf16.msra.mxu0 %v2396
    %2528 = vmatmul.bf16.gmra.mxu0 %v2098
    %v2529 = vpop.f32.mrf.mxu0
    %v2530 = vadd.f32 %v2516, %v2529
    %v2531 = vpop.f32.mrf.mxu0
    %v2532 = vadd.f32 %v2518, %v2531
    %2533 = vdwg.mxu0
    %2534 = vmatpush.bf16.msra.mxu0 %v2426
    %2535 = vmatpush.bf16.msra.mxu0 %v2424
    %2536 = vmatpush.bf16.msra.mxu0 %v2422
    %2537 = vmatpush.bf16.msra.mxu0 %v2420
    %2538 = vmatpush.bf16.msra.mxu0 %v2418
    %2539 = vmatpush.bf16.msra.mxu0 %v2416
    %2540 = vmatpush.bf16.msra.mxu0 %v2414
    %2541 = vmatpush.bf16.msra.mxu0 %v2412
    %2542 = vmatmul.bf16.gmra.mxu0 %v2099
    %v2543 = vpop.f32.mrf.mxu0
    %v2544 = vadd.f32 %v2530, %v2543
    %v2545 = vpop.f32.mrf.mxu0
    %v2546 = vadd.f32 %v2532, %v2545
    %2547 = vdwg.mxu0
    %2548 = vmatpush.bf16.msra.mxu0 %v2379
    %2549 = vmatpush.bf16.msra.mxu0 %v2377
    %2550 = vmatpush.bf16.msra.mxu0 %v2375
    %2551 = vmatpush.bf16.msra.mxu0 %v2373
    %2552 = vmatpush.bf16.msra.mxu0 %v2371
    %2553 = vmatpush.bf16.msra.mxu0 %v2369
    %2554 = vmatpush.bf16.msra.mxu0 %v2367
    %2555 = vmatpush.bf16.msra.mxu0 %v2365
    %2556 = vmatmul.bf16.gmra.mxu0 %v2096
    %v2557 = vpop.f32.mrf.mxu0
    %v2558 = vadd.f32 %v2169, %v2557
    %v2559 = vpop.f32.mrf.mxu0
    %v2560 = vadd.f32 %v2169, %v2559
    %2561 = vdwg.mxu0
    %2562 = vmatpush.bf16.msra.mxu0 %v2395
    %2563 = vmatpush.bf16.msra.mxu0 %v2393
    %2564 = vmatpush.bf16.msra.mxu0 %v2391
    %2565 = vmatpush.bf16.msra.mxu0 %v2389
    %2566 = vmatpush.bf16.msra.mxu0 %v2387
    %2567 = vmatpush.bf16.msra.mxu0 %v2385
    %2568 = vmatpush.bf16.msra.mxu0 %v2383
    %2569 = vmatpush.bf16.msra.mxu0 %v2381
    %2570 = vmatmul.bf16.gmra.mxu0 %v2097
    %v2571 = vpop.f32.mrf.mxu0
    %v2572 = vadd.f32 %v2558, %v2571
    %v2573 = vpop.f32.mrf.mxu0
    %v2574 = vadd.f32 %v2560, %v2573
    %2575 = vdwg.mxu0
    %2576 = vmatpush.bf16.msra.mxu0 %v2411
    %2577 = vmatpush.bf16.msra.mxu0 %v2409
    %2578 = vmatpush.bf16.msra.mxu0 %v2407
    %2579 = vmatpush.bf16.msra.mxu0 %v2405
    %2580 = vmatpush.bf16.msra.mxu0 %v2403
    %2581 = vmatpush.bf16.msra.mxu0 %v2401
    %2582 = vmatpush.bf16.msra.mxu0 %v2399
    %2583 = vmatpush.bf16.msra.mxu0 %v2397
    %2584 = vmatmul.bf16.gmra.mxu0 %v2098
    %v2585 = vpop.f32.mrf.mxu0
    %v2586 = vadd.f32 %v2572, %v2585
    %v2587 = vpop.f32.mrf.mxu0
    %v2588 = vadd.f32 %v2574, %v2587
    %2589 = vdwg.mxu0
    %2590 = vmatpush.bf16.msra.mxu0 %v2427
    %2591 = vmatpush.bf16.msra.mxu0 %v2425
    %2592 = vmatpush.bf16.msra.mxu0 %v2423
    %2593 = vmatpush.bf16.msra.mxu0 %v2421
    %2594 = vmatpush.bf16.msra.mxu0 %v2419
    %2595 = vmatpush.bf16.msra.mxu0 %v2417
    %2596 = vmatpush.bf16.msra.mxu0 %v2415
    %2597 = vmatpush.bf16.msra.mxu0 %v2413
    %2598 = vmatmul.bf16.gmra.mxu0 %v2099
    %v2599 = vpop.f32.mrf.mxu0
    %v2600 = vadd.f32 %v2586, %v2599
    %v2601 = vpop.f32.mrf.mxu0
    %v2602 = vadd.f32 %v2588, %v2601
    %2603 = vdwg.mxu0
    %v2604 = vmax.f32 %v2544, 0.0
    %v2605 = vmax.f32 %v2600, 0.0
    %v2606 = vmax.f32 %v2546, 0.0
    %v2607 = vmax.f32 %v2602, 0.0
    %v2608 = vpack.c.bf16 %v2606, %v2604
    %v2609 = vpack.c.bf16 %v2607, %v2605
    %s2610 = scalar_lea.vmem [#allocation2], 3072
    %v2611 = vld [vmem:[%s2610] sm:$0xf]
    %v2612 = vld [vmem:[%s2610 + $0x10] sm:$0xf]
    %v2613 = vld [vmem:[%s2610 + $0x20] sm:$0xf]
    %v2614 = vld [vmem:[%s2610 + $0x30] sm:$0xf]
    %v2615 = vld [vmem:[%s2610 + $0x40] sm:$0xf]
    %v2616 = vld [vmem:[%s2610 + $0x50] sm:$0xf]
    %v2617 = vld [vmem:[%s2610 + $0x60] sm:$0xf]
    %v2618 = vld [vmem:[%s2610 + $0x70] sm:$0xf]
    %v2619 = vld [vmem:[%s2610 + $0x80] sm:$0xf]
    %v2620 = vld [vmem:[%s2610 + $0x90] sm:$0xf]
    %v2621 = vld [vmem:[%s2610 + $0xa0] sm:$0xf]
    %v2622 = vld [vmem:[%s2610 + $0xb0] sm:$0xf]
    %v2623 = vld [vmem:[%s2610 + $0xc0] sm:$0xf]
    %v2624 = vld [vmem:[%s2610 + $0xd0] sm:$0xf]
    %v2625 = vld [vmem:[%s2610 + $0xe0] sm:$0xf]
    %v2626 = vld [vmem:[%s2610 + $0xf0] sm:$0xf]
    %v2627 = vld [vmem:[%s2610 + $0x100] sm:$0xf]
    %v2628 = vld [vmem:[%s2610 + $0x110] sm:$0xf]
    %v2629 = vld [vmem:[%s2610 + $0x120] sm:$0xf]
    %v2630 = vld [vmem:[%s2610 + $0x130] sm:$0xf]
    %v2631 = vld [vmem:[%s2610 + $0x140] sm:$0xf]
    %v2632 = vld [vmem:[%s2610 + $0x150] sm:$0xf]
    %v2633 = vld [vmem:[%s2610 + $0x160] sm:$0xf]
    %v2634 = vld [vmem:[%s2610 + $0x170] sm:$0xf]
    %v2635 = vld [vmem:[%s2610 + $0x180] sm:$0xf]
    %v2636 = vld [vmem:[%s2610 + $0x190] sm:$0xf]
    %v2637 = vld [vmem:[%s2610 + $0x1a0] sm:$0xf]
    %v2638 = vld [vmem:[%s2610 + $0x1b0] sm:$0xf]
    %v2639 = vld [vmem:[%s2610 + $0x1c0] sm:$0xf]
    %v2640 = vld [vmem:[%s2610 + $0x1d0] sm:$0xf]
    %v2641 = vld [vmem:[%s2610 + $0x1e0] sm:$0xf]
    %v2642 = vld [vmem:[%s2610 + $0x1f0] sm:$0xf]
    %s2643 = scalar_lea.vmem [#allocation4], 12
    %v2644 = vld [vmem:[%s2643] sm:$0x1]
    %v2646 = vperm.slane %v2644, 0
    %v2680 = vunpack.c.l.b16 %v2611
    %v2681 = vunpack.c.l.b16 %v2612
    %v2682 = vunpack.c.l.b16 %v2613
    %v2683 = vunpack.c.l.b16 %v2614
    %v2684 = vunpack.c.l.b16 %v2615
    %v2685 = vunpack.c.l.b16 %v2616
    %v2686 = vunpack.c.l.b16 %v2617
    %v2687 = vunpack.c.l.b16 %v2618
    %v2688 = vunpack.c.l.b16 %v2619
    %v2689 = vunpack.c.l.b16 %v2620
    %v2690 = vunpack.c.l.b16 %v2621
    %v2691 = vunpack.c.l.b16 %v2622
    %v2692 = vunpack.c.l.b16 %v2623
    %v2693 = vunpack.c.l.b16 %v2624
    %v2694 = vunpack.c.l.b16 %v2625
    %v2695 = vunpack.c.l.b16 %v2626
    %v2696 = vunpack.c.l.b16 %v2627
    %v2697 = vunpack.c.l.b16 %v2628
    %v2698 = vunpack.c.l.b16 %v2629
    %v2699 = vunpack.c.l.b16 %v2630
    %v2700 = vunpack.c.l.b16 %v2631
    %v2701 = vunpack.c.l.b16 %v2632
    %v2702 = vunpack.c.l.b16 %v2633
    %v2703 = vunpack.c.l.b16 %v2634
    %v2704 = vunpack.c.l.b16 %v2635
    %v2705 = vunpack.c.l.b16 %v2636
    %v2706 = vunpack.c.l.b16 %v2637
    %v2707 = vunpack.c.l.b16 %v2638
    %v2708 = vunpack.c.l.b16 %v2639
    %v2709 = vunpack.c.l.b16 %v2640
    %v2710 = vunpack.c.l.b16 %v2641
    %v2711 = vunpack.c.l.b16 %v2642
    %v2712 = vpack.c.b16 %v2681, %v2680
    %v2713 = vpack.c.b16 %v2683, %v2682
    %v2714 = vpack.c.b16 %v2685, %v2684
    %v2715 = vpack.c.b16 %v2687, %v2686
    %v2716 = vpack.c.b16 %v2689, %v2688
    %v2717 = vpack.c.b16 %v2691, %v2690
    %v2718 = vpack.c.b16 %v2693, %v2692
    %v2719 = vpack.c.b16 %v2695, %v2694
    %v2720 = vpack.c.b16 %v2697, %v2696
    %v2721 = vpack.c.b16 %v2699, %v2698
    %v2722 = vpack.c.b16 %v2701, %v2700
    %v2723 = vpack.c.b16 %v2703, %v2702
    %v2724 = vpack.c.b16 %v2705, %v2704
    %v2725 = vpack.c.b16 %v2707, %v2706
    %v2726 = vpack.c.b16 %v2709, %v2708
    %v2727 = vpack.c.b16 %v2711, %v2710
    %2744 = vmatpush.bf16.msra.mxu0 %v2719
    %2745 = vmatpush.bf16.msra.mxu0 %v2718
    %2746 = vmatpush.bf16.msra.mxu0 %v2717
    %2747 = vmatpush.bf16.msra.mxu0 %v2716
    %2748 = vmatpush.bf16.msra.mxu0 %v2715
    %2749 = vmatpush.bf16.msra.mxu0 %v2714
    %2750 = vmatpush.bf16.msra.mxu0 %v2713
    %2751 = vmatpush.bf16.msra.mxu0 %v2712
    %2752 = vmatmul.bf16.gmra.mxu0 %v2608
    %v2753 = vpop.f32.mrf.mxu0
    %v2754 = vadd.f32 %v2646, %v2753
    %v2755 = vpop.f32.mrf.mxu0
    %v2756 = vadd.f32 %v2646, %v2755
    %2757 = vdwg.mxu0
    %2758 = vmatpush.bf16.msra.mxu0 %v2727
    %2759 = vmatpush.bf16.msra.mxu0 %v2726
    %2760 = vmatpush.bf16.msra.mxu0 %v2725
    %2761 = vmatpush.bf16.msra.mxu0 %v2724
    %2762 = vmatpush.bf16.msra.mxu0 %v2723
    %2763 = vmatpush.bf16.msra.mxu0 %v2722
    %2764 = vmatpush.bf16.msra.mxu0 %v2721
    %2765 = vmatpush.bf16.msra.mxu0 %v2720
    %2766 = vmatmul.bf16.gmra.mxu0 %v2609
    %v2767 = vpop.f32.mrf.mxu0
    %v2768 = vadd.f32 %v2754, %v2767
    %v2769 = vpop.f32.mrf.mxu0
    %v2770 = vadd.f32 %v2756, %v2769
    %2771 = vdwg.mxu0
    %v2772 = vpack.c.bf16 %v2770, %v2768
    %s2773 = scalar_lea.vmem [#allocation2], 4096
    %v2774 = vld [vmem:[%s2773] sm:$0xff]
    %v2775 = vld [vmem:[%s2773 + $0x10] sm:$0xff]
    %v2776 = vld [vmem:[%s2773 + $0x20] sm:$0xff]
    %v2777 = vld [vmem:[%s2773 + $0x30] sm:$0xff]
    %v2778 = vld [vmem:[%s2773 + $0x40] sm:$0xff]
    %v2779 = vld [vmem:[%s2773 + $0x50] sm:$0xff]
    %v2780 = vld [vmem:[%s2773 + $0x60] sm:$0xff]
    %v2781 = vld [vmem:[%s2773 + $0x70] sm:$0xff]
    %v2782 = vld [vmem:[%s2773 + $0x80] sm:$0xff]
    %v2783 = vld [vmem:[%s2773 + $0x90] sm:$0xff]
    %v2784 = vld [vmem:[%s2773 + $0xa0] sm:$0xff]
    %v2785 = vld [vmem:[%s2773 + $0xb0] sm:$0xff]
    %v2786 = vld [vmem:[%s2773 + $0xc0] sm:$0xff]
    %v2787 = vld [vmem:[%s2773 + $0xd0] sm:$0xff]
    %v2788 = vld [vmem:[%s2773 + $0xe0] sm:$0xff]
    %v2789 = vld [vmem:[%s2773 + $0xf0] sm:$0xff]
    %s2790 = scalar_lea.vmem [#allocation4], 16
    %v2791 = vld [vmem:[%s2790] sm:$0x3]
    %v2793 = vperm.slane %v2791, 0
    %v2794 = vperm.slane %v2791, 1
    %v2813 = vunpack.c.l.b16 %v2774
    %v2814 = vunpack.c.h.b16 %v2774
    %v2815 = vunpack.c.l.b16 %v2775
    %v2816 = vunpack.c.h.b16 %v2775
    %v2817 = vunpack.c.l.b16 %v2776
    %v2818 = vunpack.c.h.b16 %v2776
    %v2819 = vunpack.c.l.b16 %v2777
    %v2820 = vunpack.c.h.b16 %v2777
    %v2821 = vunpack.c.l.b16 %v2778
    %v2822 = vunpack.c.h.b16 %v2778
    %v2823 = vunpack.c.l.b16 %v2779
    %v2824 = vunpack.c.h.b16 %v2779
    %v2825 = vunpack.c.l.b16 %v2780
    %v2826 = vunpack.c.h.b16 %v2780
    %v2827 = vunpack.c.l.b16 %v2781
    %v2828 = vunpack.c.h.b16 %v2781
    %v2829 = vunpack.c.l.b16 %v2782
    %v2830 = vunpack.c.h.b16 %v2782
    %v2831 = vunpack.c.l.b16 %v2783
    %v2832 = vunpack.c.h.b16 %v2783
    %v2833 = vunpack.c.l.b16 %v2784
    %v2834 = vunpack.c.h.b16 %v2784
    %v2835 = vunpack.c.l.b16 %v2785
    %v2836 = vunpack.c.h.b16 %v2785
    %v2837 = vunpack.c.l.b16 %v2786
    %v2838 = vunpack.c.h.b16 %v2786
    %v2839 = vunpack.c.l.b16 %v2787
    %v2840 = vunpack.c.h.b16 %v2787
    %v2841 = vunpack.c.l.b16 %v2788
    %v2842 = vunpack.c.h.b16 %v2788
    %v2843 = vunpack.c.l.b16 %v2789
    %v2844 = vunpack.c.h.b16 %v2789
    %v2845 = vpack.c.b16 %v2815, %v2813
    %v2846 = vpack.c.b16 %v2816, %v2814
    %v2847 = vpack.c.b16 %v2819, %v2817
    %v2848 = vpack.c.b16 %v2820, %v2818
    %v2849 = vpack.c.b16 %v2823, %v2821
    %v2850 = vpack.c.b16 %v2824, %v2822
    %v2851 = vpack.c.b16 %v2827, %v2825
    %v2852 = vpack.c.b16 %v2828, %v2826
    %v2853 = vpack.c.b16 %v2831, %v2829
    %v2854 = vpack.c.b16 %v2832, %v2830
    %v2855 = vpack.c.b16 %v2835, %v2833
    %v2856 = vpack.c.b16 %v2836, %v2834
    %v2857 = vpack.c.b16 %v2839, %v2837
    %v2858 = vpack.c.b16 %v2840, %v2838
    %v2859 = vpack.c.b16 %v2843, %v2841
    %v2860 = vpack.c.b16 %v2844, %v2842
    %2877 = vmatpush.bf16.msra.mxu0 %v2859
    %2878 = vmatpush.bf16.msra.mxu0 %v2857
    %2879 = vmatpush.bf16.msra.mxu0 %v2855
    %2880 = vmatpush.bf16.msra.mxu0 %v2853
    %2881 = vmatpush.bf16.msra.mxu0 %v2851
    %2882 = vmatpush.bf16.msra.mxu0 %v2849
    %2883 = vmatpush.bf16.msra.mxu0 %v2847
    %2884 = vmatpush.bf16.msra.mxu0 %v2845
    %2885 = vmatmul.bf16.gmra.mxu0 %v2772
    %v2886 = vpop.f32.mrf.mxu0
    %v2887 = vadd.f32 %v2793, %v2886
    %v2888 = vpop.f32.mrf.mxu0
    %v2889 = vadd.f32 %v2793, %v2888
    %2890 = vdwg.mxu0
    %2891 = vmatpush.bf16.msra.mxu0 %v2860
    %2892 = vmatpush.bf16.msra.mxu0 %v2858
    %2893 = vmatpush.bf16.msra.mxu0 %v2856
    %2894 = vmatpush.bf16.msra.mxu0 %v2854
    %2895 = vmatpush.bf16.msra.mxu0 %v2852
    %2896 = vmatpush.bf16.msra.mxu0 %v2850
    %2897 = vmatpush.bf16.msra.mxu0 %v2848
    %2898 = vmatpush.bf16.msra.mxu0 %v2846
    %2899 = vmatmul.bf16.gmra.mxu0 %v2772
    %v2900 = vpop.f32.mrf.mxu0
    %v2901 = vadd.f32 %v2794, %v2900
    %v2902 = vpop.f32.mrf.mxu0
    %v2903 = vadd.f32 %v2794, %v2902
    %2904 = vdwg.mxu0
    %v2905 = vmax.f32 %v2887, 0.0
    %v2906 = vmax.f32 %v2901, 0.0
    %v2907 = vmax.f32 %v2889, 0.0
    %v2908 = vmax.f32 %v2903, 0.0
    %v2909 = vpack.c.bf16 %v2907, %v2905
    %v2910 = vpack.c.bf16 %v2908, %v2906
    %s2911 = scalar_lea.vmem [#allocation2], 5120
    %v2912 = vld [vmem:[%s2911] sm:$0xff]
    %v2913 = vld [vmem:[%s2911 + $0x8] sm:$0xff]
    %v2914 = vld [vmem:[%s2911 + $0x10] sm:$0xff]
    %v2915 = vld [vmem:[%s2911 + $0x18] sm:$0xff]
    %v2916 = vld [vmem:[%s2911 + $0x20] sm:$0xff]
    %v2917 = vld [vmem:[%s2911 + $0x28] sm:$0xff]
    %v2918 = vld [vmem:[%s2911 + $0x30] sm:$0xff]
    %v2919 = vld [vmem:[%s2911 + $0x38] sm:$0xff]
    %v2920 = vld [vmem:[%s2911 + $0x40] sm:$0xff]
    %v2921 = vld [vmem:[%s2911 + $0x48] sm:$0xff]
    %v2922 = vld [vmem:[%s2911 + $0x50] sm:$0xff]
    %v2923 = vld [vmem:[%s2911 + $0x58] sm:$0xff]
    %v2924 = vld [vmem:[%s2911 + $0x60] sm:$0xff]
    %v2925 = vld [vmem:[%s2911 + $0x68] sm:$0xff]
    %v2926 = vld [vmem:[%s2911 + $0x70] sm:$0xff]
    %v2927 = vld [vmem:[%s2911 + $0x78] sm:$0xff]
    %v2928 = vld [vmem:[%s2911 + $0x80] sm:$0xff]
    %v2929 = vld [vmem:[%s2911 + $0x88] sm:$0xff]
    %v2930 = vld [vmem:[%s2911 + $0x90] sm:$0xff]
    %v2931 = vld [vmem:[%s2911 + $0x98] sm:$0xff]
    %v2932 = vld [vmem:[%s2911 + $0xa0] sm:$0xff]
    %v2933 = vld [vmem:[%s2911 + $0xa8] sm:$0xff]
    %v2934 = vld [vmem:[%s2911 + $0xb0] sm:$0xff]
    %v2935 = vld [vmem:[%s2911 + $0xb8] sm:$0xff]
    %v2936 = vld [vmem:[%s2911 + $0xc0] sm:$0xff]
    %v2937 = vld [vmem:[%s2911 + $0xc8] sm:$0xff]
    %v2938 = vld [vmem:[%s2911 + $0xd0] sm:$0xff]
    %v2939 = vld [vmem:[%s2911 + $0xd8] sm:$0xff]
    %v2940 = vld [vmem:[%s2911 + $0xe0] sm:$0xff]
    %v2941 = vld [vmem:[%s2911 + $0xe8] sm:$0xff]
    %v2942 = vld [vmem:[%s2911 + $0xf0] sm:$0xff]
    %v2943 = vld [vmem:[%s2911 + $0xf8] sm:$0xff]
    %v2944 = vld [vmem:[%s2911 + $0x100] sm:$0xff]
    %v2945 = vld [vmem:[%s2911 + $0x108] sm:$0xff]
    %v2946 = vld [vmem:[%s2911 + $0x110] sm:$0xff]
    %v2947 = vld [vmem:[%s2911 + $0x118] sm:$0xff]
    %v2948 = vld [vmem:[%s2911 + $0x120] sm:$0xff]
    %v2949 = vld [vmem:[%s2911 + $0x128] sm:$0xff]
    %v2950 = vld [vmem:[%s2911 + $0x130] sm:$0xff]
    %v2951 = vld [vmem:[%s2911 + $0x138] sm:$0xff]
    %v2952 = vld [vmem:[%s2911 + $0x140] sm:$0xff]
    %v2953 = vld [vmem:[%s2911 + $0x148] sm:$0xff]
    %v2954 = vld [vmem:[%s2911 + $0x150] sm:$0xff]
    %v2955 = vld [vmem:[%s2911 + $0x158] sm:$0xff]
    %v2956 = vld [vmem:[%s2911 + $0x160] sm:$0xff]
    %v2957 = vld [vmem:[%s2911 + $0x168] sm:$0xff]
    %v2958 = vld [vmem:[%s2911 + $0x170] sm:$0xff]
    %v2959 = vld [vmem:[%s2911 + $0x178] sm:$0xff]
    %v2960 = vld [vmem:[%s2911 + $0x180] sm:$0xff]
    %v2961 = vld [vmem:[%s2911 + $0x188] sm:$0xff]
    %v2962 = vld [vmem:[%s2911 + $0x190] sm:$0xff]
    %v2963 = vld [vmem:[%s2911 + $0x198] sm:$0xff]
    %v2964 = vld [vmem:[%s2911 + $0x1a0] sm:$0xff]
    %v2965 = vld [vmem:[%s2911 + $0x1a8] sm:$0xff]
    %v2966 = vld [vmem:[%s2911 + $0x1b0] sm:$0xff]
    %v2967 = vld [vmem:[%s2911 + $0x1b8] sm:$0xff]
    %v2968 = vld [vmem:[%s2911 + $0x1c0] sm:$0xff]
    %v2969 = vld [vmem:[%s2911 + $0x1c8] sm:$0xff]
    %v2970 = vld [vmem:[%s2911 + $0x1d0] sm:$0xff]
    %v2971 = vld [vmem:[%s2911 + $0x1d8] sm:$0xff]
    %v2972 = vld [vmem:[%s2911 + $0x1e0] sm:$0xff]
    %v2973 = vld [vmem:[%s2911 + $0x1e8] sm:$0xff]
    %v2974 = vld [vmem:[%s2911 + $0x1f0] sm:$0xff]
    %v2975 = vld [vmem:[%s2911 + $0x1f8] sm:$0xff]
    %s2976 = scalar_lea.vmem [#allocation4], 20
    %v2977 = vld [vmem:[%s2976] sm:$0xf]
    %v2979 = vperm.slane %v2977, 0
    %v2980 = vperm.slane %v2977, 1
    %v2981 = vperm.slane %v2977, 2
    %v2982 = vperm.slane %v2977, 3
    %v3051 = vunpack.c.l.b16 %v2912
    %v3052 = vunpack.c.h.b16 %v2912
    %v3053 = vunpack.c.l.b16 %v2913
    %v3054 = vunpack.c.h.b16 %v2913
    %v3055 = vunpack.c.l.b16 %v2914
    %v3056 = vunpack.c.h.b16 %v2914
    %v3057 = vunpack.c.l.b16 %v2915
    %v3058 = vunpack.c.h.b16 %v2915
    %v3059 = vunpack.c.l.b16 %v2916
    %v3060 = vunpack.c.h.b16 %v2916
    %v3061 = vunpack.c.l.b16 %v2917
    %v3062 = vunpack.c.h.b16 %v2917
    %v3063 = vunpack.c.l.b16 %v2918
    %v3064 = vunpack.c.h.b16 %v2918
    %v3065 = vunpack.c.l.b16 %v2919
    %v3066 = vunpack.c.h.b16 %v2919
    %v3067 = vunpack.c.l.b16 %v2920
    %v3068 = vunpack.c.h.b16 %v2920
    %v3069 = vunpack.c.l.b16 %v2921
    %v3070 = vunpack.c.h.b16 %v2921
    %v3071 = vunpack.c.l.b16 %v2922
    %v3072 = vunpack.c.h.b16 %v2922
    %v3073 = vunpack.c.l.b16 %v2923
    %v3074 = vunpack.c.h.b16 %v2923
    %v3075 = vunpack.c.l.b16 %v2924
    %v3076 = vunpack.c.h.b16 %v2924
    %v3077 = vunpack.c.l.b16 %v2925
    %v3078 = vunpack.c.h.b16 %v2925
    %v3079 = vunpack.c.l.b16 %v2926
    %v3080 = vunpack.c.h.b16 %v2926
    %v3081 = vunpack.c.l.b16 %v2927
    %v3082 = vunpack.c.h.b16 %v2927
    %v3083 = vunpack.c.l.b16 %v2928
    %v3084 = vunpack.c.h.b16 %v2928
    %v3085 = vunpack.c.l.b16 %v2929
    %v3086 = vunpack.c.h.b16 %v2929
    %v3087 = vunpack.c.l.b16 %v2930
    %v3088 = vunpack.c.h.b16 %v2930
    %v3089 = vunpack.c.l.b16 %v2931
    %v3090 = vunpack.c.h.b16 %v2931
    %v3091 = vunpack.c.l.b16 %v2932
    %v3092 = vunpack.c.h.b16 %v2932
    %v3093 = vunpack.c.l.b16 %v2933
    %v3094 = vunpack.c.h.b16 %v2933
    %v3095 = vunpack.c.l.b16 %v2934
    %v3096 = vunpack.c.h.b16 %v2934
    %v3097 = vunpack.c.l.b16 %v2935
    %v3098 = vunpack.c.h.b16 %v2935
    %v3099 = vunpack.c.l.b16 %v2936
    %v3100 = vunpack.c.h.b16 %v2936
    %v3101 = vunpack.c.l.b16 %v2937
    %v3102 = vunpack.c.h.b16 %v2937
    %v3103 = vunpack.c.l.b16 %v2938
    %v3104 = vunpack.c.h.b16 %v2938
    %v3105 = vunpack.c.l.b16 %v2939
    %v3106 = vunpack.c.h.b16 %v2939
    %v3107 = vunpack.c.l.b16 %v2940
    %v3108 = vunpack.c.h.b16 %v2940
    %v3109 = vunpack.c.l.b16 %v2941
    %v3110 = vunpack.c.h.b16 %v2941
    %v3111 = vunpack.c.l.b16 %v2942
    %v3112 = vunpack.c.h.b16 %v2942
    %v3113 = vunpack.c.l.b16 %v2943
    %v3114 = vunpack.c.h.b16 %v2943
    %v3115 = vunpack.c.l.b16 %v2944
    %v3116 = vunpack.c.h.b16 %v2944
    %v3117 = vunpack.c.l.b16 %v2945
    %v3118 = vunpack.c.h.b16 %v2945
    %v3119 = vunpack.c.l.b16 %v2946
    %v3120 = vunpack.c.h.b16 %v2946
    %v3121 = vunpack.c.l.b16 %v2947
    %v3122 = vunpack.c.h.b16 %v2947
    %v3123 = vunpack.c.l.b16 %v2948
    %v3124 = vunpack.c.h.b16 %v2948
    %v3125 = vunpack.c.l.b16 %v2949
    %v3126 = vunpack.c.h.b16 %v2949
    %v3127 = vunpack.c.l.b16 %v2950
    %v3128 = vunpack.c.h.b16 %v2950
    %v3129 = vunpack.c.l.b16 %v2951
    %v3130 = vunpack.c.h.b16 %v2951
    %v3131 = vunpack.c.l.b16 %v2952
    %v3132 = vunpack.c.h.b16 %v2952
    %v3133 = vunpack.c.l.b16 %v2953
    %v3134 = vunpack.c.h.b16 %v2953
    %v3135 = vunpack.c.l.b16 %v2954
    %v3136 = vunpack.c.h.b16 %v2954
    %v3137 = vunpack.c.l.b16 %v2955
    %v3138 = vunpack.c.h.b16 %v2955
    %v3139 = vunpack.c.l.b16 %v2956
    %v3140 = vunpack.c.h.b16 %v2956
    %v3141 = vunpack.c.l.b16 %v2957
    %v3142 = vunpack.c.h.b16 %v2957
    %v3143 = vunpack.c.l.b16 %v2958
    %v3144 = vunpack.c.h.b16 %v2958
    %v3145 = vunpack.c.l.b16 %v2959
    %v3146 = vunpack.c.h.b16 %v2959
    %v3147 = vunpack.c.l.b16 %v2960
    %v3148 = vunpack.c.h.b16 %v2960
    %v3149 = vunpack.c.l.b16 %v2961
    %v3150 = vunpack.c.h.b16 %v2961
    %v3151 = vunpack.c.l.b16 %v2962
    %v3152 = vunpack.c.h.b16 %v2962
    %v3153 = vunpack.c.l.b16 %v2963
    %v3154 = vunpack.c.h.b16 %v2963
    %v3155 = vunpack.c.l.b16 %v2964
    %v3156 = vunpack.c.h.b16 %v2964
    %v3157 = vunpack.c.l.b16 %v2965
    %v3158 = vunpack.c.h.b16 %v2965
    %v3159 = vunpack.c.l.b16 %v2966
    %v3160 = vunpack.c.h.b16 %v2966
    %v3161 = vunpack.c.l.b16 %v2967
    %v3162 = vunpack.c.h.b16 %v2967
    %v3163 = vunpack.c.l.b16 %v2968
    %v3164 = vunpack.c.h.b16 %v2968
    %v3165 = vunpack.c.l.b16 %v2969
    %v3166 = vunpack.c.h.b16 %v2969
    %v3167 = vunpack.c.l.b16 %v2970
    %v3168 = vunpack.c.h.b16 %v2970
    %v3169 = vunpack.c.l.b16 %v2971
    %v3170 = vunpack.c.h.b16 %v2971
    %v3171 = vunpack.c.l.b16 %v2972
    %v3172 = vunpack.c.h.b16 %v2972
    %v3173 = vunpack.c.l.b16 %v2973
    %v3174 = vunpack.c.h.b16 %v2973
    %v3175 = vunpack.c.l.b16 %v2974
    %v3176 = vunpack.c.h.b16 %v2974
    %v3177 = vunpack.c.l.b16 %v2975
    %v3178 = vunpack.c.h.b16 %v2975
    %v3179 = vpack.c.b16 %v3055, %v3051
    %v3180 = vpack.c.b16 %v3056, %v3052
    %v3181 = vpack.c.b16 %v3057, %v3053
    %v3182 = vpack.c.b16 %v3058, %v3054
    %v3183 = vpack.c.b16 %v3063, %v3059
    %v3184 = vpack.c.b16 %v3064, %v3060
    %v3185 = vpack.c.b16 %v3065, %v3061
    %v3186 = vpack.c.b16 %v3066, %v3062
    %v3187 = vpack.c.b16 %v3071, %v3067
    %v3188 = vpack.c.b16 %v3072, %v3068
    %v3189 = vpack.c.b16 %v3073, %v3069
    %v3190 = vpack.c.b16 %v3074, %v3070
    %v3191 = vpack.c.b16 %v3079, %v3075
    %v3192 = vpack.c.b16 %v3080, %v3076
    %v3193 = vpack.c.b16 %v3081, %v3077
    %v3194 = vpack.c.b16 %v3082, %v3078
    %v3195 = vpack.c.b16 %v3087, %v3083
    %v3196 = vpack.c.b16 %v3088, %v3084
    %v3197 = vpack.c.b16 %v3089, %v3085
    %v3198 = vpack.c.b16 %v3090, %v3086
    %v3199 = vpack.c.b16 %v3095, %v3091
    %v3200 = vpack.c.b16 %v3096, %v3092
    %v3201 = vpack.c.b16 %v3097, %v3093
    %v3202 = vpack.c.b16 %v3098, %v3094
    %v3203 = vpack.c.b16 %v3103, %v3099
    %v3204 = vpack.c.b16 %v3104, %v3100
    %v3205 = vpack.c.b16 %v3105, %v3101
    %v3206 = vpack.c.b16 %v3106, %v3102
    %v3207 = vpack.c.b16 %v3111, %v3107
    %v3208 = vpack.c.b16 %v3112, %v3108
    %v3209 = vpack.c.b16 %v3113, %v3109
    %v3210 = vpack.c.b16 %v3114, %v3110
    %v3211 = vpack.c.b16 %v3119, %v3115
    %v3212 = vpack.c.b16 %v3120, %v3116
    %v3213 = vpack.c.b16 %v3121, %v3117
    %v3214 = vpack.c.b16 %v3122, %v3118
    %v3215 = vpack.c.b16 %v3127, %v3123
    %v3216 = vpack.c.b16 %v3128, %v3124
    %v3217 = vpack.c.b16 %v3129, %v3125
    %v3218 = vpack.c.b16 %v3130, %v3126
    %v3219 = vpack.c.b16 %v3135, %v3131
    %v3220 = vpack.c.b16 %v3136, %v3132
    %v3221 = vpack.c.b16 %v3137, %v3133
    %v3222 = vpack.c.b16 %v3138, %v3134
    %v3223 = vpack.c.b16 %v3143, %v3139
    %v3224 = vpack.c.b16 %v3144, %v3140
    %v3225 = vpack.c.b16 %v3145, %v3141
    %v3226 = vpack.c.b16 %v3146, %v3142
    %v3227 = vpack.c.b16 %v3151, %v3147
    %v3228 = vpack.c.b16 %v3152, %v3148
    %v3229 = vpack.c.b16 %v3153, %v3149
    %v3230 = vpack.c.b16 %v3154, %v3150
    %v3231 = vpack.c.b16 %v3159, %v3155
    %v3232 = vpack.c.b16 %v3160, %v3156
    %v3233 = vpack.c.b16 %v3161, %v3157
    %v3234 = vpack.c.b16 %v3162, %v3158
    %v3235 = vpack.c.b16 %v3167, %v3163
    %v3236 = vpack.c.b16 %v3168, %v3164
    %v3237 = vpack.c.b16 %v3169, %v3165
    %v3238 = vpack.c.b16 %v3170, %v3166
    %v3239 = vpack.c.b16 %v3175, %v3171
    %v3240 = vpack.c.b16 %v3176, %v3172
    %v3241 = vpack.c.b16 %v3177, %v3173
    %v3242 = vpack.c.b16 %v3178, %v3174
    %3307 = vmatpush.bf16.msra.mxu0 %v3207
    %3308 = vmatpush.bf16.msra.mxu0 %v3203
    %3309 = vmatpush.bf16.msra.mxu0 %v3199
    %3310 = vmatpush.bf16.msra.mxu0 %v3195
    %3311 = vmatpush.bf16.msra.mxu0 %v3191
    %3312 = vmatpush.bf16.msra.mxu0 %v3187
    %3313 = vmatpush.bf16.msra.mxu0 %v3183
    %3314 = vmatpush.bf16.msra.mxu0 %v3179
    %3315 = vmatmul.bf16.gmra.mxu0 %v2909
    %v3316 = vpop.f32.mrf.mxu0
    %v3317 = vadd.f32 %v2979, %v3316
    %v3318 = vpop.f32.mrf.mxu0
    %v3319 = vadd.f32 %v2979, %v3318
    %3320 = vdwg.mxu0
    %3321 = vmatpush.bf16.msra.mxu0 %v3239
    %3322 = vmatpush.bf16.msra.mxu0 %v3235
    %3323 = vmatpush.bf16.msra.mxu0 %v3231
    %3324 = vmatpush.bf16.msra.mxu0 %v3227
    %3325 = vmatpush.bf16.msra.mxu0 %v3223
    %3326 = vmatpush.bf16.msra.mxu0 %v3219
    %3327 = vmatpush.bf16.msra.mxu0 %v3215
    %3328 = vmatpush.bf16.msra.mxu0 %v3211
    %3329 = vmatmul.bf16.gmra.mxu0 %v2910
    %v3330 = vpop.f32.mrf.mxu0
    %v3331 = vadd.f32 %v3317, %v3330
    %v3332 = vpop.f32.mrf.mxu0
    %v3333 = vadd.f32 %v3319, %v3332
    %3334 = vdwg.mxu0
    %3335 = vmatpush.bf16.msra.mxu0 %v3208
    %3336 = vmatpush.bf16.msra.mxu0 %v3204
    %3337 = vmatpush.bf16.msra.mxu0 %v3200
    %3338 = vmatpush.bf16.msra.mxu0 %v3196
    %3339 = vmatpush.bf16.msra.mxu0 %v3192
    %3340 = vmatpush.bf16.msra.mxu0 %v3188
    %3341 = vmatpush.bf16.msra.mxu0 %v3184
    %3342 = vmatpush.bf16.msra.mxu0 %v3180
    %3343 = vmatmul.bf16.gmra.mxu0 %v2909
    %v3344 = vpop.f32.mrf.mxu0
    %v3345 = vadd.f32 %v2980, %v3344
    %v3346 = vpop.f32.mrf.mxu0
    %v3347 = vadd.f32 %v2980, %v3346
    %3348 = vdwg.mxu0
    %3349 = vmatpush.bf16.msra.mxu0 %v3240
    %3350 = vmatpush.bf16.msra.mxu0 %v3236
    %3351 = vmatpush.bf16.msra.mxu0 %v3232
    %3352 = vmatpush.bf16.msra.mxu0 %v3228
    %3353 = vmatpush.bf16.msra.mxu0 %v3224
    %3354 = vmatpush.bf16.msra.mxu0 %v3220
    %3355 = vmatpush.bf16.msra.mxu0 %v3216
    %3356 = vmatpush.bf16.msra.mxu0 %v3212
    %3357 = vmatmul.bf16.gmra.mxu0 %v2910
    %v3358 = vpop.f32.mrf.mxu0
    %v3359 = vadd.f32 %v3345, %v3358
    %v3360 = vpop.f32.mrf.mxu0
    %v3361 = vadd.f32 %v3347, %v3360
    %3362 = vdwg.mxu0
    %3363 = vmatpush.bf16.msra.mxu0 %v3209
    %3364 = vmatpush.bf16.msra.mxu0 %v3205
    %3365 = vmatpush.bf16.msra.mxu0 %v3201
    %3366 = vmatpush.bf16.msra.mxu0 %v3197
    %3367 = vmatpush.bf16.msra.mxu0 %v3193
    %3368 = vmatpush.bf16.msra.mxu0 %v3189
    %3369 = vmatpush.bf16.msra.mxu0 %v3185
    %3370 = vmatpush.bf16.msra.mxu0 %v3181
    %3371 = vmatmul.bf16.gmra.mxu0 %v2909
    %v3372 = vpop.f32.mrf.mxu0
    %v3373 = vadd.f32 %v2981, %v3372
    %v3374 = vpop.f32.mrf.mxu0
    %v3375 = vadd.f32 %v2981, %v3374
    %3376 = vdwg.mxu0
    %3377 = vmatpush.bf16.msra.mxu0 %v3241
    %3378 = vmatpush.bf16.msra.mxu0 %v3237
    %3379 = vmatpush.bf16.msra.mxu0 %v3233
    %3380 = vmatpush.bf16.msra.mxu0 %v3229
    %3381 = vmatpush.bf16.msra.mxu0 %v3225
    %3382 = vmatpush.bf16.msra.mxu0 %v3221
    %3383 = vmatpush.bf16.msra.mxu0 %v3217
    %3384 = vmatpush.bf16.msra.mxu0 %v3213
    %3385 = vmatmul.bf16.gmra.mxu0 %v2910
    %v3386 = vpop.f32.mrf.mxu0
    %v3387 = vadd.f32 %v3373, %v3386
    %v3388 = vpop.f32.mrf.mxu0
    %v3389 = vadd.f32 %v3375, %v3388
    %3390 = vdwg.mxu0
    %3391 = vmatpush.bf16.msra.mxu0 %v3210
    %3392 = vmatpush.bf16.msra.mxu0 %v3206
    %3393 = vmatpush.bf16.msra.mxu0 %v3202
    %3394 = vmatpush.bf16.msra.mxu0 %v3198
    %3395 = vmatpush.bf16.msra.mxu0 %v3194
    %3396 = vmatpush.bf16.msra.mxu0 %v3190
    %3397 = vmatpush.bf16.msra.mxu0 %v3186
    %3398 = vmatpush.bf16.msra.mxu0 %v3182
    %3399 = vmatmul.bf16.gmra.mxu0 %v2909
    %v3400 = vpop.f32.mrf.mxu0
    %v3401 = vadd.f32 %v2982, %v3400
    %v3402 = vpop.f32.mrf.mxu0
    %v3403 = vadd.f32 %v2982, %v3402
    %3404 = vdwg.mxu0
    %3405 = vmatpush.bf16.msra.mxu0 %v3242
    %3406 = vmatpush.bf16.msra.mxu0 %v3238
    %3407 = vmatpush.bf16.msra.mxu0 %v3234
    %3408 = vmatpush.bf16.msra.mxu0 %v3230
    %3409 = vmatpush.bf16.msra.mxu0 %v3226
    %3410 = vmatpush.bf16.msra.mxu0 %v3222
    %3411 = vmatpush.bf16.msra.mxu0 %v3218
    %3412 = vmatpush.bf16.msra.mxu0 %v3214
    %3413 = vmatmul.bf16.gmra.mxu0 %v2910
    %v3414 = vpop.f32.mrf.mxu0
    %v3415 = vadd.f32 %v3401, %v3414
    %v3416 = vpop.f32.mrf.mxu0
    %v3417 = vadd.f32 %v3403, %v3416
    %3418 = vdwg.mxu0
    %v3419 = vmax.f32 %v3331, 0.0
    %v3420 = vmax.f32 %v3359, 0.0
    %v3421 = vmax.f32 %v3387, 0.0
    %v3422 = vmax.f32 %v3415, 0.0
    %v3423 = vmax.f32 %v3333, 0.0
    %v3424 = vmax.f32 %v3361, 0.0
    %v3425 = vmax.f32 %v3389, 0.0
    %v3426 = vmax.f32 %v3417, 0.0
    %v3427 = vpack.c.bf16 %v3423, %v3419
    %v3428 = vpack.c.bf16 %v3424, %v3420
    %v3429 = vpack.c.bf16 %v3425, %v3421
    %v3430 = vpack.c.bf16 %v3426, %v3422
    %s3431 = scalar_lea.vmem [#allocation2], 6144
    %v3432 = vld [vmem:[%s3431] sm:$0xff]
    %v3433 = vld [vmem:[%s3431 + $0x8] sm:$0xff]
    %v3434 = vld [vmem:[%s3431 + $0x10] sm:$0xff]
    %v3435 = vld [vmem:[%s3431 + $0x18] sm:$0xff]
    %v3436 = vld [vmem:[%s3431 + $0x20] sm:$0xff]
    %v3437 = vld [vmem:[%s3431 + $0x28] sm:$0xff]
    %v3438 = vld [vmem:[%s3431 + $0x30] sm:$0xff]
    %v3439 = vld [vmem:[%s3431 + $0x38] sm:$0xff]
    %v3440 = vld [vmem:[%s3431 + $0x40] sm:$0xff]
    %v3441 = vld [vmem:[%s3431 + $0x48] sm:$0xff]
    %v3442 = vld [vmem:[%s3431 + $0x50] sm:$0xff]
    %v3443 = vld [vmem:[%s3431 + $0x58] sm:$0xff]
    %v3444 = vld [vmem:[%s3431 + $0x60] sm:$0xff]
    %v3445 = vld [vmem:[%s3431 + $0x68] sm:$0xff]
    %v3446 = vld [vmem:[%s3431 + $0x70] sm:$0xff]
    %v3447 = vld [vmem:[%s3431 + $0x78] sm:$0xff]
    %v3448 = vld [vmem:[%s3431 + $0x80] sm:$0xff]
    %v3449 = vld [vmem:[%s3431 + $0x88] sm:$0xff]
    %v3450 = vld [vmem:[%s3431 + $0x90] sm:$0xff]
    %v3451 = vld [vmem:[%s3431 + $0x98] sm:$0xff]
    %v3452 = vld [vmem:[%s3431 + $0xa0] sm:$0xff]
    %v3453 = vld [vmem:[%s3431 + $0xa8] sm:$0xff]
    %v3454 = vld [vmem:[%s3431 + $0xb0] sm:$0xff]
    %v3455 = vld [vmem:[%s3431 + $0xb8] sm:$0xff]
    %v3456 = vld [vmem:[%s3431 + $0xc0] sm:$0xff]
    %v3457 = vld [vmem:[%s3431 + $0xc8] sm:$0xff]
    %v3458 = vld [vmem:[%s3431 + $0xd0] sm:$0xff]
    %v3459 = vld [vmem:[%s3431 + $0xd8] sm:$0xff]
    %v3460 = vld [vmem:[%s3431 + $0xe0] sm:$0xff]
    %v3461 = vld [vmem:[%s3431 + $0xe8] sm:$0xff]
    %v3462 = vld [vmem:[%s3431 + $0xf0] sm:$0xff]
    %v3463 = vld [vmem:[%s3431 + $0xf8] sm:$0xff]
    %v3464 = vld [vmem:[%s3431 + $0x100] sm:$0xff]
    %v3465 = vld [vmem:[%s3431 + $0x108] sm:$0xff]
    %v3466 = vld [vmem:[%s3431 + $0x110] sm:$0xff]
    %v3467 = vld [vmem:[%s3431 + $0x118] sm:$0xff]
    %v3468 = vld [vmem:[%s3431 + $0x120] sm:$0xff]
    %v3469 = vld [vmem:[%s3431 + $0x128] sm:$0xff]
    %v3470 = vld [vmem:[%s3431 + $0x130] sm:$0xff]
    %v3471 = vld [vmem:[%s3431 + $0x138] sm:$0xff]
    %v3472 = vld [vmem:[%s3431 + $0x140] sm:$0xff]
    %v3473 = vld [vmem:[%s3431 + $0x148] sm:$0xff]
    %v3474 = vld [vmem:[%s3431 + $0x150] sm:$0xff]
    %v3475 = vld [vmem:[%s3431 + $0x158] sm:$0xff]
    %v3476 = vld [vmem:[%s3431 + $0x160] sm:$0xff]
    %v3477 = vld [vmem:[%s3431 + $0x168] sm:$0xff]
    %v3478 = vld [vmem:[%s3431 + $0x170] sm:$0xff]
    %v3479 = vld [vmem:[%s3431 + $0x178] sm:$0xff]
    %v3480 = vld [vmem:[%s3431 + $0x180] sm:$0xff]
    %v3481 = vld [vmem:[%s3431 + $0x188] sm:$0xff]
    %v3482 = vld [vmem:[%s3431 + $0x190] sm:$0xff]
    %v3483 = vld [vmem:[%s3431 + $0x198] sm:$0xff]
    %v3484 = vld [vmem:[%s3431 + $0x1a0] sm:$0xff]
    %v3485 = vld [vmem:[%s3431 + $0x1a8] sm:$0xff]
    %v3486 = vld [vmem:[%s3431 + $0x1b0] sm:$0xff]
    %v3487 = vld [vmem:[%s3431 + $0x1b8] sm:$0xff]
    %v3488 = vld [vmem:[%s3431 + $0x1c0] sm:$0xff]
    %v3489 = vld [vmem:[%s3431 + $0x1c8] sm:$0xff]
    %v3490 = vld [vmem:[%s3431 + $0x1d0] sm:$0xff]
    %v3491 = vld [vmem:[%s3431 + $0x1d8] sm:$0xff]
    %v3492 = vld [vmem:[%s3431 + $0x1e0] sm:$0xff]
    %v3493 = vld [vmem:[%s3431 + $0x1e8] sm:$0xff]
    %v3494 = vld [vmem:[%s3431 + $0x1f0] sm:$0xff]
    %v3495 = vld [vmem:[%s3431 + $0x1f8] sm:$0xff]
    %v3496 = vld [vmem:[%s3431 + $0x200] sm:$0xff]
    %v3497 = vld [vmem:[%s3431 + $0x208] sm:$0xff]
    %v3498 = vld [vmem:[%s3431 + $0x210] sm:$0xff]
    %v3499 = vld [vmem:[%s3431 + $0x218] sm:$0xff]
    %v3500 = vld [vmem:[%s3431 + $0x220] sm:$0xff]
    %v3501 = vld [vmem:[%s3431 + $0x228] sm:$0xff]
    %v3502 = vld [vmem:[%s3431 + $0x230] sm:$0xff]
    %v3503 = vld [vmem:[%s3431 + $0x238] sm:$0xff]
    %v3504 = vld [vmem:[%s3431 + $0x240] sm:$0xff]
    %v3505 = vld [vmem:[%s3431 + $0x248] sm:$0xff]
    %v3506 = vld [vmem:[%s3431 + $0x250] sm:$0xff]
    %v3507 = vld [vmem:[%s3431 + $0x258] sm:$0xff]
    %v3508 = vld [vmem:[%s3431 + $0x260] sm:$0xff]
    %v3509 = vld [vmem:[%s3431 + $0x268] sm:$0xff]
    %v3510 = vld [vmem:[%s3431 + $0x270] sm:$0xff]
    %v3511 = vld [vmem:[%s3431 + $0x278] sm:$0xff]
    %v3512 = vld [vmem:[%s3431 + $0x280] sm:$0xff]
    %v3513 = vld [vmem:[%s3431 + $0x288] sm:$0xff]
    %v3514 = vld [vmem:[%s3431 + $0x290] sm:$0xff]
    %v3515 = vld [vmem:[%s3431 + $0x298] sm:$0xff]
    %v3516 = vld [vmem:[%s3431 + $0x2a0] sm:$0xff]
    %v3517 = vld [vmem:[%s3431 + $0x2a8] sm:$0xff]
    %v3518 = vld [vmem:[%s3431 + $0x2b0] sm:$0xff]
    %v3519 = vld [vmem:[%s3431 + $0x2b8] sm:$0xff]
    %v3520 = vld [vmem:[%s3431 + $0x2c0] sm:$0xff]
    %v3521 = vld [vmem:[%s3431 + $0x2c8] sm:$0xff]
    %v3522 = vld [vmem:[%s3431 + $0x2d0] sm:$0xff]
    %v3523 = vld [vmem:[%s3431 + $0x2d8] sm:$0xff]
    %v3524 = vld [vmem:[%s3431 + $0x2e0] sm:$0xff]
    %v3525 = vld [vmem:[%s3431 + $0x2e8] sm:$0xff]
    %v3526 = vld [vmem:[%s3431 + $0x2f0] sm:$0xff]
    %v3527 = vld [vmem:[%s3431 + $0x2f8] sm:$0xff]
    %v3528 = vld [vmem:[%s3431 + $0x300] sm:$0xff]
    %v3529 = vld [vmem:[%s3431 + $0x308] sm:$0xff]
    %v3530 = vld [vmem:[%s3431 + $0x310] sm:$0xff]
    %v3531 = vld [vmem:[%s3431 + $0x318] sm:$0xff]
    %v3532 = vld [vmem:[%s3431 + $0x320] sm:$0xff]
    %v3533 = vld [vmem:[%s3431 + $0x328] sm:$0xff]
    %v3534 = vld [vmem:[%s3431 + $0x330] sm:$0xff]
    %v3535 = vld [vmem:[%s3431 + $0x338] sm:$0xff]
    %v3536 = vld [vmem:[%s3431 + $0x340] sm:$0xff]
    %v3537 = vld [vmem:[%s3431 + $0x348] sm:$0xff]
    %v3538 = vld [vmem:[%s3431 + $0x350] sm:$0xff]
    %v3539 = vld [vmem:[%s3431 + $0x358] sm:$0xff]
    %v3540 = vld [vmem:[%s3431 + $0x360] sm:$0xff]
    %v3541 = vld [vmem:[%s3431 + $0x368] sm:$0xff]
    %v3542 = vld [vmem:[%s3431 + $0x370] sm:$0xff]
    %v3543 = vld [vmem:[%s3431 + $0x378] sm:$0xff]
    %v3544 = vld [vmem:[%s3431 + $0x380] sm:$0xff]
    %v3545 = vld [vmem:[%s3431 + $0x388] sm:$0xff]
    %v3546 = vld [vmem:[%s3431 + $0x390] sm:$0xff]
    %v3547 = vld [vmem:[%s3431 + $0x398] sm:$0xff]
    %v3548 = vld [vmem:[%s3431 + $0x3a0] sm:$0xff]
    %v3549 = vld [vmem:[%s3431 + $0x3a8] sm:$0xff]
    %v3550 = vld [vmem:[%s3431 + $0x3b0] sm:$0xff]
    %v3551 = vld [vmem:[%s3431 + $0x3b8] sm:$0xff]
    %v3552 = vld [vmem:[%s3431 + $0x3c0] sm:$0xff]
    %v3553 = vld [vmem:[%s3431 + $0x3c8] sm:$0xff]
    %v3554 = vld [vmem:[%s3431 + $0x3d0] sm:$0xff]
    %v3555 = vld [vmem:[%s3431 + $0x3d8] sm:$0xff]
    %v3556 = vld [vmem:[%s3431 + $0x3e0] sm:$0xff]
    %v3557 = vld [vmem:[%s3431 + $0x3e8] sm:$0xff]
    %v3558 = vld [vmem:[%s3431 + $0x3f0] sm:$0xff]
    %v3559 = vld [vmem:[%s3431 + $0x3f8] sm:$0xff]
    %s3560 = scalar_lea.vmem [#allocation4], 24
    %v3561 = vld [vmem:[%s3560] sm:$0xf]
    %v3563 = vperm.slane %v3561, 0
    %v3564 = vperm.slane %v3561, 1
    %v3565 = vperm.slane %v3561, 2
    %v3566 = vperm.slane %v3561, 3
    %v3699 = vunpack.c.l.b16 %v3432
    %v3700 = vunpack.c.h.b16 %v3432
    %v3701 = vunpack.c.l.b16 %v3433
    %v3702 = vunpack.c.h.b16 %v3433
    %v3703 = vunpack.c.l.b16 %v3434
    %v3704 = vunpack.c.h.b16 %v3434
    %v3705 = vunpack.c.l.b16 %v3435
    %v3706 = vunpack.c.h.b16 %v3435
    %v3707 = vunpack.c.l.b16 %v3436
    %v3708 = vunpack.c.h.b16 %v3436
    %v3709 = vunpack.c.l.b16 %v3437
    %v3710 = vunpack.c.h.b16 %v3437
    %v3711 = vunpack.c.l.b16 %v3438
    %v3712 = vunpack.c.h.b16 %v3438
    %v3713 = vunpack.c.l.b16 %v3439
    %v3714 = vunpack.c.h.b16 %v3439
    %v3715 = vunpack.c.l.b16 %v3440
    %v3716 = vunpack.c.h.b16 %v3440
    %v3717 = vunpack.c.l.b16 %v3441
    %v3718 = vunpack.c.h.b16 %v3441
    %v3719 = vunpack.c.l.b16 %v3442
    %v3720 = vunpack.c.h.b16 %v3442
    %v3721 = vunpack.c.l.b16 %v3443
    %v3722 = vunpack.c.h.b16 %v3443
    %v3723 = vunpack.c.l.b16 %v3444
    %v3724 = vunpack.c.h.b16 %v3444
    %v3725 = vunpack.c.l.b16 %v3445
    %v3726 = vunpack.c.h.b16 %v3445
    %v3727 = vunpack.c.l.b16 %v3446
    %v3728 = vunpack.c.h.b16 %v3446
    %v3729 = vunpack.c.l.b16 %v3447
    %v3730 = vunpack.c.h.b16 %v3447
    %v3731 = vunpack.c.l.b16 %v3448
    %v3732 = vunpack.c.h.b16 %v3448
    %v3733 = vunpack.c.l.b16 %v3449
    %v3734 = vunpack.c.h.b16 %v3449
    %v3735 = vunpack.c.l.b16 %v3450
    %v3736 = vunpack.c.h.b16 %v3450
    %v3737 = vunpack.c.l.b16 %v3451
    %v3738 = vunpack.c.h.b16 %v3451
    %v3739 = vunpack.c.l.b16 %v3452
    %v3740 = vunpack.c.h.b16 %v3452
    %v3741 = vunpack.c.l.b16 %v3453
    %v3742 = vunpack.c.h.b16 %v3453
    %v3743 = vunpack.c.l.b16 %v3454
    %v3744 = vunpack.c.h.b16 %v3454
    %v3745 = vunpack.c.l.b16 %v3455
    %v3746 = vunpack.c.h.b16 %v3455
    %v3747 = vunpack.c.l.b16 %v3456
    %v3748 = vunpack.c.h.b16 %v3456
    %v3749 = vunpack.c.l.b16 %v3457
    %v3750 = vunpack.c.h.b16 %v3457
    %v3751 = vunpack.c.l.b16 %v3458
    %v3752 = vunpack.c.h.b16 %v3458
    %v3753 = vunpack.c.l.b16 %v3459
    %v3754 = vunpack.c.h.b16 %v3459
    %v3755 = vunpack.c.l.b16 %v3460
    %v3756 = vunpack.c.h.b16 %v3460
    %v3757 = vunpack.c.l.b16 %v3461
    %v3758 = vunpack.c.h.b16 %v3461
    %v3759 = vunpack.c.l.b16 %v3462
    %v3760 = vunpack.c.h.b16 %v3462
    %v3761 = vunpack.c.l.b16 %v3463
    %v3762 = vunpack.c.h.b16 %v3463
    %v3763 = vunpack.c.l.b16 %v3464
    %v3764 = vunpack.c.h.b16 %v3464
    %v3765 = vunpack.c.l.b16 %v3465
    %v3766 = vunpack.c.h.b16 %v3465
    %v3767 = vunpack.c.l.b16 %v3466
    %v3768 = vunpack.c.h.b16 %v3466
    %v3769 = vunpack.c.l.b16 %v3467
    %v3770 = vunpack.c.h.b16 %v3467
    %v3771 = vunpack.c.l.b16 %v3468
    %v3772 = vunpack.c.h.b16 %v3468
    %v3773 = vunpack.c.l.b16 %v3469
    %v3774 = vunpack.c.h.b16 %v3469
    %v3775 = vunpack.c.l.b16 %v3470
    %v3776 = vunpack.c.h.b16 %v3470
    %v3777 = vunpack.c.l.b16 %v3471
    %v3778 = vunpack.c.h.b16 %v3471
    %v3779 = vunpack.c.l.b16 %v3472
    %v3780 = vunpack.c.h.b16 %v3472
    %v3781 = vunpack.c.l.b16 %v3473
    %v3782 = vunpack.c.h.b16 %v3473
    %v3783 = vunpack.c.l.b16 %v3474
    %v3784 = vunpack.c.h.b16 %v3474
    %v3785 = vunpack.c.l.b16 %v3475
    %v3786 = vunpack.c.h.b16 %v3475
    %v3787 = vunpack.c.l.b16 %v3476
    %v3788 = vunpack.c.h.b16 %v3476
    %v3789 = vunpack.c.l.b16 %v3477
    %v3790 = vunpack.c.h.b16 %v3477
    %v3791 = vunpack.c.l.b16 %v3478
    %v3792 = vunpack.c.h.b16 %v3478
    %v3793 = vunpack.c.l.b16 %v3479
    %v3794 = vunpack.c.h.b16 %v3479
    %v3795 = vunpack.c.l.b16 %v3480
    %v3796 = vunpack.c.h.b16 %v3480
    %v3797 = vunpack.c.l.b16 %v3481
    %v3798 = vunpack.c.h.b16 %v3481
    %v3799 = vunpack.c.l.b16 %v3482
    %v3800 = vunpack.c.h.b16 %v3482
    %v3801 = vunpack.c.l.b16 %v3483
    %v3802 = vunpack.c.h.b16 %v3483
    %v3803 = vunpack.c.l.b16 %v3484
    %v3804 = vunpack.c.h.b16 %v3484
    %v3805 = vunpack.c.l.b16 %v3485
    %v3806 = vunpack.c.h.b16 %v3485
    %v3807 = vunpack.c.l.b16 %v3486
    %v3808 = vunpack.c.h.b16 %v3486
    %v3809 = vunpack.c.l.b16 %v3487
    %v3810 = vunpack.c.h.b16 %v3487
    %v3811 = vunpack.c.l.b16 %v3488
    %v3812 = vunpack.c.h.b16 %v3488
    %v3813 = vunpack.c.l.b16 %v3489
    %v3814 = vunpack.c.h.b16 %v3489
    %v3815 = vunpack.c.l.b16 %v3490
    %v3816 = vunpack.c.h.b16 %v3490
    %v3817 = vunpack.c.l.b16 %v3491
    %v3818 = vunpack.c.h.b16 %v3491
    %v3819 = vunpack.c.l.b16 %v3492
    %v3820 = vunpack.c.h.b16 %v3492
    %v3821 = vunpack.c.l.b16 %v3493
    %v3822 = vunpack.c.h.b16 %v3493
    %v3823 = vunpack.c.l.b16 %v3494
    %v3824 = vunpack.c.h.b16 %v3494
    %v3825 = vunpack.c.l.b16 %v3495
    %v3826 = vunpack.c.h.b16 %v3495
    %v3827 = vunpack.c.l.b16 %v3496
    %v3828 = vunpack.c.h.b16 %v3496
    %v3829 = vunpack.c.l.b16 %v3497
    %v3830 = vunpack.c.h.b16 %v3497
    %v3831 = vunpack.c.l.b16 %v3498
    %v3832 = vunpack.c.h.b16 %v3498
    %v3833 = vunpack.c.l.b16 %v3499
    %v3834 = vunpack.c.h.b16 %v3499
    %v3835 = vunpack.c.l.b16 %v3500
    %v3836 = vunpack.c.h.b16 %v3500
    %v3837 = vunpack.c.l.b16 %v3501
    %v3838 = vunpack.c.h.b16 %v3501
    %v3839 = vunpack.c.l.b16 %v3502
    %v3840 = vunpack.c.h.b16 %v3502
    %v3841 = vunpack.c.l.b16 %v3503
    %v3842 = vunpack.c.h.b16 %v3503
    %v3843 = vunpack.c.l.b16 %v3504
    %v3844 = vunpack.c.h.b16 %v3504
    %v3845 = vunpack.c.l.b16 %v3505
    %v3846 = vunpack.c.h.b16 %v3505
    %v3847 = vunpack.c.l.b16 %v3506
    %v3848 = vunpack.c.h.b16 %v3506
    %v3849 = vunpack.c.l.b16 %v3507
    %v3850 = vunpack.c.h.b16 %v3507
    %v3851 = vunpack.c.l.b16 %v3508
    %v3852 = vunpack.c.h.b16 %v3508
    %v3853 = vunpack.c.l.b16 %v3509
    %v3854 = vunpack.c.h.b16 %v3509
    %v3855 = vunpack.c.l.b16 %v3510
    %v3856 = vunpack.c.h.b16 %v3510
    %v3857 = vunpack.c.l.b16 %v3511
    %v3858 = vunpack.c.h.b16 %v3511
    %v3859 = vunpack.c.l.b16 %v3512
    %v3860 = vunpack.c.h.b16 %v3512
    %v3861 = vunpack.c.l.b16 %v3513
    %v3862 = vunpack.c.h.b16 %v3513
    %v3863 = vunpack.c.l.b16 %v3514
    %v3864 = vunpack.c.h.b16 %v3514
    %v3865 = vunpack.c.l.b16 %v3515
    %v3866 = vunpack.c.h.b16 %v3515
    %v3867 = vunpack.c.l.b16 %v3516
    %v3868 = vunpack.c.h.b16 %v3516
    %v3869 = vunpack.c.l.b16 %v3517
    %v3870 = vunpack.c.h.b16 %v3517
    %v3871 = vunpack.c.l.b16 %v3518
    %v3872 = vunpack.c.h.b16 %v3518
    %v3873 = vunpack.c.l.b16 %v3519
    %v3874 = vunpack.c.h.b16 %v3519
    %v3875 = vunpack.c.l.b16 %v3520
    %v3876 = vunpack.c.h.b16 %v3520
    %v3877 = vunpack.c.l.b16 %v3521
    %v3878 = vunpack.c.h.b16 %v3521
    %v3879 = vunpack.c.l.b16 %v3522
    %v3880 = vunpack.c.h.b16 %v3522
    %v3881 = vunpack.c.l.b16 %v3523
    %v3882 = vunpack.c.h.b16 %v3523
    %v3883 = vunpack.c.l.b16 %v3524
    %v3884 = vunpack.c.h.b16 %v3524
    %v3885 = vunpack.c.l.b16 %v3525
    %v3886 = vunpack.c.h.b16 %v3525
    %v3887 = vunpack.c.l.b16 %v3526
    %v3888 = vunpack.c.h.b16 %v3526
    %v3889 = vunpack.c.l.b16 %v3527
    %v3890 = vunpack.c.h.b16 %v3527
    %v3891 = vunpack.c.l.b16 %v3528
    %v3892 = vunpack.c.h.b16 %v3528
    %v3893 = vunpack.c.l.b16 %v3529
    %v3894 = vunpack.c.h.b16 %v3529
    %v3895 = vunpack.c.l.b16 %v3530
    %v3896 = vunpack.c.h.b16 %v3530
    %v3897 = vunpack.c.l.b16 %v3531
    %v3898 = vunpack.c.h.b16 %v3531
    %v3899 = vunpack.c.l.b16 %v3532
    %v3900 = vunpack.c.h.b16 %v3532
    %v3901 = vunpack.c.l.b16 %v3533
    %v3902 = vunpack.c.h.b16 %v3533
    %v3903 = vunpack.c.l.b16 %v3534
    %v3904 = vunpack.c.h.b16 %v3534
    %v3905 = vunpack.c.l.b16 %v3535
    %v3906 = vunpack.c.h.b16 %v3535
    %v3907 = vunpack.c.l.b16 %v3536
    %v3908 = vunpack.c.h.b16 %v3536
    %v3909 = vunpack.c.l.b16 %v3537
    %v3910 = vunpack.c.h.b16 %v3537
    %v3911 = vunpack.c.l.b16 %v3538
    %v3912 = vunpack.c.h.b16 %v3538
    %v3913 = vunpack.c.l.b16 %v3539
    %v3914 = vunpack.c.h.b16 %v3539
    %v3915 = vunpack.c.l.b16 %v3540
    %v3916 = vunpack.c.h.b16 %v3540
    %v3917 = vunpack.c.l.b16 %v3541
    %v3918 = vunpack.c.h.b16 %v3541
    %v3919 = vunpack.c.l.b16 %v3542
    %v3920 = vunpack.c.h.b16 %v3542
    %v3921 = vunpack.c.l.b16 %v3543
    %v3922 = vunpack.c.h.b16 %v3543
    %v3923 = vunpack.c.l.b16 %v3544
    %v3924 = vunpack.c.h.b16 %v3544
    %v3925 = vunpack.c.l.b16 %v3545
    %v3926 = vunpack.c.h.b16 %v3545
    %v3927 = vunpack.c.l.b16 %v3546
    %v3928 = vunpack.c.h.b16 %v3546
    %v3929 = vunpack.c.l.b16 %v3547
    %v3930 = vunpack.c.h.b16 %v3547
    %v3931 = vunpack.c.l.b16 %v3548
    %v3932 = vunpack.c.h.b16 %v3548
    %v3933 = vunpack.c.l.b16 %v3549
    %v3934 = vunpack.c.h.b16 %v3549
    %v3935 = vunpack.c.l.b16 %v3550
    %v3936 = vunpack.c.h.b16 %v3550
    %v3937 = vunpack.c.l.b16 %v3551
    %v3938 = vunpack.c.h.b16 %v3551
    %v3939 = vunpack.c.l.b16 %v3552
    %v3940 = vunpack.c.h.b16 %v3552
    %v3941 = vunpack.c.l.b16 %v3553
    %v3942 = vunpack.c.h.b16 %v3553
    %v3943 = vunpack.c.l.b16 %v3554
    %v3944 = vunpack.c.h.b16 %v3554
    %v3945 = vunpack.c.l.b16 %v3555
    %v3946 = vunpack.c.h.b16 %v3555
    %v3947 = vunpack.c.l.b16 %v3556
    %v3948 = vunpack.c.h.b16 %v3556
    %v3949 = vunpack.c.l.b16 %v3557
    %v3950 = vunpack.c.h.b16 %v3557
    %v3951 = vunpack.c.l.b16 %v3558
    %v3952 = vunpack.c.h.b16 %v3558
    %v3953 = vunpack.c.l.b16 %v3559
    %v3954 = vunpack.c.h.b16 %v3559
    %v3955 = vpack.c.b16 %v3703, %v3699
    %v3956 = vpack.c.b16 %v3704, %v3700
    %v3957 = vpack.c.b16 %v3705, %v3701
    %v3958 = vpack.c.b16 %v3706, %v3702
    %v3959 = vpack.c.b16 %v3711, %v3707
    %v3960 = vpack.c.b16 %v3712, %v3708
    %v3961 = vpack.c.b16 %v3713, %v3709
    %v3962 = vpack.c.b16 %v3714, %v3710
    %v3963 = vpack.c.b16 %v3719, %v3715
    %v3964 = vpack.c.b16 %v3720, %v3716
    %v3965 = vpack.c.b16 %v3721, %v3717
    %v3966 = vpack.c.b16 %v3722, %v3718
    %v3967 = vpack.c.b16 %v3727, %v3723
    %v3968 = vpack.c.b16 %v3728, %v3724
    %v3969 = vpack.c.b16 %v3729, %v3725
    %v3970 = vpack.c.b16 %v3730, %v3726
    %v3971 = vpack.c.b16 %v3735, %v3731
    %v3972 = vpack.c.b16 %v3736, %v3732
    %v3973 = vpack.c.b16 %v3737, %v3733
    %v3974 = vpack.c.b16 %v3738, %v3734
    %v3975 = vpack.c.b16 %v3743, %v3739
    %v3976 = vpack.c.b16 %v3744, %v3740
    %v3977 = vpack.c.b16 %v3745, %v3741
    %v3978 = vpack.c.b16 %v3746, %v3742
    %v3979 = vpack.c.b16 %v3751, %v3747
    %v3980 = vpack.c.b16 %v3752, %v3748
    %v3981 = vpack.c.b16 %v3753, %v3749
    %v3982 = vpack.c.b16 %v3754, %v3750
    %v3983 = vpack.c.b16 %v3759, %v3755
    %v3984 = vpack.c.b16 %v3760, %v3756
    %v3985 = vpack.c.b16 %v3761, %v3757
    %v3986 = vpack.c.b16 %v3762, %v3758
    %v3987 = vpack.c.b16 %v3767, %v3763
    %v3988 = vpack.c.b16 %v3768, %v3764
    %v3989 = vpack.c.b16 %v3769, %v3765
    %v3990 = vpack.c.b16 %v3770, %v3766
    %v3991 = vpack.c.b16 %v3775, %v3771
    %v3992 = vpack.c.b16 %v3776, %v3772
    %v3993 = vpack.c.b16 %v3777, %v3773
    %v3994 = vpack.c.b16 %v3778, %v3774
    %v3995 = vpack.c.b16 %v3783, %v3779
    %v3996 = vpack.c.b16 %v3784, %v3780
    %v3997 = vpack.c.b16 %v3785, %v3781
    %v3998 = vpack.c.b16 %v3786, %v3782
    %v3999 = vpack.c.b16 %v3791, %v3787
    %v4000 = vpack.c.b16 %v3792, %v3788
    %v4001 = vpack.c.b16 %v3793, %v3789
    %v4002 = vpack.c.b16 %v3794, %v3790
    %v4003 = vpack.c.b16 %v3799, %v3795
    %v4004 = vpack.c.b16 %v3800, %v3796
    %v4005 = vpack.c.b16 %v3801, %v3797
    %v4006 = vpack.c.b16 %v3802, %v3798
    %v4007 = vpack.c.b16 %v3807, %v3803
    %v4008 = vpack.c.b16 %v3808, %v3804
    %v4009 = vpack.c.b16 %v3809, %v3805
    %v4010 = vpack.c.b16 %v3810, %v3806
    %v4011 = vpack.c.b16 %v3815, %v3811
    %v4012 = vpack.c.b16 %v3816, %v3812
    %v4013 = vpack.c.b16 %v3817, %v3813
    %v4014 = vpack.c.b16 %v3818, %v3814
    %v4015 = vpack.c.b16 %v3823, %v3819
    %v4016 = vpack.c.b16 %v3824, %v3820
    %v4017 = vpack.c.b16 %v3825, %v3821
    %v4018 = vpack.c.b16 %v3826, %v3822
    %v4019 = vpack.c.b16 %v3831, %v3827
    %v4020 = vpack.c.b16 %v3832, %v3828
    %v4021 = vpack.c.b16 %v3833, %v3829
    %v4022 = vpack.c.b16 %v3834, %v3830
    %v4023 = vpack.c.b16 %v3839, %v3835
    %v4024 = vpack.c.b16 %v3840, %v3836
    %v4025 = vpack.c.b16 %v3841, %v3837
    %v4026 = vpack.c.b16 %v3842, %v3838
    %v4027 = vpack.c.b16 %v3847, %v3843
    %v4028 = vpack.c.b16 %v3848, %v3844
    %v4029 = vpack.c.b16 %v3849, %v3845
    %v4030 = vpack.c.b16 %v3850, %v3846
    %v4031 = vpack.c.b16 %v3855, %v3851
    %v4032 = vpack.c.b16 %v3856, %v3852
    %v4033 = vpack.c.b16 %v3857, %v3853
    %v4034 = vpack.c.b16 %v3858, %v3854
    %v4035 = vpack.c.b16 %v3863, %v3859
    %v4036 = vpack.c.b16 %v3864, %v3860
    %v4037 = vpack.c.b16 %v3865, %v3861
    %v4038 = vpack.c.b16 %v3866, %v3862
    %v4039 = vpack.c.b16 %v3871, %v3867
    %v4040 = vpack.c.b16 %v3872, %v3868
    %v4041 = vpack.c.b16 %v3873, %v3869
    %v4042 = vpack.c.b16 %v3874, %v3870
    %v4043 = vpack.c.b16 %v3879, %v3875
    %v4044 = vpack.c.b16 %v3880, %v3876
    %v4045 = vpack.c.b16 %v3881, %v3877
    %v4046 = vpack.c.b16 %v3882, %v3878
    %v4047 = vpack.c.b16 %v3887, %v3883
    %v4048 = vpack.c.b16 %v3888, %v3884
    %v4049 = vpack.c.b16 %v3889, %v3885
    %v4050 = vpack.c.b16 %v3890, %v3886
    %v4051 = vpack.c.b16 %v3895, %v3891
    %v4052 = vpack.c.b16 %v3896, %v3892
    %v4053 = vpack.c.b16 %v3897, %v3893
    %v4054 = vpack.c.b16 %v3898, %v3894
    %v4055 = vpack.c.b16 %v3903, %v3899
    %v4056 = vpack.c.b16 %v3904, %v3900
    %v4057 = vpack.c.b16 %v3905, %v3901
    %v4058 = vpack.c.b16 %v3906, %v3902
    %v4059 = vpack.c.b16 %v3911, %v3907
    %v4060 = vpack.c.b16 %v3912, %v3908
    %v4061 = vpack.c.b16 %v3913, %v3909
    %v4062 = vpack.c.b16 %v3914, %v3910
    %v4063 = vpack.c.b16 %v3919, %v3915
    %v4064 = vpack.c.b16 %v3920, %v3916
    %v4065 = vpack.c.b16 %v3921, %v3917
    %v4066 = vpack.c.b16 %v3922, %v3918
    %v4067 = vpack.c.b16 %v3927, %v3923
    %v4068 = vpack.c.b16 %v3928, %v3924
    %v4069 = vpack.c.b16 %v3929, %v3925
    %v4070 = vpack.c.b16 %v3930, %v3926
    %v4071 = vpack.c.b16 %v3935, %v3931
    %v4072 = vpack.c.b16 %v3936, %v3932
    %v4073 = vpack.c.b16 %v3937, %v3933
    %v4074 = vpack.c.b16 %v3938, %v3934
    %v4075 = vpack.c.b16 %v3943, %v3939
    %v4076 = vpack.c.b16 %v3944, %v3940
    %v4077 = vpack.c.b16 %v3945, %v3941
    %v4078 = vpack.c.b16 %v3946, %v3942
    %v4079 = vpack.c.b16 %v3951, %v3947
    %v4080 = vpack.c.b16 %v3952, %v3948
    %v4081 = vpack.c.b16 %v3953, %v3949
    %v4082 = vpack.c.b16 %v3954, %v3950
    %4211 = vmatpush.bf16.msra.mxu0 %v3983
    %4212 = vmatpush.bf16.msra.mxu0 %v3979
    %4213 = vmatpush.bf16.msra.mxu0 %v3975
    %4214 = vmatpush.bf16.msra.mxu0 %v3971
    %4215 = vmatpush.bf16.msra.mxu0 %v3967
    %4216 = vmatpush.bf16.msra.mxu0 %v3963
    %4217 = vmatpush.bf16.msra.mxu0 %v3959
    %4218 = vmatpush.bf16.msra.mxu0 %v3955
    %4219 = vmatmul.bf16.gmra.mxu0 %v3427
    %v4220 = vpop.f32.mrf.mxu0
    %v4221 = vadd.f32 %v3563, %v4220
    %v4222 = vpop.f32.mrf.mxu0
    %v4223 = vadd.f32 %v3563, %v4222
    %4224 = vdwg.mxu0
    %4225 = vmatpush.bf16.msra.mxu0 %v4015
    %4226 = vmatpush.bf16.msra.mxu0 %v4011
    %4227 = vmatpush.bf16.msra.mxu0 %v4007
    %4228 = vmatpush.bf16.msra.mxu0 %v4003
    %4229 = vmatpush.bf16.msra.mxu0 %v3999
    %4230 = vmatpush.bf16.msra.mxu0 %v3995
    %4231 = vmatpush.bf16.msra.mxu0 %v3991
    %4232 = vmatpush.bf16.msra.mxu0 %v3987
    %4233 = vmatmul.bf16.gmra.mxu0 %v3428
    %v4234 = vpop.f32.mrf.mxu0
    %v4235 = vadd.f32 %v4221, %v4234
    %v4236 = vpop.f32.mrf.mxu0
    %v4237 = vadd.f32 %v4223, %v4236
    %4238 = vdwg.mxu0
    %4239 = vmatpush.bf16.msra.mxu0 %v4047
    %4240 = vmatpush.bf16.msra.mxu0 %v4043
    %4241 = vmatpush.bf16.msra.mxu0 %v4039
    %4242 = vmatpush.bf16.msra.mxu0 %v4035
    %4243 = vmatpush.bf16.msra.mxu0 %v4031
    %4244 = vmatpush.bf16.msra.mxu0 %v4027
    %4245 = vmatpush.bf16.msra.mxu0 %v4023
    %4246 = vmatpush.bf16.msra.mxu0 %v4019
    %4247 = vmatmul.bf16.gmra.mxu0 %v3429
    %v4248 = vpop.f32.mrf.mxu0
    %v4249 = vadd.f32 %v4235, %v4248
    %v4250 = vpop.f32.mrf.mxu0
    %v4251 = vadd.f32 %v4237, %v4250
    %4252 = vdwg.mxu0
    %4253 = vmatpush.bf16.msra.mxu0 %v4079
    %4254 = vmatpush.bf16.msra.mxu0 %v4075
    %4255 = vmatpush.bf16.msra.mxu0 %v4071
    %4256 = vmatpush.bf16.msra.mxu0 %v4067
    %4257 = vmatpush.bf16.msra.mxu0 %v4063
    %4258 = vmatpush.bf16.msra.mxu0 %v4059
    %4259 = vmatpush.bf16.msra.mxu0 %v4055
    %4260 = vmatpush.bf16.msra.mxu0 %v4051
    %4261 = vmatmul.bf16.gmra.mxu0 %v3430
    %v4262 = vpop.f32.mrf.mxu0
    %v4263 = vadd.f32 %v4249, %v4262
    %v4264 = vpop.f32.mrf.mxu0
    %v4265 = vadd.f32 %v4251, %v4264
    %4266 = vdwg.mxu0
    %4267 = vmatpush.bf16.msra.mxu0 %v3984
    %4268 = vmatpush.bf16.msra.mxu0 %v3980
    %4269 = vmatpush.bf16.msra.mxu0 %v3976
    %4270 = vmatpush.bf16.msra.mxu0 %v3972
    %4271 = vmatpush.bf16.msra.mxu0 %v3968
    %4272 = vmatpush.bf16.msra.mxu0 %v3964
    %4273 = vmatpush.bf16.msra.mxu0 %v3960
    %4274 = vmatpush.bf16.msra.mxu0 %v3956
    %4275 = vmatmul.bf16.gmra.mxu0 %v3427
    %v4276 = vpop.f32.mrf.mxu0
    %v4277 = vadd.f32 %v3564, %v4276
    %v4278 = vpop.f32.mrf.mxu0
    %v4279 = vadd.f32 %v3564, %v4278
    %4280 = vdwg.mxu0
    %4281 = vmatpush.bf16.msra.mxu0 %v4016
    %4282 = vmatpush.bf16.msra.mxu0 %v4012
    %4283 = vmatpush.bf16.msra.mxu0 %v4008
    %4284 = vmatpush.bf16.msra.mxu0 %v4004
    %4285 = vmatpush.bf16.msra.mxu0 %v4000
    %4286 = vmatpush.bf16.msra.mxu0 %v3996
    %4287 = vmatpush.bf16.msra.mxu0 %v3992
    %4288 = vmatpush.bf16.msra.mxu0 %v3988
    %4289 = vmatmul.bf16.gmra.mxu0 %v3428
    %v4290 = vpop.f32.mrf.mxu0
    %v4291 = vadd.f32 %v4277, %v4290
    %v4292 = vpop.f32.mrf.mxu0
    %v4293 = vadd.f32 %v4279, %v4292
    %4294 = vdwg.mxu0
    %4295 = vmatpush.bf16.msra.mxu0 %v4048
    %4296 = vmatpush.bf16.msra.mxu0 %v4044
    %4297 = vmatpush.bf16.msra.mxu0 %v4040
    %4298 = vmatpush.bf16.msra.mxu0 %v4036
    %4299 = vmatpush.bf16.msra.mxu0 %v4032
    %4300 = vmatpush.bf16.msra.mxu0 %v4028
    %4301 = vmatpush.bf16.msra.mxu0 %v4024
    %4302 = vmatpush.bf16.msra.mxu0 %v4020
    %4303 = vmatmul.bf16.gmra.mxu0 %v3429
    %v4304 = vpop.f32.mrf.mxu0
    %v4305 = vadd.f32 %v4291, %v4304
    %v4306 = vpop.f32.mrf.mxu0
    %v4307 = vadd.f32 %v4293, %v4306
    %4308 = vdwg.mxu0
    %4309 = vmatpush.bf16.msra.mxu0 %v4080
    %4310 = vmatpush.bf16.msra.mxu0 %v4076
    %4311 = vmatpush.bf16.msra.mxu0 %v4072
    %4312 = vmatpush.bf16.msra.mxu0 %v4068
    %4313 = vmatpush.bf16.msra.mxu0 %v4064
    %4314 = vmatpush.bf16.msra.mxu0 %v4060
    %4315 = vmatpush.bf16.msra.mxu0 %v4056
    %4316 = vmatpush.bf16.msra.mxu0 %v4052
    %4317 = vmatmul.bf16.gmra.mxu0 %v3430
    %v4318 = vpop.f32.mrf.mxu0
    %v4319 = vadd.f32 %v4305, %v4318
    %v4320 = vpop.f32.mrf.mxu0
    %v4321 = vadd.f32 %v4307, %v4320
    %4322 = vdwg.mxu0
    %4323 = vmatpush.bf16.msra.mxu0 %v3985
    %4324 = vmatpush.bf16.msra.mxu0 %v3981
    %4325 = vmatpush.bf16.msra.mxu0 %v3977
    %4326 = vmatpush.bf16.msra.mxu0 %v3973
    %4327 = vmatpush.bf16.msra.mxu0 %v3969
    %4328 = vmatpush.bf16.msra.mxu0 %v3965
    %4329 = vmatpush.bf16.msra.mxu0 %v3961
    %4330 = vmatpush.bf16.msra.mxu0 %v3957
    %4331 = vmatmul.bf16.gmra.mxu0 %v3427
    %v4332 = vpop.f32.mrf.mxu0
    %v4333 = vadd.f32 %v3565, %v4332
    %v4334 = vpop.f32.mrf.mxu0
    %v4335 = vadd.f32 %v3565, %v4334
    %4336 = vdwg.mxu0
    %4337 = vmatpush.bf16.msra.mxu0 %v4017
    %4338 = vmatpush.bf16.msra.mxu0 %v4013
    %4339 = vmatpush.bf16.msra.mxu0 %v4009
    %4340 = vmatpush.bf16.msra.mxu0 %v4005
    %4341 = vmatpush.bf16.msra.mxu0 %v4001
    %4342 = vmatpush.bf16.msra.mxu0 %v3997
    %4343 = vmatpush.bf16.msra.mxu0 %v3993
    %4344 = vmatpush.bf16.msra.mxu0 %v3989
    %4345 = vmatmul.bf16.gmra.mxu0 %v3428
    %v4346 = vpop.f32.mrf.mxu0
    %v4347 = vadd.f32 %v4333, %v4346
    %v4348 = vpop.f32.mrf.mxu0
    %v4349 = vadd.f32 %v4335, %v4348
    %4350 = vdwg.mxu0
    %4351 = vmatpush.bf16.msra.mxu0 %v4049
    %4352 = vmatpush.bf16.msra.mxu0 %v4045
    %4353 = vmatpush.bf16.msra.mxu0 %v4041
    %4354 = vmatpush.bf16.msra.mxu0 %v4037
    %4355 = vmatpush.bf16.msra.mxu0 %v4033
    %4356 = vmatpush.bf16.msra.mxu0 %v4029
    %4357 = vmatpush.bf16.msra.mxu0 %v4025
    %4358 = vmatpush.bf16.msra.mxu0 %v4021
    %4359 = vmatmul.bf16.gmra.mxu0 %v3429
    %v4360 = vpop.f32.mrf.mxu0
    %v4361 = vadd.f32 %v4347, %v4360
    %v4362 = vpop.f32.mrf.mxu0
    %v4363 = vadd.f32 %v4349, %v4362
    %4364 = vdwg.mxu0
    %4365 = vmatpush.bf16.msra.mxu0 %v4081
    %4366 = vmatpush.bf16.msra.mxu0 %v4077
    %4367 = vmatpush.bf16.msra.mxu0 %v4073
    %4368 = vmatpush.bf16.msra.mxu0 %v4069
    %4369 = vmatpush.bf16.msra.mxu0 %v4065
    %4370 = vmatpush.bf16.msra.mxu0 %v4061
    %4371 = vmatpush.bf16.msra.mxu0 %v4057
    %4372 = vmatpush.bf16.msra.mxu0 %v4053
    %4373 = vmatmul.bf16.gmra.mxu0 %v3430
    %v4374 = vpop.f32.mrf.mxu0
    %v4375 = vadd.f32 %v4361, %v4374
    %v4376 = vpop.f32.mrf.mxu0
    %v4377 = vadd.f32 %v4363, %v4376
    %4378 = vdwg.mxu0
    %4379 = vmatpush.bf16.msra.mxu0 %v3986
    %4380 = vmatpush.bf16.msra.mxu0 %v3982
    %4381 = vmatpush.bf16.msra.mxu0 %v3978
    %4382 = vmatpush.bf16.msra.mxu0 %v3974
    %4383 = vmatpush.bf16.msra.mxu0 %v3970
    %4384 = vmatpush.bf16.msra.mxu0 %v3966
    %4385 = vmatpush.bf16.msra.mxu0 %v3962
    %4386 = vmatpush.bf16.msra.mxu0 %v3958
    %4387 = vmatmul.bf16.gmra.mxu0 %v3427
    %v4388 = vpop.f32.mrf.mxu0
    %v4389 = vadd.f32 %v3566, %v4388
    %v4390 = vpop.f32.mrf.mxu0
    %v4391 = vadd.f32 %v3566, %v4390
    %4392 = vdwg.mxu0
    %4393 = vmatpush.bf16.msra.mxu0 %v4018
    %4394 = vmatpush.bf16.msra.mxu0 %v4014
    %4395 = vmatpush.bf16.msra.mxu0 %v4010
    %4396 = vmatpush.bf16.msra.mxu0 %v4006
    %4397 = vmatpush.bf16.msra.mxu0 %v4002
    %4398 = vmatpush.bf16.msra.mxu0 %v3998
    %4399 = vmatpush.bf16.msra.mxu0 %v3994
    %4400 = vmatpush.bf16.msra.mxu0 %v3990
    %4401 = vmatmul.bf16.gmra.mxu0 %v3428
    %v4402 = vpop.f32.mrf.mxu0
    %v4403 = vadd.f32 %v4389, %v4402
    %v4404 = vpop.f32.mrf.mxu0
    %v4405 = vadd.f32 %v4391, %v4404
    %4406 = vdwg.mxu0
    %4407 = vmatpush.bf16.msra.mxu0 %v4050
    %4408 = vmatpush.bf16.msra.mxu0 %v4046
    %4409 = vmatpush.bf16.msra.mxu0 %v4042
    %4410 = vmatpush.bf16.msra.mxu0 %v4038
    %4411 = vmatpush.bf16.msra.mxu0 %v4034
    %4412 = vmatpush.bf16.msra.mxu0 %v4030
    %4413 = vmatpush.bf16.msra.mxu0 %v4026
    %4414 = vmatpush.bf16.msra.mxu0 %v4022
    %4415 = vmatmul.bf16.gmra.mxu0 %v3429
    %v4416 = vpop.f32.mrf.mxu0
    %v4417 = vadd.f32 %v4403, %v4416
    %v4418 = vpop.f32.mrf.mxu0
    %v4419 = vadd.f32 %v4405, %v4418
    %4420 = vdwg.mxu0
    %4421 = vmatpush.bf16.msra.mxu0 %v4082
    %4422 = vmatpush.bf16.msra.mxu0 %v4078
    %4423 = vmatpush.bf16.msra.mxu0 %v4074
    %4424 = vmatpush.bf16.msra.mxu0 %v4070
    %4425 = vmatpush.bf16.msra.mxu0 %v4066
    %4426 = vmatpush.bf16.msra.mxu0 %v4062
    %4427 = vmatpush.bf16.msra.mxu0 %v4058
    %4428 = vmatpush.bf16.msra.mxu0 %v4054
    %4429 = vmatmul.bf16.gmra.mxu0 %v3430
    %v4430 = vpop.f32.mrf.mxu0
    %v4431 = vadd.f32 %v4417, %v4430
    %v4432 = vpop.f32.mrf.mxu0
    %v4433 = vadd.f32 %v4419, %v4432
    %4434 = vdwg.mxu0
    %v4435 = vmax.f32 %v4263, 0.0
    %v4436 = vmax.f32 %v4319, 0.0
    %v4437 = vmax.f32 %v4375, 0.0
    %v4438 = vmax.f32 %v4431, 0.0
    %v4439 = vmax.f32 %v4265, 0.0
    %v4440 = vmax.f32 %v4321, 0.0
    %v4441 = vmax.f32 %v4377, 0.0
    %v4442 = vmax.f32 %v4433, 0.0
    %v4443 = vpack.c.bf16 %v4439, %v4435
    %v4444 = vpack.c.bf16 %v4440, %v4436
    %v4445 = vpack.c.bf16 %v4441, %v4437
    %v4446 = vpack.c.bf16 %v4442, %v4438
    %s4447 = scalar_lea.vmem [#allocation2], 7168
    %v4448 = vld [vmem:[%s4447] sm:$0xff]
    %v4449 = vld [vmem:[%s4447 + $0x8] sm:$0xff]
    %v4450 = vld [vmem:[%s4447 + $0x10] sm:$0xff]
    %v4451 = vld [vmem:[%s4447 + $0x18] sm:$0xff]
    %v4452 = vld [vmem:[%s4447 + $0x20] sm:$0xff]
    %v4453 = vld [vmem:[%s4447 + $0x28] sm:$0xff]
    %v4454 = vld [vmem:[%s4447 + $0x30] sm:$0xff]
    %v4455 = vld [vmem:[%s4447 + $0x38] sm:$0xff]
    %v4456 = vld [vmem:[%s4447 + $0x40] sm:$0xff]
    %v4457 = vld [vmem:[%s4447 + $0x48] sm:$0xff]
    %v4458 = vld [vmem:[%s4447 + $0x50] sm:$0xff]
    %v4459 = vld [vmem:[%s4447 + $0x58] sm:$0xff]
    %v4460 = vld [vmem:[%s4447 + $0x60] sm:$0xff]
    %v4461 = vld [vmem:[%s4447 + $0x68] sm:$0xff]
    %v4462 = vld [vmem:[%s4447 + $0x70] sm:$0xff]
    %v4463 = vld [vmem:[%s4447 + $0x78] sm:$0xff]
    %v4464 = vld [vmem:[%s4447 + $0x80] sm:$0xff]
    %v4465 = vld [vmem:[%s4447 + $0x88] sm:$0xff]
    %v4466 = vld [vmem:[%s4447 + $0x90] sm:$0xff]
    %v4467 = vld [vmem:[%s4447 + $0x98] sm:$0xff]
    %v4468 = vld [vmem:[%s4447 + $0xa0] sm:$0xff]
    %v4469 = vld [vmem:[%s4447 + $0xa8] sm:$0xff]
    %v4470 = vld [vmem:[%s4447 + $0xb0] sm:$0xff]
    %v4471 = vld [vmem:[%s4447 + $0xb8] sm:$0xff]
    %v4472 = vld [vmem:[%s4447 + $0xc0] sm:$0xff]
    %v4473 = vld [vmem:[%s4447 + $0xc8] sm:$0xff]
    %v4474 = vld [vmem:[%s4447 + $0xd0] sm:$0xff]
    %v4475 = vld [vmem:[%s4447 + $0xd8] sm:$0xff]
    %v4476 = vld [vmem:[%s4447 + $0xe0] sm:$0xff]
    %v4477 = vld [vmem:[%s4447 + $0xe8] sm:$0xff]
    %v4478 = vld [vmem:[%s4447 + $0xf0] sm:$0xff]
    %v4479 = vld [vmem:[%s4447 + $0xf8] sm:$0xff]
    %v4480 = vld [vmem:[%s4447 + $0x100] sm:$0xff]
    %v4481 = vld [vmem:[%s4447 + $0x108] sm:$0xff]
    %v4482 = vld [vmem:[%s4447 + $0x110] sm:$0xff]
    %v4483 = vld [vmem:[%s4447 + $0x118] sm:$0xff]
    %v4484 = vld [vmem:[%s4447 + $0x120] sm:$0xff]
    %v4485 = vld [vmem:[%s4447 + $0x128] sm:$0xff]
    %v4486 = vld [vmem:[%s4447 + $0x130] sm:$0xff]
    %v4487 = vld [vmem:[%s4447 + $0x138] sm:$0xff]
    %v4488 = vld [vmem:[%s4447 + $0x140] sm:$0xff]
    %v4489 = vld [vmem:[%s4447 + $0x148] sm:$0xff]
    %v4490 = vld [vmem:[%s4447 + $0x150] sm:$0xff]
    %v4491 = vld [vmem:[%s4447 + $0x158] sm:$0xff]
    %v4492 = vld [vmem:[%s4447 + $0x160] sm:$0xff]
    %v4493 = vld [vmem:[%s4447 + $0x168] sm:$0xff]
    %v4494 = vld [vmem:[%s4447 + $0x170] sm:$0xff]
    %v4495 = vld [vmem:[%s4447 + $0x178] sm:$0xff]
    %v4496 = vld [vmem:[%s4447 + $0x180] sm:$0xff]
    %v4497 = vld [vmem:[%s4447 + $0x188] sm:$0xff]
    %v4498 = vld [vmem:[%s4447 + $0x190] sm:$0xff]
    %v4499 = vld [vmem:[%s4447 + $0x198] sm:$0xff]
    %v4500 = vld [vmem:[%s4447 + $0x1a0] sm:$0xff]
    %v4501 = vld [vmem:[%s4447 + $0x1a8] sm:$0xff]
    %v4502 = vld [vmem:[%s4447 + $0x1b0] sm:$0xff]
    %v4503 = vld [vmem:[%s4447 + $0x1b8] sm:$0xff]
    %v4504 = vld [vmem:[%s4447 + $0x1c0] sm:$0xff]
    %v4505 = vld [vmem:[%s4447 + $0x1c8] sm:$0xff]
    %v4506 = vld [vmem:[%s4447 + $0x1d0] sm:$0xff]
    %v4507 = vld [vmem:[%s4447 + $0x1d8] sm:$0xff]
    %v4508 = vld [vmem:[%s4447 + $0x1e0] sm:$0xff]
    %v4509 = vld [vmem:[%s4447 + $0x1e8] sm:$0xff]
    %v4510 = vld [vmem:[%s4447 + $0x1f0] sm:$0xff]
    %v4511 = vld [vmem:[%s4447 + $0x1f8] sm:$0xff]
    %v4512 = vld [vmem:[%s4447 + $0x200] sm:$0xff]
    %v4513 = vld [vmem:[%s4447 + $0x208] sm:$0xff]
    %v4514 = vld [vmem:[%s4447 + $0x210] sm:$0xff]
    %v4515 = vld [vmem:[%s4447 + $0x218] sm:$0xff]
    %v4516 = vld [vmem:[%s4447 + $0x220] sm:$0xff]
    %v4517 = vld [vmem:[%s4447 + $0x228] sm:$0xff]
    %v4518 = vld [vmem:[%s4447 + $0x230] sm:$0xff]
    %v4519 = vld [vmem:[%s4447 + $0x238] sm:$0xff]
    %v4520 = vld [vmem:[%s4447 + $0x240] sm:$0xff]
    %v4521 = vld [vmem:[%s4447 + $0x248] sm:$0xff]
    %v4522 = vld [vmem:[%s4447 + $0x250] sm:$0xff]
    %v4523 = vld [vmem:[%s4447 + $0x258] sm:$0xff]
    %v4524 = vld [vmem:[%s4447 + $0x260] sm:$0xff]
    %v4525 = vld [vmem:[%s4447 + $0x268] sm:$0xff]
    %v4526 = vld [vmem:[%s4447 + $0x270] sm:$0xff]
    %v4527 = vld [vmem:[%s4447 + $0x278] sm:$0xff]
    %v4528 = vld [vmem:[%s4447 + $0x280] sm:$0xff]
    %v4529 = vld [vmem:[%s4447 + $0x288] sm:$0xff]
    %v4530 = vld [vmem:[%s4447 + $0x290] sm:$0xff]
    %v4531 = vld [vmem:[%s4447 + $0x298] sm:$0xff]
    %v4532 = vld [vmem:[%s4447 + $0x2a0] sm:$0xff]
    %v4533 = vld [vmem:[%s4447 + $0x2a8] sm:$0xff]
    %v4534 = vld [vmem:[%s4447 + $0x2b0] sm:$0xff]
    %v4535 = vld [vmem:[%s4447 + $0x2b8] sm:$0xff]
    %v4536 = vld [vmem:[%s4447 + $0x2c0] sm:$0xff]
    %v4537 = vld [vmem:[%s4447 + $0x2c8] sm:$0xff]
    %v4538 = vld [vmem:[%s4447 + $0x2d0] sm:$0xff]
    %v4539 = vld [vmem:[%s4447 + $0x2d8] sm:$0xff]
    %v4540 = vld [vmem:[%s4447 + $0x2e0] sm:$0xff]
    %v4541 = vld [vmem:[%s4447 + $0x2e8] sm:$0xff]
    %v4542 = vld [vmem:[%s4447 + $0x2f0] sm:$0xff]
    %v4543 = vld [vmem:[%s4447 + $0x2f8] sm:$0xff]
    %v4544 = vld [vmem:[%s4447 + $0x300] sm:$0xff]
    %v4545 = vld [vmem:[%s4447 + $0x308] sm:$0xff]
    %v4546 = vld [vmem:[%s4447 + $0x310] sm:$0xff]
    %v4547 = vld [vmem:[%s4447 + $0x318] sm:$0xff]
    %v4548 = vld [vmem:[%s4447 + $0x320] sm:$0xff]
    %v4549 = vld [vmem:[%s4447 + $0x328] sm:$0xff]
    %v4550 = vld [vmem:[%s4447 + $0x330] sm:$0xff]
    %v4551 = vld [vmem:[%s4447 + $0x338] sm:$0xff]
    %v4552 = vld [vmem:[%s4447 + $0x340] sm:$0xff]
    %v4553 = vld [vmem:[%s4447 + $0x348] sm:$0xff]
    %v4554 = vld [vmem:[%s4447 + $0x350] sm:$0xff]
    %v4555 = vld [vmem:[%s4447 + $0x358] sm:$0xff]
    %v4556 = vld [vmem:[%s4447 + $0x360] sm:$0xff]
    %v4557 = vld [vmem:[%s4447 + $0x368] sm:$0xff]
    %v4558 = vld [vmem:[%s4447 + $0x370] sm:$0xff]
    %v4559 = vld [vmem:[%s4447 + $0x378] sm:$0xff]
    %v4560 = vld [vmem:[%s4447 + $0x380] sm:$0xff]
    %v4561 = vld [vmem:[%s4447 + $0x388] sm:$0xff]
    %v4562 = vld [vmem:[%s4447 + $0x390] sm:$0xff]
    %v4563 = vld [vmem:[%s4447 + $0x398] sm:$0xff]
    %v4564 = vld [vmem:[%s4447 + $0x3a0] sm:$0xff]
    %v4565 = vld [vmem:[%s4447 + $0x3a8] sm:$0xff]
    %v4566 = vld [vmem:[%s4447 + $0x3b0] sm:$0xff]
    %v4567 = vld [vmem:[%s4447 + $0x3b8] sm:$0xff]
    %v4568 = vld [vmem:[%s4447 + $0x3c0] sm:$0xff]
    %v4569 = vld [vmem:[%s4447 + $0x3c8] sm:$0xff]
    %v4570 = vld [vmem:[%s4447 + $0x3d0] sm:$0xff]
    %v4571 = vld [vmem:[%s4447 + $0x3d8] sm:$0xff]
    %v4572 = vld [vmem:[%s4447 + $0x3e0] sm:$0xff]
    %v4573 = vld [vmem:[%s4447 + $0x3e8] sm:$0xff]
    %v4574 = vld [vmem:[%s4447 + $0x3f0] sm:$0xff]
    %v4575 = vld [vmem:[%s4447 + $0x3f8] sm:$0xff]
    %s4576 = scalar_lea.vmem [#allocation4], 28
    %v4577 = vld [vmem:[%s4576] sm:$0xf]
    %v4579 = vperm.slane %v4577, 0
    %v4580 = vperm.slane %v4577, 1
    %v4581 = vperm.slane %v4577, 2
    %v4582 = vperm.slane %v4577, 3
    %v4715 = vunpack.c.l.b16 %v4448
    %v4716 = vunpack.c.h.b16 %v4448
    %v4717 = vunpack.c.l.b16 %v4449
    %v4718 = vunpack.c.h.b16 %v4449
    %v4719 = vunpack.c.l.b16 %v4450
    %v4720 = vunpack.c.h.b16 %v4450
    %v4721 = vunpack.c.l.b16 %v4451
    %v4722 = vunpack.c.h.b16 %v4451
    %v4723 = vunpack.c.l.b16 %v4452
    %v4724 = vunpack.c.h.b16 %v4452
    %v4725 = vunpack.c.l.b16 %v4453
    %v4726 = vunpack.c.h.b16 %v4453
    %v4727 = vunpack.c.l.b16 %v4454
    %v4728 = vunpack.c.h.b16 %v4454
    %v4729 = vunpack.c.l.b16 %v4455
    %v4730 = vunpack.c.h.b16 %v4455
    %v4731 = vunpack.c.l.b16 %v4456
    %v4732 = vunpack.c.h.b16 %v4456
    %v4733 = vunpack.c.l.b16 %v4457
    %v4734 = vunpack.c.h.b16 %v4457
    %v4735 = vunpack.c.l.b16 %v4458
    %v4736 = vunpack.c.h.b16 %v4458
    %v4737 = vunpack.c.l.b16 %v4459
    %v4738 = vunpack.c.h.b16 %v4459
    %v4739 = vunpack.c.l.b16 %v4460
    %v4740 = vunpack.c.h.b16 %v4460
    %v4741 = vunpack.c.l.b16 %v4461
    %v4742 = vunpack.c.h.b16 %v4461
    %v4743 = vunpack.c.l.b16 %v4462
    %v4744 = vunpack.c.h.b16 %v4462
    %v4745 = vunpack.c.l.b16 %v4463
    %v4746 = vunpack.c.h.b16 %v4463
    %v4747 = vunpack.c.l.b16 %v4464
    %v4748 = vunpack.c.h.b16 %v4464
    %v4749 = vunpack.c.l.b16 %v4465
    %v4750 = vunpack.c.h.b16 %v4465
    %v4751 = vunpack.c.l.b16 %v4466
    %v4752 = vunpack.c.h.b16 %v4466
    %v4753 = vunpack.c.l.b16 %v4467
    %v4754 = vunpack.c.h.b16 %v4467
    %v4755 = vunpack.c.l.b16 %v4468
    %v4756 = vunpack.c.h.b16 %v4468
    %v4757 = vunpack.c.l.b16 %v4469
    %v4758 = vunpack.c.h.b16 %v4469
    %v4759 = vunpack.c.l.b16 %v4470
    %v4760 = vunpack.c.h.b16 %v4470
    %v4761 = vunpack.c.l.b16 %v4471
    %v4762 = vunpack.c.h.b16 %v4471
    %v4763 = vunpack.c.l.b16 %v4472
    %v4764 = vunpack.c.h.b16 %v4472
    %v4765 = vunpack.c.l.b16 %v4473
    %v4766 = vunpack.c.h.b16 %v4473
    %v4767 = vunpack.c.l.b16 %v4474
    %v4768 = vunpack.c.h.b16 %v4474
    %v4769 = vunpack.c.l.b16 %v4475
    %v4770 = vunpack.c.h.b16 %v4475
    %v4771 = vunpack.c.l.b16 %v4476
    %v4772 = vunpack.c.h.b16 %v4476
    %v4773 = vunpack.c.l.b16 %v4477
    %v4774 = vunpack.c.h.b16 %v4477
    %v4775 = vunpack.c.l.b16 %v4478
    %v4776 = vunpack.c.h.b16 %v4478
    %v4777 = vunpack.c.l.b16 %v4479
    %v4778 = vunpack.c.h.b16 %v4479
    %v4779 = vunpack.c.l.b16 %v4480
    %v4780 = vunpack.c.h.b16 %v4480
    %v4781 = vunpack.c.l.b16 %v4481
    %v4782 = vunpack.c.h.b16 %v4481
    %v4783 = vunpack.c.l.b16 %v4482
    %v4784 = vunpack.c.h.b16 %v4482
    %v4785 = vunpack.c.l.b16 %v4483
    %v4786 = vunpack.c.h.b16 %v4483
    %v4787 = vunpack.c.l.b16 %v4484
    %v4788 = vunpack.c.h.b16 %v4484
    %v4789 = vunpack.c.l.b16 %v4485
    %v4790 = vunpack.c.h.b16 %v4485
    %v4791 = vunpack.c.l.b16 %v4486
    %v4792 = vunpack.c.h.b16 %v4486
    %v4793 = vunpack.c.l.b16 %v4487
    %v4794 = vunpack.c.h.b16 %v4487
    %v4795 = vunpack.c.l.b16 %v4488
    %v4796 = vunpack.c.h.b16 %v4488
    %v4797 = vunpack.c.l.b16 %v4489
    %v4798 = vunpack.c.h.b16 %v4489
    %v4799 = vunpack.c.l.b16 %v4490
    %v4800 = vunpack.c.h.b16 %v4490
    %v4801 = vunpack.c.l.b16 %v4491
    %v4802 = vunpack.c.h.b16 %v4491
    %v4803 = vunpack.c.l.b16 %v4492
    %v4804 = vunpack.c.h.b16 %v4492
    %v4805 = vunpack.c.l.b16 %v4493
    %v4806 = vunpack.c.h.b16 %v4493
    %v4807 = vunpack.c.l.b16 %v4494
    %v4808 = vunpack.c.h.b16 %v4494
    %v4809 = vunpack.c.l.b16 %v4495
    %v4810 = vunpack.c.h.b16 %v4495
    %v4811 = vunpack.c.l.b16 %v4496
    %v4812 = vunpack.c.h.b16 %v4496
    %v4813 = vunpack.c.l.b16 %v4497
    %v4814 = vunpack.c.h.b16 %v4497
    %v4815 = vunpack.c.l.b16 %v4498
    %v4816 = vunpack.c.h.b16 %v4498
    %v4817 = vunpack.c.l.b16 %v4499
    %v4818 = vunpack.c.h.b16 %v4499
    %v4819 = vunpack.c.l.b16 %v4500
    %v4820 = vunpack.c.h.b16 %v4500
    %v4821 = vunpack.c.l.b16 %v4501
    %v4822 = vunpack.c.h.b16 %v4501
    %v4823 = vunpack.c.l.b16 %v4502
    %v4824 = vunpack.c.h.b16 %v4502
    %v4825 = vunpack.c.l.b16 %v4503
    %v4826 = vunpack.c.h.b16 %v4503
    %v4827 = vunpack.c.l.b16 %v4504
    %v4828 = vunpack.c.h.b16 %v4504
    %v4829 = vunpack.c.l.b16 %v4505
    %v4830 = vunpack.c.h.b16 %v4505
    %v4831 = vunpack.c.l.b16 %v4506
    %v4832 = vunpack.c.h.b16 %v4506
    %v4833 = vunpack.c.l.b16 %v4507
    %v4834 = vunpack.c.h.b16 %v4507
    %v4835 = vunpack.c.l.b16 %v4508
    %v4836 = vunpack.c.h.b16 %v4508
    %v4837 = vunpack.c.l.b16 %v4509
    %v4838 = vunpack.c.h.b16 %v4509
    %v4839 = vunpack.c.l.b16 %v4510
    %v4840 = vunpack.c.h.b16 %v4510
    %v4841 = vunpack.c.l.b16 %v4511
    %v4842 = vunpack.c.h.b16 %v4511
    %v4843 = vunpack.c.l.b16 %v4512
    %v4844 = vunpack.c.h.b16 %v4512
    %v4845 = vunpack.c.l.b16 %v4513
    %v4846 = vunpack.c.h.b16 %v4513
    %v4847 = vunpack.c.l.b16 %v4514
    %v4848 = vunpack.c.h.b16 %v4514
    %v4849 = vunpack.c.l.b16 %v4515
    %v4850 = vunpack.c.h.b16 %v4515
    %v4851 = vunpack.c.l.b16 %v4516
    %v4852 = vunpack.c.h.b16 %v4516
    %v4853 = vunpack.c.l.b16 %v4517
    %v4854 = vunpack.c.h.b16 %v4517
    %v4855 = vunpack.c.l.b16 %v4518
    %v4856 = vunpack.c.h.b16 %v4518
    %v4857 = vunpack.c.l.b16 %v4519
    %v4858 = vunpack.c.h.b16 %v4519
    %v4859 = vunpack.c.l.b16 %v4520
    %v4860 = vunpack.c.h.b16 %v4520
    %v4861 = vunpack.c.l.b16 %v4521
    %v4862 = vunpack.c.h.b16 %v4521
    %v4863 = vunpack.c.l.b16 %v4522
    %v4864 = vunpack.c.h.b16 %v4522
    %v4865 = vunpack.c.l.b16 %v4523
    %v4866 = vunpack.c.h.b16 %v4523
    %v4867 = vunpack.c.l.b16 %v4524
    %v4868 = vunpack.c.h.b16 %v4524
    %v4869 = vunpack.c.l.b16 %v4525
    %v4870 = vunpack.c.h.b16 %v4525
    %v4871 = vunpack.c.l.b16 %v4526
    %v4872 = vunpack.c.h.b16 %v4526
    %v4873 = vunpack.c.l.b16 %v4527
    %v4874 = vunpack.c.h.b16 %v4527
    %v4875 = vunpack.c.l.b16 %v4528
    %v4876 = vunpack.c.h.b16 %v4528
    %v4877 = vunpack.c.l.b16 %v4529
    %v4878 = vunpack.c.h.b16 %v4529
    %v4879 = vunpack.c.l.b16 %v4530
    %v4880 = vunpack.c.h.b16 %v4530
    %v4881 = vunpack.c.l.b16 %v4531
    %v4882 = vunpack.c.h.b16 %v4531
    %v4883 = vunpack.c.l.b16 %v4532
    %v4884 = vunpack.c.h.b16 %v4532
    %v4885 = vunpack.c.l.b16 %v4533
    %v4886 = vunpack.c.h.b16 %v4533
    %v4887 = vunpack.c.l.b16 %v4534
    %v4888 = vunpack.c.h.b16 %v4534
    %v4889 = vunpack.c.l.b16 %v4535
    %v4890 = vunpack.c.h.b16 %v4535
    %v4891 = vunpack.c.l.b16 %v4536
    %v4892 = vunpack.c.h.b16 %v4536
    %v4893 = vunpack.c.l.b16 %v4537
    %v4894 = vunpack.c.h.b16 %v4537
    %v4895 = vunpack.c.l.b16 %v4538
    %v4896 = vunpack.c.h.b16 %v4538
    %v4897 = vunpack.c.l.b16 %v4539
    %v4898 = vunpack.c.h.b16 %v4539
    %v4899 = vunpack.c.l.b16 %v4540
    %v4900 = vunpack.c.h.b16 %v4540
    %v4901 = vunpack.c.l.b16 %v4541
    %v4902 = vunpack.c.h.b16 %v4541
    %v4903 = vunpack.c.l.b16 %v4542
    %v4904 = vunpack.c.h.b16 %v4542
    %v4905 = vunpack.c.l.b16 %v4543
    %v4906 = vunpack.c.h.b16 %v4543
    %v4907 = vunpack.c.l.b16 %v4544
    %v4908 = vunpack.c.h.b16 %v4544
    %v4909 = vunpack.c.l.b16 %v4545
    %v4910 = vunpack.c.h.b16 %v4545
    %v4911 = vunpack.c.l.b16 %v4546
    %v4912 = vunpack.c.h.b16 %v4546
    %v4913 = vunpack.c.l.b16 %v4547
    %v4914 = vunpack.c.h.b16 %v4547
    %v4915 = vunpack.c.l.b16 %v4548
    %v4916 = vunpack.c.h.b16 %v4548
    %v4917 = vunpack.c.l.b16 %v4549
    %v4918 = vunpack.c.h.b16 %v4549
    %v4919 = vunpack.c.l.b16 %v4550
    %v4920 = vunpack.c.h.b16 %v4550
    %v4921 = vunpack.c.l.b16 %v4551
    %v4922 = vunpack.c.h.b16 %v4551
    %v4923 = vunpack.c.l.b16 %v4552
    %v4924 = vunpack.c.h.b16 %v4552
    %v4925 = vunpack.c.l.b16 %v4553
    %v4926 = vunpack.c.h.b16 %v4553
    %v4927 = vunpack.c.l.b16 %v4554
    %v4928 = vunpack.c.h.b16 %v4554
    %v4929 = vunpack.c.l.b16 %v4555
    %v4930 = vunpack.c.h.b16 %v4555
    %v4931 = vunpack.c.l.b16 %v4556
    %v4932 = vunpack.c.h.b16 %v4556
    %v4933 = vunpack.c.l.b16 %v4557
    %v4934 = vunpack.c.h.b16 %v4557
    %v4935 = vunpack.c.l.b16 %v4558
    %v4936 = vunpack.c.h.b16 %v4558
    %v4937 = vunpack.c.l.b16 %v4559
    %v4938 = vunpack.c.h.b16 %v4559
    %v4939 = vunpack.c.l.b16 %v4560
    %v4940 = vunpack.c.h.b16 %v4560
    %v4941 = vunpack.c.l.b16 %v4561
    %v4942 = vunpack.c.h.b16 %v4561
    %v4943 = vunpack.c.l.b16 %v4562
    %v4944 = vunpack.c.h.b16 %v4562
    %v4945 = vunpack.c.l.b16 %v4563
    %v4946 = vunpack.c.h.b16 %v4563
    %v4947 = vunpack.c.l.b16 %v4564
    %v4948 = vunpack.c.h.b16 %v4564
    %v4949 = vunpack.c.l.b16 %v4565
    %v4950 = vunpack.c.h.b16 %v4565
    %v4951 = vunpack.c.l.b16 %v4566
    %v4952 = vunpack.c.h.b16 %v4566
    %v4953 = vunpack.c.l.b16 %v4567
    %v4954 = vunpack.c.h.b16 %v4567
    %v4955 = vunpack.c.l.b16 %v4568
    %v4956 = vunpack.c.h.b16 %v4568
    %v4957 = vunpack.c.l.b16 %v4569
    %v4958 = vunpack.c.h.b16 %v4569
    %v4959 = vunpack.c.l.b16 %v4570
    %v4960 = vunpack.c.h.b16 %v4570
    %v4961 = vunpack.c.l.b16 %v4571
    %v4962 = vunpack.c.h.b16 %v4571
    %v4963 = vunpack.c.l.b16 %v4572
    %v4964 = vunpack.c.h.b16 %v4572
    %v4965 = vunpack.c.l.b16 %v4573
    %v4966 = vunpack.c.h.b16 %v4573
    %v4967 = vunpack.c.l.b16 %v4574
    %v4968 = vunpack.c.h.b16 %v4574
    %v4969 = vunpack.c.l.b16 %v4575
    %v4970 = vunpack.c.h.b16 %v4575
    %v4971 = vpack.c.b16 %v4719, %v4715
    %v4972 = vpack.c.b16 %v4720, %v4716
    %v4973 = vpack.c.b16 %v4721, %v4717
    %v4974 = vpack.c.b16 %v4722, %v4718
    %v4975 = vpack.c.b16 %v4727, %v4723
    %v4976 = vpack.c.b16 %v4728, %v4724
    %v4977 = vpack.c.b16 %v4729, %v4725
    %v4978 = vpack.c.b16 %v4730, %v4726
    %v4979 = vpack.c.b16 %v4735, %v4731
    %v4980 = vpack.c.b16 %v4736, %v4732
    %v4981 = vpack.c.b16 %v4737, %v4733
    %v4982 = vpack.c.b16 %v4738, %v4734
    %v4983 = vpack.c.b16 %v4743, %v4739
    %v4984 = vpack.c.b16 %v4744, %v4740
    %v4985 = vpack.c.b16 %v4745, %v4741
    %v4986 = vpack.c.b16 %v4746, %v4742
    %v4987 = vpack.c.b16 %v4751, %v4747
    %v4988 = vpack.c.b16 %v4752, %v4748
    %v4989 = vpack.c.b16 %v4753, %v4749
    %v4990 = vpack.c.b16 %v4754, %v4750
    %v4991 = vpack.c.b16 %v4759, %v4755
    %v4992 = vpack.c.b16 %v4760, %v4756
    %v4993 = vpack.c.b16 %v4761, %v4757
    %v4994 = vpack.c.b16 %v4762, %v4758
    %v4995 = vpack.c.b16 %v4767, %v4763
    %v4996 = vpack.c.b16 %v4768, %v4764
    %v4997 = vpack.c.b16 %v4769, %v4765
    %v4998 = vpack.c.b16 %v4770, %v4766
    %v4999 = vpack.c.b16 %v4775, %v4771
    %v5000 = vpack.c.b16 %v4776, %v4772
    %v5001 = vpack.c.b16 %v4777, %v4773
    %v5002 = vpack.c.b16 %v4778, %v4774
    %v5003 = vpack.c.b16 %v4783, %v4779
    %v5004 = vpack.c.b16 %v4784, %v4780
    %v5005 = vpack.c.b16 %v4785, %v4781
    %v5006 = vpack.c.b16 %v4786, %v4782
    %v5007 = vpack.c.b16 %v4791, %v4787
    %v5008 = vpack.c.b16 %v4792, %v4788
    %v5009 = vpack.c.b16 %v4793, %v4789
    %v5010 = vpack.c.b16 %v4794, %v4790
    %v5011 = vpack.c.b16 %v4799, %v4795
    %v5012 = vpack.c.b16 %v4800, %v4796
    %v5013 = vpack.c.b16 %v4801, %v4797
    %v5014 = vpack.c.b16 %v4802, %v4798
    %v5015 = vpack.c.b16 %v4807, %v4803
    %v5016 = vpack.c.b16 %v4808, %v4804
    %v5017 = vpack.c.b16 %v4809, %v4805
    %v5018 = vpack.c.b16 %v4810, %v4806
    %v5019 = vpack.c.b16 %v4815, %v4811
    %v5020 = vpack.c.b16 %v4816, %v4812
    %v5021 = vpack.c.b16 %v4817, %v4813
    %v5022 = vpack.c.b16 %v4818, %v4814
    %v5023 = vpack.c.b16 %v4823, %v4819
    %v5024 = vpack.c.b16 %v4824, %v4820
    %v5025 = vpack.c.b16 %v4825, %v4821
    %v5026 = vpack.c.b16 %v4826, %v4822
    %v5027 = vpack.c.b16 %v4831, %v4827
    %v5028 = vpack.c.b16 %v4832, %v4828
    %v5029 = vpack.c.b16 %v4833, %v4829
    %v5030 = vpack.c.b16 %v4834, %v4830
    %v5031 = vpack.c.b16 %v4839, %v4835
    %v5032 = vpack.c.b16 %v4840, %v4836
    %v5033 = vpack.c.b16 %v4841, %v4837
    %v5034 = vpack.c.b16 %v4842, %v4838
    %v5035 = vpack.c.b16 %v4847, %v4843
    %v5036 = vpack.c.b16 %v4848, %v4844
    %v5037 = vpack.c.b16 %v4849, %v4845
    %v5038 = vpack.c.b16 %v4850, %v4846
    %v5039 = vpack.c.b16 %v4855, %v4851
    %v5040 = vpack.c.b16 %v4856, %v4852
    %v5041 = vpack.c.b16 %v4857, %v4853
    %v5042 = vpack.c.b16 %v4858, %v4854
    %v5043 = vpack.c.b16 %v4863, %v4859
    %v5044 = vpack.c.b16 %v4864, %v4860
    %v5045 = vpack.c.b16 %v4865, %v4861
    %v5046 = vpack.c.b16 %v4866, %v4862
    %v5047 = vpack.c.b16 %v4871, %v4867
    %v5048 = vpack.c.b16 %v4872, %v4868
    %v5049 = vpack.c.b16 %v4873, %v4869
    %v5050 = vpack.c.b16 %v4874, %v4870
    %v5051 = vpack.c.b16 %v4879, %v4875
    %v5052 = vpack.c.b16 %v4880, %v4876
    %v5053 = vpack.c.b16 %v4881, %v4877
    %v5054 = vpack.c.b16 %v4882, %v4878
    %v5055 = vpack.c.b16 %v4887, %v4883
    %v5056 = vpack.c.b16 %v4888, %v4884
    %v5057 = vpack.c.b16 %v4889, %v4885
    %v5058 = vpack.c.b16 %v4890, %v4886
    %v5059 = vpack.c.b16 %v4895, %v4891
    %v5060 = vpack.c.b16 %v4896, %v4892
    %v5061 = vpack.c.b16 %v4897, %v4893
    %v5062 = vpack.c.b16 %v4898, %v4894
    %v5063 = vpack.c.b16 %v4903, %v4899
    %v5064 = vpack.c.b16 %v4904, %v4900
    %v5065 = vpack.c.b16 %v4905, %v4901
    %v5066 = vpack.c.b16 %v4906, %v4902
    %v5067 = vpack.c.b16 %v4911, %v4907
    %v5068 = vpack.c.b16 %v4912, %v4908
    %v5069 = vpack.c.b16 %v4913, %v4909
    %v5070 = vpack.c.b16 %v4914, %v4910
    %v5071 = vpack.c.b16 %v4919, %v4915
    %v5072 = vpack.c.b16 %v4920, %v4916
    %v5073 = vpack.c.b16 %v4921, %v4917
    %v5074 = vpack.c.b16 %v4922, %v4918
    %v5075 = vpack.c.b16 %v4927, %v4923
    %v5076 = vpack.c.b16 %v4928, %v4924
    %v5077 = vpack.c.b16 %v4929, %v4925
    %v5078 = vpack.c.b16 %v4930, %v4926
    %v5079 = vpack.c.b16 %v4935, %v4931
    %v5080 = vpack.c.b16 %v4936, %v4932
    %v5081 = vpack.c.b16 %v4937, %v4933
    %v5082 = vpack.c.b16 %v4938, %v4934
    %v5083 = vpack.c.b16 %v4943, %v4939
    %v5084 = vpack.c.b16 %v4944, %v4940
    %v5085 = vpack.c.b16 %v4945, %v4941
    %v5086 = vpack.c.b16 %v4946, %v4942
    %v5087 = vpack.c.b16 %v4951, %v4947
    %v5088 = vpack.c.b16 %v4952, %v4948
    %v5089 = vpack.c.b16 %v4953, %v4949
    %v5090 = vpack.c.b16 %v4954, %v4950
    %v5091 = vpack.c.b16 %v4959, %v4955
    %v5092 = vpack.c.b16 %v4960, %v4956
    %v5093 = vpack.c.b16 %v4961, %v4957
    %v5094 = vpack.c.b16 %v4962, %v4958
    %v5095 = vpack.c.b16 %v4967, %v4963
    %v5096 = vpack.c.b16 %v4968, %v4964
    %v5097 = vpack.c.b16 %v4969, %v4965
    %v5098 = vpack.c.b16 %v4970, %v4966
    %5227 = vmatpush.bf16.msra.mxu0 %v4999
    %5228 = vmatpush.bf16.msra.mxu0 %v4995
    %5229 = vmatpush.bf16.msra.mxu0 %v4991
    %5230 = vmatpush.bf16.msra.mxu0 %v4987
    %5231 = vmatpush.bf16.msra.mxu0 %v4983
    %5232 = vmatpush.bf16.msra.mxu0 %v4979
    %5233 = vmatpush.bf16.msra.mxu0 %v4975
    %5234 = vmatpush.bf16.msra.mxu0 %v4971
    %5235 = vmatmul.bf16.gmra.mxu0 %v4443
    %v5236 = vpop.f32.mrf.mxu0
    %v5237 = vadd.f32 %v4579, %v5236
    %v5238 = vpop.f32.mrf.mxu0
    %v5239 = vadd.f32 %v4579, %v5238
    %5240 = vdwg.mxu0
    %5241 = vmatpush.bf16.msra.mxu0 %v5031
    %5242 = vmatpush.bf16.msra.mxu0 %v5027
    %5243 = vmatpush.bf16.msra.mxu0 %v5023
    %5244 = vmatpush.bf16.msra.mxu0 %v5019
    %5245 = vmatpush.bf16.msra.mxu0 %v5015
    %5246 = vmatpush.bf16.msra.mxu0 %v5011
    %5247 = vmatpush.bf16.msra.mxu0 %v5007
    %5248 = vmatpush.bf16.msra.mxu0 %v5003
    %5249 = vmatmul.bf16.gmra.mxu0 %v4444
    %v5250 = vpop.f32.mrf.mxu0
    %v5251 = vadd.f32 %v5237, %v5250
    %v5252 = vpop.f32.mrf.mxu0
    %v5253 = vadd.f32 %v5239, %v5252
    %5254 = vdwg.mxu0
    %5255 = vmatpush.bf16.msra.mxu0 %v5063
    %5256 = vmatpush.bf16.msra.mxu0 %v5059
    %5257 = vmatpush.bf16.msra.mxu0 %v5055
    %5258 = vmatpush.bf16.msra.mxu0 %v5051
    %5259 = vmatpush.bf16.msra.mxu0 %v5047
    %5260 = vmatpush.bf16.msra.mxu0 %v5043
    %5261 = vmatpush.bf16.msra.mxu0 %v5039
    %5262 = vmatpush.bf16.msra.mxu0 %v5035
    %5263 = vmatmul.bf16.gmra.mxu0 %v4445
    %v5264 = vpop.f32.mrf.mxu0
    %v5265 = vadd.f32 %v5251, %v5264
    %v5266 = vpop.f32.mrf.mxu0
    %v5267 = vadd.f32 %v5253, %v5266
    %5268 = vdwg.mxu0
    %5269 = vmatpush.bf16.msra.mxu0 %v5095
    %5270 = vmatpush.bf16.msra.mxu0 %v5091
    %5271 = vmatpush.bf16.msra.mxu0 %v5087
    %5272 = vmatpush.bf16.msra.mxu0 %v5083
    %5273 = vmatpush.bf16.msra.mxu0 %v5079
    %5274 = vmatpush.bf16.msra.mxu0 %v5075
    %5275 = vmatpush.bf16.msra.mxu0 %v5071
    %5276 = vmatpush.bf16.msra.mxu0 %v5067
    %5277 = vmatmul.bf16.gmra.mxu0 %v4446
    %v5278 = vpop.f32.mrf.mxu0
    %v5279 = vadd.f32 %v5265, %v5278
    %v5280 = vpop.f32.mrf.mxu0
    %v5281 = vadd.f32 %v5267, %v5280
    %5282 = vdwg.mxu0
    %5283 = vmatpush.bf16.msra.mxu0 %v5000
    %5284 = vmatpush.bf16.msra.mxu0 %v4996
    %5285 = vmatpush.bf16.msra.mxu0 %v4992
    %5286 = vmatpush.bf16.msra.mxu0 %v4988
    %5287 = vmatpush.bf16.msra.mxu0 %v4984
    %5288 = vmatpush.bf16.msra.mxu0 %v4980
    %5289 = vmatpush.bf16.msra.mxu0 %v4976
    %5290 = vmatpush.bf16.msra.mxu0 %v4972
    %5291 = vmatmul.bf16.gmra.mxu0 %v4443
    %v5292 = vpop.f32.mrf.mxu0
    %v5293 = vadd.f32 %v4580, %v5292
    %v5294 = vpop.f32.mrf.mxu0
    %v5295 = vadd.f32 %v4580, %v5294
    %5296 = vdwg.mxu0
    %5297 = vmatpush.bf16.msra.mxu0 %v5032
    %5298 = vmatpush.bf16.msra.mxu0 %v5028
    %5299 = vmatpush.bf16.msra.mxu0 %v5024
    %5300 = vmatpush.bf16.msra.mxu0 %v5020
    %5301 = vmatpush.bf16.msra.mxu0 %v5016
    %5302 = vmatpush.bf16.msra.mxu0 %v5012
    %5303 = vmatpush.bf16.msra.mxu0 %v5008
    %5304 = vmatpush.bf16.msra.mxu0 %v5004
    %5305 = vmatmul.bf16.gmra.mxu0 %v4444
    %v5306 = vpop.f32.mrf.mxu0
    %v5307 = vadd.f32 %v5293, %v5306
    %v5308 = vpop.f32.mrf.mxu0
    %v5309 = vadd.f32 %v5295, %v5308
    %5310 = vdwg.mxu0
    %5311 = vmatpush.bf16.msra.mxu0 %v5064
    %5312 = vmatpush.bf16.msra.mxu0 %v5060
    %5313 = vmatpush.bf16.msra.mxu0 %v5056
    %5314 = vmatpush.bf16.msra.mxu0 %v5052
    %5315 = vmatpush.bf16.msra.mxu0 %v5048
    %5316 = vmatpush.bf16.msra.mxu0 %v5044
    %5317 = vmatpush.bf16.msra.mxu0 %v5040
    %5318 = vmatpush.bf16.msra.mxu0 %v5036
    %5319 = vmatmul.bf16.gmra.mxu0 %v4445
    %v5320 = vpop.f32.mrf.mxu0
    %v5321 = vadd.f32 %v5307, %v5320
    %v5322 = vpop.f32.mrf.mxu0
    %v5323 = vadd.f32 %v5309, %v5322
    %5324 = vdwg.mxu0
    %5325 = vmatpush.bf16.msra.mxu0 %v5096
    %5326 = vmatpush.bf16.msra.mxu0 %v5092
    %5327 = vmatpush.bf16.msra.mxu0 %v5088
    %5328 = vmatpush.bf16.msra.mxu0 %v5084
    %5329 = vmatpush.bf16.msra.mxu0 %v5080
    %5330 = vmatpush.bf16.msra.mxu0 %v5076
    %5331 = vmatpush.bf16.msra.mxu0 %v5072
    %5332 = vmatpush.bf16.msra.mxu0 %v5068
    %5333 = vmatmul.bf16.gmra.mxu0 %v4446
    %v5334 = vpop.f32.mrf.mxu0
    %v5335 = vadd.f32 %v5321, %v5334
    %v5336 = vpop.f32.mrf.mxu0
    %v5337 = vadd.f32 %v5323, %v5336
    %5338 = vdwg.mxu0
    %5339 = vmatpush.bf16.msra.mxu0 %v5001
    %5340 = vmatpush.bf16.msra.mxu0 %v4997
    %5341 = vmatpush.bf16.msra.mxu0 %v4993
    %5342 = vmatpush.bf16.msra.mxu0 %v4989
    %5343 = vmatpush.bf16.msra.mxu0 %v4985
    %5344 = vmatpush.bf16.msra.mxu0 %v4981
    %5345 = vmatpush.bf16.msra.mxu0 %v4977
    %5346 = vmatpush.bf16.msra.mxu0 %v4973
    %5347 = vmatmul.bf16.gmra.mxu0 %v4443
    %v5348 = vpop.f32.mrf.mxu0
    %v5349 = vadd.f32 %v4581, %v5348
    %v5350 = vpop.f32.mrf.mxu0
    %v5351 = vadd.f32 %v4581, %v5350
    %5352 = vdwg.mxu0
    %5353 = vmatpush.bf16.msra.mxu0 %v5033
    %5354 = vmatpush.bf16.msra.mxu0 %v5029
    %5355 = vmatpush.bf16.msra.mxu0 %v5025
    %5356 = vmatpush.bf16.msra.mxu0 %v5021
    %5357 = vmatpush.bf16.msra.mxu0 %v5017
    %5358 = vmatpush.bf16.msra.mxu0 %v5013
    %5359 = vmatpush.bf16.msra.mxu0 %v5009
    %5360 = vmatpush.bf16.msra.mxu0 %v5005
    %5361 = vmatmul.bf16.gmra.mxu0 %v4444
    %v5362 = vpop.f32.mrf.mxu0
    %v5363 = vadd.f32 %v5349, %v5362
    %v5364 = vpop.f32.mrf.mxu0
    %v5365 = vadd.f32 %v5351, %v5364
    %5366 = vdwg.mxu0
    %5367 = vmatpush.bf16.msra.mxu0 %v5065
    %5368 = vmatpush.bf16.msra.mxu0 %v5061
    %5369 = vmatpush.bf16.msra.mxu0 %v5057
    %5370 = vmatpush.bf16.msra.mxu0 %v5053
    %5371 = vmatpush.bf16.msra.mxu0 %v5049
    %5372 = vmatpush.bf16.msra.mxu0 %v5045
    %5373 = vmatpush.bf16.msra.mxu0 %v5041
    %5374 = vmatpush.bf16.msra.mxu0 %v5037
    %5375 = vmatmul.bf16.gmra.mxu0 %v4445
    %v5376 = vpop.f32.mrf.mxu0
    %v5377 = vadd.f32 %v5363, %v5376
    %v5378 = vpop.f32.mrf.mxu0
    %v5379 = vadd.f32 %v5365, %v5378
    %5380 = vdwg.mxu0
    %5381 = vmatpush.bf16.msra.mxu0 %v5097
    %5382 = vmatpush.bf16.msra.mxu0 %v5093
    %5383 = vmatpush.bf16.msra.mxu0 %v5089
    %5384 = vmatpush.bf16.msra.mxu0 %v5085
    %5385 = vmatpush.bf16.msra.mxu0 %v5081
    %5386 = vmatpush.bf16.msra.mxu0 %v5077
    %5387 = vmatpush.bf16.msra.mxu0 %v5073
    %5388 = vmatpush.bf16.msra.mxu0 %v5069
    %5389 = vmatmul.bf16.gmra.mxu0 %v4446
    %v5390 = vpop.f32.mrf.mxu0
    %v5391 = vadd.f32 %v5377, %v5390
    %v5392 = vpop.f32.mrf.mxu0
    %v5393 = vadd.f32 %v5379, %v5392
    %5394 = vdwg.mxu0
    %5395 = vmatpush.bf16.msra.mxu0 %v5002
    %5396 = vmatpush.bf16.msra.mxu0 %v4998
    %5397 = vmatpush.bf16.msra.mxu0 %v4994
    %5398 = vmatpush.bf16.msra.mxu0 %v4990
    %5399 = vmatpush.bf16.msra.mxu0 %v4986
    %5400 = vmatpush.bf16.msra.mxu0 %v4982
    %5401 = vmatpush.bf16.msra.mxu0 %v4978
    %5402 = vmatpush.bf16.msra.mxu0 %v4974
    %5403 = vmatmul.bf16.gmra.mxu0 %v4443
    %v5404 = vpop.f32.mrf.mxu0
    %v5405 = vadd.f32 %v4582, %v5404
    %v5406 = vpop.f32.mrf.mxu0
    %v5407 = vadd.f32 %v4582, %v5406
    %5408 = vdwg.mxu0
    %5409 = vmatpush.bf16.msra.mxu0 %v5034
    %5410 = vmatpush.bf16.msra.mxu0 %v5030
    %5411 = vmatpush.bf16.msra.mxu0 %v5026
    %5412 = vmatpush.bf16.msra.mxu0 %v5022
    %5413 = vmatpush.bf16.msra.mxu0 %v5018
    %5414 = vmatpush.bf16.msra.mxu0 %v5014
    %5415 = vmatpush.bf16.msra.mxu0 %v5010
    %5416 = vmatpush.bf16.msra.mxu0 %v5006
    %5417 = vmatmul.bf16.gmra.mxu0 %v4444
    %v5418 = vpop.f32.mrf.mxu0
    %v5419 = vadd.f32 %v5405, %v5418
    %v5420 = vpop.f32.mrf.mxu0
    %v5421 = vadd.f32 %v5407, %v5420
    %5422 = vdwg.mxu0
    %5423 = vmatpush.bf16.msra.mxu0 %v5066
    %5424 = vmatpush.bf16.msra.mxu0 %v5062
    %5425 = vmatpush.bf16.msra.mxu0 %v5058
    %5426 = vmatpush.bf16.msra.mxu0 %v5054
    %5427 = vmatpush.bf16.msra.mxu0 %v5050
    %5428 = vmatpush.bf16.msra.mxu0 %v5046
    %5429 = vmatpush.bf16.msra.mxu0 %v5042
    %5430 = vmatpush.bf16.msra.mxu0 %v5038
    %5431 = vmatmul.bf16.gmra.mxu0 %v4445
    %v5432 = vpop.f32.mrf.mxu0
    %v5433 = vadd.f32 %v5419, %v5432
    %v5434 = vpop.f32.mrf.mxu0
    %v5435 = vadd.f32 %v5421, %v5434
    %5436 = vdwg.mxu0
    %5437 = vmatpush.bf16.msra.mxu0 %v5098
    %5438 = vmatpush.bf16.msra.mxu0 %v5094
    %5439 = vmatpush.bf16.msra.mxu0 %v5090
    %5440 = vmatpush.bf16.msra.mxu0 %v5086
    %5441 = vmatpush.bf16.msra.mxu0 %v5082
    %5442 = vmatpush.bf16.msra.mxu0 %v5078
    %5443 = vmatpush.bf16.msra.mxu0 %v5074
    %5444 = vmatpush.bf16.msra.mxu0 %v5070
    %5445 = vmatmul.bf16.gmra.mxu0 %v4446
    %v5446 = vpop.f32.mrf.mxu0
    %v5447 = vadd.f32 %v5433, %v5446
    %v5448 = vpop.f32.mrf.mxu0
    %v5449 = vadd.f32 %v5435, %v5448
    %5450 = vdwg.mxu0
    %5451 = vst [vmem:[%s3] sm:$0xff] %v5279
    %5452 = vst [vmem:[%s3 + $0x8] sm:$0xff] %v5335
    %5453 = vst [vmem:[%s3 + $0x10] sm:$0xff] %v5391
    %5454 = vst [vmem:[%s3 + $0x18] sm:$0xff] %v5447
    %5455 = vst [vmem:[%s3 + $0x20] sm:$0xff] %v5281
    %5456 = vst [vmem:[%s3 + $0x28] sm:$0xff] %v5337
    %5457 = vst [vmem:[%s3 + $0x30] sm:$0xff] %v5393
    %5458 = vst [vmem:[%s3 + $0x38] sm:$0xff] %v5449
    // Predicated region
    $region22: #{autoencoder_forward.1} parent=1 // pred_check
      _
    $region23: #{autoencoder_forward.1} parent=1 // pred_check_branch
      %5460 = sbr.rel (0) target = $region25
    $region24: #{autoencoder_forward.1} parent=1 // pred_region
      _
    $region25: #{autoencoder_forward.1} parent=1 // pred_fallthru
      _
    // Predicated region
    $region26: #{autoencoder_forward.1} parent=1 // pred_check
      _
    $region27: #{autoencoder_forward.1} parent=1 // pred_check_branch
      %5462 = sbr.rel (0) target = $region29
    $region28: #{autoencoder_forward.1} parent=1 // pred_region
      _
    $region29: #{autoencoder_forward.1} parent=1 // pred_fallthru
      _
    %5463 = vsyncpa [#allocation3], 1
    %5464 = vsyncpa [#allocation5], 1

</llo_original>
